<compile_context>
chip_gen: v5e
topology: v5e:2x2
jax: 0.10.0
libtpu: 0.0.40
codegen_flags: <defaults>
</compile_context>

<pallas_src>
import functools

import jax
import jax.numpy as jnp
from jax import lax
from jax.experimental import pallas as pl
from jax.experimental.pallas import tpu as pltpu

EPS = 1e-5


# ----------------------------------------------------------------------------
# Fused kernel: conv1 -> BN1 -> ReLU -> maxpool2x2 -> conv2 -> BN2 -> ReLU
# ----------------------------------------------------------------------------
def _sa_branch_kernel(cols1_ref, w1_ref, b1_ref, g1_ref, be1_ref,
                      w2_ref, b2_ref, g2_ref, be2_ref,
                      out_ref,
                      poolp_ref,
                      *, N, H, W, C):
    # cols1_ref : (N*H*W, 9)          conv1 im2col of the (padded) input, col k = dy*3+dx
    # w1_ref    : (9, C)              conv1 weights, tap-major
    # b1/g1/be1 : (1, C)              conv1 bias, BN1 gamma/beta
    # w2_ref    : (9, C, C)           conv2 weights, [tap, cin, cout]
    # b2/g2/be2 : (1, C)              conv2 bias, BN2 gamma/beta
    # out_ref   : (C, N*H2*W2)        final activations, lane-dense (last dim = 128 here)
    # poolp_ref : (N, H2+2, W2+2, C)  VMEM scratch: zero-padded pooled activations
    H2, W2 = H // 2, W // 2
    NP = N * H2 * W2

    # ---- conv1: one canonical MXU matmul, K = 9 ----
    raw1 = jnp.dot(cols1_ref[...], w1_ref[...],
                   preferred_element_type=jnp.float32) + b1_ref[...]      # (N*H*W, C)

    # ---- BN1 (training-mode batch stats, two-pass variance) + ReLU ----
    mean1 = jnp.mean(raw1, axis=0, keepdims=True)                         # (1, C)
    d1 = raw1 - mean1
    var1 = jnp.mean(d1 * d1, axis=0, keepdims=True)                       # biased var
    scale1 = g1_ref[...] * lax.rsqrt(var1 + EPS)
    y1 = jnp.maximum(d1 * scale1 + be1_ref[...], 0.0)                     # (N*H*W, C)

    # ---- MaxPool 2x2 stride 2 (C stays on the lane axis throughout) ----
    t = jnp.max(y1.reshape(N * H, W2, 2, C), axis=2)                      # pool along W
    pooled = jnp.max(t.reshape(N, H2, 2, W2, C), axis=2)                  # (N, H2, W2, C)

    # ---- padded pooled buffer for conv2 "same" padding ----
    # Zero only the 1-element halo (no full-buffer zeros_like), then one interior store.
    zrow = jnp.zeros((N, 1, W2 + 2, C), jnp.float32)
    zcol = jnp.zeros((N, H2, 1, C), jnp.float32)
    poolp_ref[:, 0:1, :, :] = zrow                                        # top halo
    poolp_ref[:, H2 + 1:H2 + 2, :, :] = zrow                              # bottom halo
    poolp_ref[:, 1:H2 + 1, 0:1, :] = zcol                                 # left halo
    poolp_ref[:, 1:H2 + 1, W2 + 1:W2 + 2, :] = zcol                       # right halo
    poolp_ref[:, 1:H2 + 1, 1:W2 + 1, :] = pooled                          # interior

    # ---- conv2: 9 accumulated canonical (M,K)x(K,N) matmuls, K = C, no patch scratch ----
    acc = jnp.zeros((NP, C), jnp.float32)
    for k in range(9):                                                    # unrolled taps
        dy, dx = divmod(k, 3)
        tap = poolp_ref[:, dy:dy + H2, dx:dx + W2, :].reshape(NP, C)      # (NP, C)
        acc = acc + jnp.dot(tap, w2_ref[k],
                            preferred_element_type=jnp.float32)           # (NP, C)
    raw2 = acc + b2_ref[...]                                              # (NP, C)

    # ---- BN2 (training-mode batch stats, two-pass variance) + ReLU, (NP, C) layout ----
    mean2 = jnp.mean(raw2, axis=0, keepdims=True)                         # (1, C)
    d2 = raw2 - mean2
    var2 = jnp.mean(d2 * d2, axis=0, keepdims=True)
    scale2 = g2_ref[...] * lax.rsqrt(var2 + EPS)
    y2 = jnp.maximum(d2 * scale2 + be2_ref[...], 0.0)                     # (NP, C)

    # ---- single small transpose of the (NP, C) activation -> lane-dense (C, NP) store ----
    out_ref[...] = y2.T


# ----------------------------------------------------------------------------
# Wrapper: NCHW <-> kernel layouts, weight repacking, one pallas_call.
# ----------------------------------------------------------------------------
@jax.jit
def sa_branch_forward(x_nchw, params):
    w1, b1, g1, be1, w2, b2, g2, be2 = params
    N, Cin, H, W = x_nchw.shape
    assert Cin == 1, "SaBranch conv1 expects a single input channel"
    assert H % 2 == 0 and W % 2 == 0, "2x2 maxpool requires even spatial dims"
    C = w1.shape[0]                                   # 30
    H2, W2 = H // 2, W // 2
    NP = N * H2 * W2

    x = x_nchw[:, 0].astype(jnp.float32)              # (N, H, W)
    xp = jnp.pad(x, ((0, 0), (1, 1), (1, 1)))         # (N, H+2, W+2)
    # conv1 im2col (layout plumbing): (N*H*W, 9), column k = dy*3 + dx
    cols1 = jnp.stack([xp[:, dy:dy + H, dx:dx + W]
                       for dy in range(3) for dx in range(3)],
                      axis=-1).reshape(N * H * W, 9).astype(jnp.float32)

    # conv1 weights (C,1,3,3) -> (9, C), row k = dy*3 + dx
    w1_mat = jnp.transpose(w1[:, 0], (1, 2, 0)).reshape(9, C).astype(jnp.float32)
    # conv2 weights (Cout,Cin,3,3) -> (9, Cin, Cout): w2_taps[k, cin, cout] = w2[cout,cin,dy,dx]
    w2_taps = jnp.transpose(w2, (2, 3, 1, 0)).reshape(9, C, C).astype(jnp.float32)

    flops = 2 * N * H * W * 9 * C + 2 * NP * 9 * C * C
    bytes_accessed = 4 * (cols1.size + w1_mat.size + w2_taps.size + 6 * C + C * NP)

    out_t = pl.pallas_call(
        functools.partial(_sa_branch_kernel, N=N, H=H, W=W, C=C),
        out_shape=jax.ShapeDtypeStruct((C, NP), jnp.float32),
        in_specs=[pl.BlockSpec(memory_space=pltpu.MemorySpace.VMEM)] * 9,
        out_specs=pl.BlockSpec(memory_space=pltpu.MemorySpace.VMEM),
        scratch_shapes=[
            pltpu.VMEM((N, H2 + 2, W2 + 2, C), jnp.float32),   # padded pooled acts
        ],
        cost_estimate=pl.CostEstimate(flops=flops, transcendentals=2 * C,
                                      bytes_accessed=bytes_accessed),
    )(cols1, w1_mat,
      b1.reshape(1, C).astype(jnp.float32),
      g1.reshape(1, C).astype(jnp.float32),
      be1.reshape(1, C).astype(jnp.float32),
      w2_taps,
      b2.reshape(1, C).astype(jnp.float32),
      g2.reshape(1, C).astype(jnp.float32),
      be2.reshape(1, C).astype(jnp.float32))

    # (C, N*H2*W2) -> (N, C, H2, W2)
    return out_t.reshape(C, N, H2, W2).transpose(1, 0, 2, 3)


# ----------------------------------------------------------------------------
# Pure-JAX reference (PyTorch training-mode BN semantics) for verification.
# ----------------------------------------------------------------------------
def ref_forward(x, params):
    w1, b1, g1, be1, w2, b2, g2, be2 = params

    def conv_bn_relu(x, w, b, g, be):
        y = lax.conv_general_dilated(
            x, w, window_strides=(1, 1), padding=((1, 1), (1, 1)),
            dimension_numbers=("NCHW", "OIHW", "NCHW"))
        y = y + b[None, :, None, None]
        mean = y.mean(axis=(0, 2, 3))
        var = y.var(axis=(0, 2, 3))
        y = (y - mean[None, :, None, None]) * lax.rsqrt(var + EPS)[None, :, None, None]
        y = y * g[None, :, None, None] + be[None, :, None, None]
        return jnp.maximum(y, 0.0)

    y = conv_bn_relu(x, w1, b1, g1, be1)
    y = lax.reduce_window(y, -jnp.inf, lax.max, (1, 1, 2, 2), (1, 1, 2, 2), "VALID")
    return conv_bn_relu(y, w2, b2, g2, be2)


if __name__ == "__main__":
    key = jax.random.PRNGKey(0)
    ks = jax.random.split(key, 9)

    # Deterministic synthetic parameters (shapes from SaBranch.__init__).
    w1 = 0.3 * jax.random.normal(ks[0], (30, 1, 3, 3), jnp.float32)
    b1 = 0.1 * jax.random.normal(ks[1], (30,), jnp.float32)
    g1 = 1.0 + 0.1 * jax.random.normal(ks[2], (30,), jnp.float32)
    be1 = 0.1 * jax.random.normal(ks[3], (30,), jnp.float32)
    w2 = 0.1 * jax.random.normal(ks[4], (30, 30, 3, 3), jnp.float32)
    b2 = 0.1 * jax.random.normal(ks[5], (30,), jnp.float32)
    g2 = 1.0 + 0.1 * jax.random.normal(ks[6], (30,), jnp.float32)
    be2 = 0.1 * jax.random.normal(ks[7], (30,), jnp.float32)
    params = (w1, b1, g1, be1, w2, b2, g2, be2)

    # Input: NCHW with a single channel (conv1 expects 1 input channel).
    x = jax.random.normal(ks[8], (2, 1, 16, 16), jnp.float32)

    out = jax.block_until_ready(sa_branch_forward(x, params))
    assert out.shape == (2, 30, 8, 8), out.shape

    ref = jax.block_until_ready(ref_forward(x, params))
    err = float(jnp.max(jnp.abs(out - ref)))
    assert jnp.allclose(out, ref, atol=1e-3, rtol=1e-3), err

    print("KERNEL_OK")
</pallas_src>

<mosaic_0001>
module attributes {stable_mosaic.version = 11 : i64} {
  func.func @_sa_branch_kernel(%arg0: memref<512x9xf32, #tpu.memory_space<vmem>>, %arg1: memref<9x30xf32, #tpu.memory_space<vmem>>, %arg2: memref<1x30xf32, #tpu.memory_space<vmem>>, %arg3: memref<1x30xf32, #tpu.memory_space<vmem>>, %arg4: memref<1x30xf32, #tpu.memory_space<vmem>>, %arg5: memref<9x30x30xf32, #tpu.memory_space<vmem>>, %arg6: memref<1x30xf32, #tpu.memory_space<vmem>>, %arg7: memref<1x30xf32, #tpu.memory_space<vmem>>, %arg8: memref<1x30xf32, #tpu.memory_space<vmem>>, %arg9: memref<30x128xf32, #tpu.memory_space<vmem>>, %arg10: memref<2x10x10x30xf32, #tpu.memory_space<vmem>>) attributes {dimension_semantics = [], scalar_prefetch = 0 : i64, scratch_operands = 1 : i64, tpu.core_type = #tpu.core_type<tc>} {
    %c0 = arith.constant 0 : index
    %c0_0 = arith.constant 0 : index
    %0 = vector.load %arg0[%c0, %c0_0] : memref<512x9xf32, #tpu.memory_space<vmem>>, vector<512x9xf32>
    %c0_1 = arith.constant 0 : index
    %c0_2 = arith.constant 0 : index
    %1 = vector.load %arg1[%c0_1, %c0_2] : memref<9x30xf32, #tpu.memory_space<vmem>>, vector<9x30xf32>
    %cst = arith.constant dense<0.000000e+00> : vector<512x30xf32>
    %2 = tpu.matmul %0, %1, %cst {dimension_numbers = #tpu.dot_dimension_numbers<[1], [0], [0], [1], [0, 0, 1, 1], [], []>} : vector<512x9xf32>, vector<9x30xf32>, vector<512x30xf32> -> vector<512x30xf32>
    %c0_3 = arith.constant 0 : index
    %c0_4 = arith.constant 0 : index
    %3 = vector.load %arg2[%c0_3, %c0_4] : memref<1x30xf32, #tpu.memory_space<vmem>>, vector<1x30xf32>
    %4 = vector.broadcast %3 : vector<1x30xf32> to vector<512x30xf32>
    %5 = arith.addf %2, %4 : vector<512x30xf32>
    %cst_5 = arith.constant dense<0.000000e+00> : vector<30xf32>
    %6 = vector.multi_reduction <add>, %5, %cst_5 [0] : vector<512x30xf32> to vector<30xf32>
    %7 = vector.shape_cast %6 : vector<30xf32> to vector<1x30xf32>
    %cst_6 = arith.constant 5.120000e+02 : f32
    %8 = vector.broadcast %cst_6 : f32 to vector<1x30xf32>
    %9 = arith.divf %7, %8 : vector<1x30xf32>
    %10 = vector.broadcast %9 : vector<1x30xf32> to vector<512x30xf32>
    %11 = arith.subf %5, %10 : vector<512x30xf32>
    %12 = arith.mulf %11, %11 : vector<512x30xf32>
    %cst_7 = arith.constant dense<0.000000e+00> : vector<30xf32>
    %13 = vector.multi_reduction <add>, %12, %cst_7 [0] : vector<512x30xf32> to vector<30xf32>
    %14 = vector.shape_cast %13 : vector<30xf32> to vector<1x30xf32>
    %cst_8 = arith.constant 5.120000e+02 : f32
    %15 = vector.broadcast %cst_8 : f32 to vector<1x30xf32>
    %16 = arith.divf %14, %15 : vector<1x30xf32>
    %c0_9 = arith.constant 0 : index
    %c0_10 = arith.constant 0 : index
    %17 = vector.load %arg3[%c0_9, %c0_10] : memref<1x30xf32, #tpu.memory_space<vmem>>, vector<1x30xf32>
    %cst_11 = arith.constant 9.99999974E-6 : f32
    %18 = vector.broadcast %cst_11 : f32 to vector<1x30xf32>
    %19 = arith.addf %16, %18 : vector<1x30xf32>
    %20 = math.rsqrt %19 : vector<1x30xf32>
    %21 = arith.mulf %17, %20 : vector<1x30xf32>
    %22 = vector.broadcast %21 : vector<1x30xf32> to vector<512x30xf32>
    %23 = arith.mulf %11, %22 : vector<512x30xf32>
    %c0_12 = arith.constant 0 : index
    %c0_13 = arith.constant 0 : index
    %24 = vector.load %arg4[%c0_12, %c0_13] : memref<1x30xf32, #tpu.memory_space<vmem>>, vector<1x30xf32>
    %25 = vector.broadcast %24 : vector<1x30xf32> to vector<512x30xf32>
    %26 = arith.addf %23, %25 : vector<512x30xf32>
    %cst_14 = arith.constant 0.000000e+00 : f32
    %27 = vector.broadcast %cst_14 : f32 to vector<512x30xf32>
    %28 = arith.maximumf %26, %27 : vector<512x30xf32>
    %29 = vector.shape_cast %28 : vector<512x30xf32> to vector<32x8x2x30xf32>
    %cst_15 = arith.constant dense<0xFF800000> : vector<32x8x30xf32>
    %30 = vector.multi_reduction <maximumf>, %29, %cst_15 [2] : vector<32x8x2x30xf32> to vector<32x8x30xf32>
    %31 = vector.shape_cast %30 : vector<32x8x30xf32> to vector<2x8x2x8x30xf32>
    %cst_16 = arith.constant dense<0xFF800000> : vector<2x8x8x30xf32>
    %32 = vector.multi_reduction <maximumf>, %31, %cst_16 [2] : vector<2x8x2x8x30xf32> to vector<2x8x8x30xf32>
    %cst_17 = arith.constant 0.000000e+00 : f32
    %33 = vector.broadcast %cst_17 : f32 to vector<2x1x10x30xf32>
    %cst_18 = arith.constant 0.000000e+00 : f32
    %34 = vector.broadcast %cst_18 : f32 to vector<2x8x1x30xf32>
    %c0_19 = arith.constant 0 : index
    %c0_20 = arith.constant 0 : index
    %c0_21 = arith.constant 0 : index
    %c0_22 = arith.constant 0 : index
    %35 = vector.load %arg10[%c0_19, %c0_20, %c0_21, %c0_22] : memref<2x10x10x30xf32, #tpu.memory_space<vmem>>, vector<2x1x10x30xf32>
    tpu.vector_store %arg10[%c0_19, %c0_20, %c0_21, %c0_22], %33 {strides = array<i32>} : memref<2x10x10x30xf32, #tpu.memory_space<vmem>>, vector<2x1x10x30xf32>,
    %c0_23 = arith.constant 0 : index
    %c9 = arith.constant 9 : index
    %c0_24 = arith.constant 0 : index
    %c0_25 = arith.constant 0 : index
    %36 = vector.load %arg10[%c0_23, %c9, %c0_24, %c0_25] : memref<2x10x10x30xf32, #tpu.memory_space<vmem>>, vector<2x1x10x30xf32>
    tpu.vector_store %arg10[%c0_23, %c9, %c0_24, %c0_25], %33 {strides = array<i32>} : memref<2x10x10x30xf32, #tpu.memory_space<vmem>>, vector<2x1x10x30xf32>,
    %c0_26 = arith.constant 0 : index
    %c1 = arith.constant 1 : index
    %c0_27 = arith.constant 0 : index
    %c0_28 = arith.constant 0 : index
    %37 = vector.load %arg10[%c0_26, %c1, %c0_27, %c0_28] : memref<2x10x10x30xf32, #tpu.memory_space<vmem>>, vector<2x8x1x30xf32>
    tpu.vector_store %arg10[%c0_26, %c1, %c0_27, %c0_28], %34 {strides = array<i32>} : memref<2x10x10x30xf32, #tpu.memory_space<vmem>>, vector<2x8x1x30xf32>,
    %c0_29 = arith.constant 0 : index
    %c1_30 = arith.constant 1 : index
    %c9_31 = arith.constant 9 : index
    %c0_32 = arith.constant 0 : index
    %38 = vector.load %arg10[%c0_29, %c1_30, %c9_31, %c0_32] : memref<2x10x10x30xf32, #tpu.memory_space<vmem>>, vector<2x8x1x30xf32>
    tpu.vector_store %arg10[%c0_29, %c1_30, %c9_31, %c0_32], %34 {strides = array<i32>} : memref<2x10x10x30xf32, #tpu.memory_space<vmem>>, vector<2x8x1x30xf32>,
    %c0_33 = arith.constant 0 : index
    %c1_34 = arith.constant 1 : index
    %c1_35 = arith.constant 1 : index
    %c0_36 = arith.constant 0 : index
    %39 = vector.load %arg10[%c0_33, %c1_34, %c1_35, %c0_36] : memref<2x10x10x30xf32, #tpu.memory_space<vmem>>, vector<2x8x8x30xf32>
    tpu.vector_store %arg10[%c0_33, %c1_34, %c1_35, %c0_36], %32 {strides = array<i32>} : memref<2x10x10x30xf32, #tpu.memory_space<vmem>>, vector<2x8x8x30xf32>,
    %cst_37 = arith.constant 0.000000e+00 : f32
    %40 = vector.broadcast %cst_37 : f32 to vector<128x30xf32>
    %c0_38 = arith.constant 0 : index
    %c0_39 = arith.constant 0 : index
    %c0_40 = arith.constant 0 : index
    %c0_41 = arith.constant 0 : index
    %41 = vector.load %arg10[%c0_38, %c0_39, %c0_40, %c0_41] : memref<2x10x10x30xf32, #tpu.memory_space<vmem>>, vector<2x8x8x30xf32>
    %42 = vector.shape_cast %41 : vector<2x8x8x30xf32> to vector<128x30xf32>
    %c0_42 = arith.constant 0 : index
    %c0_43 = arith.constant 0 : index
    %c0_44 = arith.constant 0 : index
    %43 = vector.load %arg5[%c0_42, %c0_43, %c0_44] : memref<9x30x30xf32, #tpu.memory_space<vmem>>, vector<1x30x30xf32>
    %44 = vector.shape_cast %43 : vector<1x30x30xf32> to vector<30x30xf32>
    %cst_45 = arith.constant dense<0.000000e+00> : vector<128x30xf32>
    %45 = tpu.matmul %42, %44, %cst_45 {dimension_numbers = #tpu.dot_dimension_numbers<[1], [0], [0], [1], [0, 0, 1, 1], [], []>} : vector<128x30xf32>, vector<30x30xf32>, vector<128x30xf32> -> vector<128x30xf32>
    %46 = arith.addf %40, %45 : vector<128x30xf32>
    %c0_46 = arith.constant 0 : index
    %c0_47 = arith.constant 0 : index
    %c1_48 = arith.constant 1 : index
    %c0_49 = arith.constant 0 : index
    %47 = vector.load %arg10[%c0_46, %c0_47, %c1_48, %c0_49] : memref<2x10x10x30xf32, #tpu.memory_space<vmem>>, vector<2x8x8x30xf32>
    %48 = vector.shape_cast %47 : vector<2x8x8x30xf32> to vector<128x30xf32>
    %c1_50 = arith.constant 1 : index
    %c0_51 = arith.constant 0 : index
    %c0_52 = arith.constant 0 : index
    %49 = vector.load %arg5[%c1_50, %c0_51, %c0_52] : memref<9x30x30xf32, #tpu.memory_space<vmem>>, vector<1x30x30xf32>
    %50 = vector.shape_cast %49 : vector<1x30x30xf32> to vector<30x30xf32>
    %cst_53 = arith.constant dense<0.000000e+00> : vector<128x30xf32>
    %51 = tpu.matmul %48, %50, %cst_53 {dimension_numbers = #tpu.dot_dimension_numbers<[1], [0], [0], [1], [0, 0, 1, 1], [], []>} : vector<128x30xf32>, vector<30x30xf32>, vector<128x30xf32> -> vector<128x30xf32>
    %52 = arith.addf %46, %51 : vector<128x30xf32>
    %c0_54 = arith.constant 0 : index
    %c0_55 = arith.constant 0 : index
    %c2 = arith.constant 2 : index
    %c0_56 = arith.constant 0 : index
    %53 = vector.load %arg10[%c0_54, %c0_55, %c2, %c0_56] : memref<2x10x10x30xf32, #tpu.memory_space<vmem>>, vector<2x8x8x30xf32>
    %54 = vector.shape_cast %53 : vector<2x8x8x30xf32> to vector<128x30xf32>
    %c2_57 = arith.constant 2 : index
    %c0_58 = arith.constant 0 : index
    %c0_59 = arith.constant 0 : index
    %55 = vector.load %arg5[%c2_57, %c0_58, %c0_59] : memref<9x30x30xf32, #tpu.memory_space<vmem>>, vector<1x30x30xf32>
    %56 = vector.shape_cast %55 : vector<1x30x30xf32> to vector<30x30xf32>
    %cst_60 = arith.constant dense<0.000000e+00> : vector<128x30xf32>
    %57 = tpu.matmul %54, %56, %cst_60 {dimension_numbers = #tpu.dot_dimension_numbers<[1], [0], [0], [1], [0, 0, 1, 1], [], []>} : vector<128x30xf32>, vector<30x30xf32>, vector<128x30xf32> -> vector<128x30xf32>
    %58 = arith.addf %52, %57 : vector<128x30xf32>
    %c0_61 = arith.constant 0 : index
    %c1_62 = arith.constant 1 : index
    %c0_63 = arith.constant 0 : index
    %c0_64 = arith.constant 0 : index
    %59 = vector.load %arg10[%c0_61, %c1_62, %c0_63, %c0_64] : memref<2x10x10x30xf32, #tpu.memory_space<vmem>>, vector<2x8x8x30xf32>
    %60 = vector.shape_cast %59 : vector<2x8x8x30xf32> to vector<128x30xf32>
    %c3 = arith.constant 3 : index
    %c0_65 = arith.constant 0 : index
    %c0_66 = arith.constant 0 : index
    %61 = vector.load %arg5[%c3, %c0_65, %c0_66] : memref<9x30x30xf32, #tpu.memory_space<vmem>>, vector<1x30x30xf32>
    %62 = vector.shape_cast %61 : vector<1x30x30xf32> to vector<30x30xf32>
    %cst_67 = arith.constant dense<0.000000e+00> : vector<128x30xf32>
    %63 = tpu.matmul %60, %62, %cst_67 {dimension_numbers = #tpu.dot_dimension_numbers<[1], [0], [0], [1], [0, 0, 1, 1], [], []>} : vector<128x30xf32>, vector<30x30xf32>, vector<128x30xf32> -> vector<128x30xf32>
    %64 = arith.addf %58, %63 : vector<128x30xf32>
    %c0_68 = arith.constant 0 : index
    %c1_69 = arith.constant 1 : index
    %c1_70 = arith.constant 1 : index
    %c0_71 = arith.constant 0 : index
    %65 = vector.load %arg10[%c0_68, %c1_69, %c1_70, %c0_71] : memref<2x10x10x30xf32, #tpu.memory_space<vmem>>, vector<2x8x8x30xf32>
    %66 = vector.shape_cast %65 : vector<2x8x8x30xf32> to vector<128x30xf32>
    %c4 = arith.constant 4 : index
    %c0_72 = arith.constant 0 : index
    %c0_73 = arith.constant 0 : index
    %67 = vector.load %arg5[%c4, %c0_72, %c0_73] : memref<9x30x30xf32, #tpu.memory_space<vmem>>, vector<1x30x30xf32>
    %68 = vector.shape_cast %67 : vector<1x30x30xf32> to vector<30x30xf32>
    %cst_74 = arith.constant dense<0.000000e+00> : vector<128x30xf32>
    %69 = tpu.matmul %66, %68, %cst_74 {dimension_numbers = #tpu.dot_dimension_numbers<[1], [0], [0], [1], [0, 0, 1, 1], [], []>} : vector<128x30xf32>, vector<30x30xf32>, vector<128x30xf32> -> vector<128x30xf32>
    %70 = arith.addf %64, %69 : vector<128x30xf32>
    %c0_75 = arith.constant 0 : index
    %c1_76 = arith.constant 1 : index
    %c2_77 = arith.constant 2 : index
    %c0_78 = arith.constant 0 : index
    %71 = vector.load %arg10[%c0_75, %c1_76, %c2_77, %c0_78] : memref<2x10x10x30xf32, #tpu.memory_space<vmem>>, vector<2x8x8x30xf32>
    %72 = vector.shape_cast %71 : vector<2x8x8x30xf32> to vector<128x30xf32>
    %c5 = arith.constant 5 : index
    %c0_79 = arith.constant 0 : index
    %c0_80 = arith.constant 0 : index
    %73 = vector.load %arg5[%c5, %c0_79, %c0_80] : memref<9x30x30xf32, #tpu.memory_space<vmem>>, vector<1x30x30xf32>
    %74 = vector.shape_cast %73 : vector<1x30x30xf32> to vector<30x30xf32>
    %cst_81 = arith.constant dense<0.000000e+00> : vector<128x30xf32>
    %75 = tpu.matmul %72, %74, %cst_81 {dimension_numbers = #tpu.dot_dimension_numbers<[1], [0], [0], [1], [0, 0, 1, 1], [], []>} : vector<128x30xf32>, vector<30x30xf32>, vector<128x30xf32> -> vector<128x30xf32>
    %76 = arith.addf %70, %75 : vector<128x30xf32>
    %c0_82 = arith.constant 0 : index
    %c2_83 = arith.constant 2 : index
    %c0_84 = arith.constant 0 : index
    %c0_85 = arith.constant 0 : index
    %77 = vector.load %arg10[%c0_82, %c2_83, %c0_84, %c0_85] : memref<2x10x10x30xf32, #tpu.memory_space<vmem>>, vector<2x8x8x30xf32>
    %78 = vector.shape_cast %77 : vector<2x8x8x30xf32> to vector<128x30xf32>
    %c6 = arith.constant 6 : index
    %c0_86 = arith.constant 0 : index
    %c0_87 = arith.constant 0 : index
    %79 = vector.load %arg5[%c6, %c0_86, %c0_87] : memref<9x30x30xf32, #tpu.memory_space<vmem>>, vector<1x30x30xf32>
    %80 = vector.shape_cast %79 : vector<1x30x30xf32> to vector<30x30xf32>
    %cst_88 = arith.constant dense<0.000000e+00> : vector<128x30xf32>
    %81 = tpu.matmul %78, %80, %cst_88 {dimension_numbers = #tpu.dot_dimension_numbers<[1], [0], [0], [1], [0, 0, 1, 1], [], []>} : vector<128x30xf32>, vector<30x30xf32>, vector<128x30xf32> -> vector<128x30xf32>
    %82 = arith.addf %76, %81 : vector<128x30xf32>
    %c0_89 = arith.constant 0 : index
    %c2_90 = arith.constant 2 : index
    %c1_91 = arith.constant 1 : index
    %c0_92 = arith.constant 0 : index
    %83 = vector.load %arg10[%c0_89, %c2_90, %c1_91, %c0_92] : memref<2x10x10x30xf32, #tpu.memory_space<vmem>>, vector<2x8x8x30xf32>
    %84 = vector.shape_cast %83 : vector<2x8x8x30xf32> to vector<128x30xf32>
    %c7 = arith.constant 7 : index
    %c0_93 = arith.constant 0 : index
    %c0_94 = arith.constant 0 : index
    %85 = vector.load %arg5[%c7, %c0_93, %c0_94] : memref<9x30x30xf32, #tpu.memory_space<vmem>>, vector<1x30x30xf32>
    %86 = vector.shape_cast %85 : vector<1x30x30xf32> to vector<30x30xf32>
    %cst_95 = arith.constant dense<0.000000e+00> : vector<128x30xf32>
    %87 = tpu.matmul %84, %86, %cst_95 {dimension_numbers = #tpu.dot_dimension_numbers<[1], [0], [0], [1], [0, 0, 1, 1], [], []>} : vector<128x30xf32>, vector<30x30xf32>, vector<128x30xf32> -> vector<128x30xf32>
    %88 = arith.addf %82, %87 : vector<128x30xf32>
    %c0_96 = arith.constant 0 : index
    %c2_97 = arith.constant 2 : index
    %c2_98 = arith.constant 2 : index
    %c0_99 = arith.constant 0 : index
    %89 = vector.load %arg10[%c0_96, %c2_97, %c2_98, %c0_99] : memref<2x10x10x30xf32, #tpu.memory_space<vmem>>, vector<2x8x8x30xf32>
    %90 = vector.shape_cast %89 : vector<2x8x8x30xf32> to vector<128x30xf32>
    %c8 = arith.constant 8 : index
    %c0_100 = arith.constant 0 : index
    %c0_101 = arith.constant 0 : index
    %91 = vector.load %arg5[%c8, %c0_100, %c0_101] : memref<9x30x30xf32, #tpu.memory_space<vmem>>, vector<1x30x30xf32>
    %92 = vector.shape_cast %91 : vector<1x30x30xf32> to vector<30x30xf32>
    %cst_102 = arith.constant dense<0.000000e+00> : vector<128x30xf32>
    %93 = tpu.matmul %90, %92, %cst_102 {dimension_numbers = #tpu.dot_dimension_numbers<[1], [0], [0], [1], [0, 0, 1, 1], [], []>} : vector<128x30xf32>, vector<30x30xf32>, vector<128x30xf32> -> vector<128x30xf32>
    %94 = arith.addf %88, %93 : vector<128x30xf32>
    %c0_103 = arith.constant 0 : index
    %c0_104 = arith.constant 0 : index
    %95 = vector.load %arg6[%c0_103, %c0_104] : memref<1x30xf32, #tpu.memory_space<vmem>>, vector<1x30xf32>
    %96 = vector.broadcast %95 : vector<1x30xf32> to vector<128x30xf32>
    %97 = arith.addf %94, %96 : vector<128x30xf32>
    %cst_105 = arith.constant dense<0.000000e+00> : vector<30xf32>
    %98 = vector.multi_reduction <add>, %97, %cst_105 [0] : vector<128x30xf32> to vector<30xf32>
    %99 = vector.shape_cast %98 : vector<30xf32> to vector<1x30xf32>
    %cst_106 = arith.constant 1.280000e+02 : f32
    %100 = vector.broadcast %cst_106 : f32 to vector<1x30xf32>
    %101 = arith.divf %99, %100 : vector<1x30xf32>
    %102 = vector.broadcast %101 : vector<1x30xf32> to vector<128x30xf32>
    %103 = arith.subf %97, %102 : vector<128x30xf32>
    %104 = arith.mulf %103, %103 : vector<128x30xf32>
    %cst_107 = arith.constant dense<0.000000e+00> : vector<30xf32>
    %105 = vector.multi_reduction <add>, %104, %cst_107 [0] : vector<128x30xf32> to vector<30xf32>
    %106 = vector.shape_cast %105 : vector<30xf32> to vector<1x30xf32>
    %cst_108 = arith.constant 1.280000e+02 : f32
    %107 = vector.broadcast %cst_108 : f32 to vector<1x30xf32>
    %108 = arith.divf %106, %107 : vector<1x30xf32>
    %c0_109 = arith.constant 0 : index
    %c0_110 = arith.constant 0 : index
    %109 = vector.load %arg7[%c0_109, %c0_110] : memref<1x30xf32, #tpu.memory_space<vmem>>, vector<1x30xf32>
    %cst_111 = arith.constant 9.99999974E-6 : f32
    %110 = vector.broadcast %cst_111 : f32 to vector<1x30xf32>
    %111 = arith.addf %108, %110 : vector<1x30xf32>
    %112 = math.rsqrt %111 : vector<1x30xf32>
    %113 = arith.mulf %109, %112 : vector<1x30xf32>
    %114 = vector.broadcast %113 : vector<1x30xf32> to vector<128x30xf32>
    %115 = arith.mulf %103, %114 : vector<128x30xf32>
    %c0_112 = arith.constant 0 : index
    %c0_113 = arith.constant 0 : index
    %116 = vector.load %arg8[%c0_112, %c0_113] : memref<1x30xf32, #tpu.memory_space<vmem>>, vector<1x30xf32>
    %117 = vector.broadcast %116 : vector<1x30xf32> to vector<128x30xf32>
    %118 = arith.addf %115, %117 : vector<128x30xf32>
    %cst_114 = arith.constant 0.000000e+00 : f32
    %119 = vector.broadcast %cst_114 : f32 to vector<128x30xf32>
    %120 = arith.maximumf %118, %119 : vector<128x30xf32>
    %121 = tpu.transpose %120, [1, 0] : vector<128x30xf32> -> vector<30x128xf32>
    %c0_115 = arith.constant 0 : index
    %c0_116 = arith.constant 0 : index
    %122 = vector.load %arg9[%c0_115, %c0_116] : memref<30x128xf32, #tpu.memory_space<vmem>>, vector<30x128xf32>
    tpu.vector_store %arg9[%c0_115, %c0_116], %121 {strides = array<i32>} : memref<30x128xf32, #tpu.memory_space<vmem>>, vector<30x128xf32>,
    return
  }
}

</mosaic_0001>

<llo_original>
// kernel: sa_branch_forward.1
$region0: #{sa_branch_forward.1}
  #allocation0 [shape = 'u32[]', space=smem, size = 0x4, offset = 0x4, fixed_abs, tag = 'smem constant byte address 0x4 - core index']
  #allocation1 [shape = 'u32[72,128]{1,0:T(1,128)}', space=vmem, size = 0x9000, scoped, tag = 'internal scratch']
  #allocation2 [shape = 'f32[2,10,10,30]{3,2,1,0:T(8,128)}', space=vmem, size = 0x28000, scoped, tag = 'scratch operand']
  %s0 = inlined_call_operand.vmem [shape: f32[512,9], index: 0, kind: input, shape index: {}]
  %s1 = inlined_call_operand.vmem [shape: f32[9,30], index: 1, kind: input, shape index: {}]
  %s2 = inlined_call_operand.vmem [shape: f32[1,30], index: 2, kind: input, shape index: {}]
  %s3 = inlined_call_operand.vmem [shape: f32[1,30], index: 3, kind: input, shape index: {}]
  %s4 = inlined_call_operand.vmem [shape: f32[1,30], index: 4, kind: input, shape index: {}]
  %s5 = inlined_call_operand.vmem [shape: f32[9,30,30], index: 5, kind: input, shape index: {}]
  %s6 = inlined_call_operand.vmem [shape: f32[1,30], index: 6, kind: input, shape index: {}]
  %s7 = inlined_call_operand.vmem [shape: f32[1,30], index: 7, kind: input, shape index: {}]
  %s8 = inlined_call_operand.vmem [shape: f32[1,30], index: 8, kind: input, shape index: {}]
  %s9 = inlined_call_operand.vmem [shape: f32[30,128], index: 9, kind: output, shape index: {}]
  %s10 = sld [smem:[#allocation0]]
  $region46: #{sa_branch_forward.1} parent=0
    _
  %s12 = ssub.s32 1, %s10
  %s13 = scalar_select 0, %s12, %s10
  // Predicated region
  $region2: #{sa_branch_forward.1} parent=0 // pred_check
    _
  $region3: #{sa_branch_forward.1} parent=0 // pred_check_branch
    %15 = sbr.rel (0) target = $region5
  $region4: #{sa_branch_forward.1} parent=0 // pred_region
    _
  $region5: #{sa_branch_forward.1} parent=0 // pred_fallthru
    _
  // Predicated region
  $region6: #{sa_branch_forward.1} parent=0 // pred_check
    _
  $region7: #{sa_branch_forward.1} parent=0 // pred_check_branch
    %17 = sbr.rel (0) target = $region9
  $region8: #{sa_branch_forward.1} parent=0 // pred_region
    _
  $region9: #{sa_branch_forward.1} parent=0 // pred_fallthru
    _
  // Predicated region
  $region10: #{sa_branch_forward.1} parent=0 // pred_check
    _
  $region11: #{sa_branch_forward.1} parent=0 // pred_check_branch
    %19 = sbr.rel (0) target = $region13
  $region12: #{sa_branch_forward.1} parent=0 // pred_region
    _
  $region13: #{sa_branch_forward.1} parent=0 // pred_fallthru
    _
  // Predicated region
  $region14: #{sa_branch_forward.1} parent=0 // pred_check
    _
  $region15: #{sa_branch_forward.1} parent=0 // pred_check_branch
    %21 = sbr.rel (0) target = $region17
  $region16: #{sa_branch_forward.1} parent=0 // pred_region
    _
  $region17: #{sa_branch_forward.1} parent=0 // pred_fallthru
    _
  // Predicated region
  $region18: #{sa_branch_forward.1} parent=0 // pred_check
    _
  $region19: #{sa_branch_forward.1} parent=0 // pred_check_branch
    %23 = sbr.rel (0) target = $region21
  $region20: #{sa_branch_forward.1} parent=0 // pred_region
    _
  $region21: #{sa_branch_forward.1} parent=0 // pred_fallthru
    _
  // Predicated region
  $region22: #{sa_branch_forward.1} parent=0 // pred_check
    _
  $region23: #{sa_branch_forward.1} parent=0 // pred_check_branch
    %25 = sbr.rel (0) target = $region25
  $region24: #{sa_branch_forward.1} parent=0 // pred_region
    _
  $region25: #{sa_branch_forward.1} parent=0 // pred_fallthru
    _
  // Predicated region
  $region26: #{sa_branch_forward.1} parent=0 // pred_check
    _
  $region27: #{sa_branch_forward.1} parent=0 // pred_check_branch
    %27 = sbr.rel (0) target = $region29
  $region28: #{sa_branch_forward.1} parent=0 // pred_region
    _
  $region29: #{sa_branch_forward.1} parent=0 // pred_fallthru
    _
  // Predicated region
  $region30: #{sa_branch_forward.1} parent=0 // pred_check
    _
  $region31: #{sa_branch_forward.1} parent=0 // pred_check_branch
    %29 = sbr.rel (0) target = $region33
  $region32: #{sa_branch_forward.1} parent=0 // pred_region
    _
  $region33: #{sa_branch_forward.1} parent=0 // pred_fallthru
    _
  // Predicated region
  $region34: #{sa_branch_forward.1} parent=0 // pred_check
    _
  $region35: #{sa_branch_forward.1} parent=0 // pred_check_branch
    %31 = sbr.rel (0) target = $region37
  $region36: #{sa_branch_forward.1} parent=0 // pred_region
    _
  $region37: #{sa_branch_forward.1} parent=0 // pred_fallthru
    _
  %v32 = vld [vmem:[%s0] sm:$0xff]
  %v33 = vld [vmem:[%s0 + $0x8] sm:$0xff]
  %v34 = vld [vmem:[%s0 + $0x10] sm:$0xff]
  %v35 = vld [vmem:[%s0 + $0x18] sm:$0xff]
  %v36 = vld [vmem:[%s0 + $0x20] sm:$0xff]
  %v37 = vld [vmem:[%s0 + $0x28] sm:$0xff]
  %v38 = vld [vmem:[%s0 + $0x30] sm:$0xff]
  %v39 = vld [vmem:[%s0 + $0x38] sm:$0xff]
  %v40 = vld [vmem:[%s0 + $0x40] sm:$0xff]
  %v41 = vld [vmem:[%s0 + $0x48] sm:$0xff]
  %v42 = vld [vmem:[%s0 + $0x50] sm:$0xff]
  %v43 = vld [vmem:[%s0 + $0x58] sm:$0xff]
  %v44 = vld [vmem:[%s0 + $0x60] sm:$0xff]
  %v45 = vld [vmem:[%s0 + $0x68] sm:$0xff]
  %v46 = vld [vmem:[%s0 + $0x70] sm:$0xff]
  %v47 = vld [vmem:[%s0 + $0x78] sm:$0xff]
  %v48 = vld [vmem:[%s0 + $0x80] sm:$0xff]
  %v49 = vld [vmem:[%s0 + $0x88] sm:$0xff]
  %v50 = vld [vmem:[%s0 + $0x90] sm:$0xff]
  %v51 = vld [vmem:[%s0 + $0x98] sm:$0xff]
  %v52 = vld [vmem:[%s0 + $0xa0] sm:$0xff]
  %v53 = vld [vmem:[%s0 + $0xa8] sm:$0xff]
  %v54 = vld [vmem:[%s0 + $0xb0] sm:$0xff]
  %v55 = vld [vmem:[%s0 + $0xb8] sm:$0xff]
  %v56 = vld [vmem:[%s0 + $0xc0] sm:$0xff]
  %v57 = vld [vmem:[%s0 + $0xc8] sm:$0xff]
  %v58 = vld [vmem:[%s0 + $0xd0] sm:$0xff]
  %v59 = vld [vmem:[%s0 + $0xd8] sm:$0xff]
  %v60 = vld [vmem:[%s0 + $0xe0] sm:$0xff]
  %v61 = vld [vmem:[%s0 + $0xe8] sm:$0xff]
  %v62 = vld [vmem:[%s0 + $0xf0] sm:$0xff]
  %v63 = vld [vmem:[%s0 + $0xf8] sm:$0xff]
  %v64 = vld [vmem:[%s0 + $0x100] sm:$0xff]
  %v65 = vld [vmem:[%s0 + $0x108] sm:$0xff]
  %v66 = vld [vmem:[%s0 + $0x110] sm:$0xff]
  %v67 = vld [vmem:[%s0 + $0x118] sm:$0xff]
  %v68 = vld [vmem:[%s0 + $0x120] sm:$0xff]
  %v69 = vld [vmem:[%s0 + $0x128] sm:$0xff]
  %v70 = vld [vmem:[%s0 + $0x130] sm:$0xff]
  %v71 = vld [vmem:[%s0 + $0x138] sm:$0xff]
  %v72 = vld [vmem:[%s0 + $0x140] sm:$0xff]
  %v73 = vld [vmem:[%s0 + $0x148] sm:$0xff]
  %v74 = vld [vmem:[%s0 + $0x150] sm:$0xff]
  %v75 = vld [vmem:[%s0 + $0x158] sm:$0xff]
  %v76 = vld [vmem:[%s0 + $0x160] sm:$0xff]
  %v77 = vld [vmem:[%s0 + $0x168] sm:$0xff]
  %v78 = vld [vmem:[%s0 + $0x170] sm:$0xff]
  %v79 = vld [vmem:[%s0 + $0x178] sm:$0xff]
  %v80 = vld [vmem:[%s0 + $0x180] sm:$0xff]
  %v81 = vld [vmem:[%s0 + $0x188] sm:$0xff]
  %v82 = vld [vmem:[%s0 + $0x190] sm:$0xff]
  %v83 = vld [vmem:[%s0 + $0x198] sm:$0xff]
  %v84 = vld [vmem:[%s0 + $0x1a0] sm:$0xff]
  %v85 = vld [vmem:[%s0 + $0x1a8] sm:$0xff]
  %v86 = vld [vmem:[%s0 + $0x1b0] sm:$0xff]
  %v87 = vld [vmem:[%s0 + $0x1b8] sm:$0xff]
  %v88 = vld [vmem:[%s0 + $0x1c0] sm:$0xff]
  %v89 = vld [vmem:[%s0 + $0x1c8] sm:$0xff]
  %v90 = vld [vmem:[%s0 + $0x1d0] sm:$0xff]
  %v91 = vld [vmem:[%s0 + $0x1d8] sm:$0xff]
  %v92 = vld [vmem:[%s0 + $0x1e0] sm:$0xff]
  %v93 = vld [vmem:[%s0 + $0x1e8] sm:$0xff]
  %v94 = vld [vmem:[%s0 + $0x1f0] sm:$0xff]
  %v95 = vld [vmem:[%s0 + $0x1f8] sm:$0xff]
  %v96 = vld [vmem:[%s1] sm:$0xff]
  %v97 = vld [vmem:[%s1 + $0x8] sm:$0x1]
  %v98 = vld [vmem:[%s2] sm:$0x1]
  %v100 = vperm.slane %v98, 0
  %vm102 = vcmask 72704
  %v104 = vsel %vm102, %v32, 0
  %v107 = vsel %vm102, %v33, 0
  %v110 = vsel %vm102, %v34, 0
  %v113 = vsel %vm102, %v35, 0
  %v116 = vsel %vm102, %v36, 0
  %v119 = vsel %vm102, %v37, 0
  %v122 = vsel %vm102, %v38, 0
  %v125 = vsel %vm102, %v39, 0
  %v128 = vsel %vm102, %v40, 0
  %v131 = vsel %vm102, %v41, 0
  %v134 = vsel %vm102, %v42, 0
  %v137 = vsel %vm102, %v43, 0
  %v140 = vsel %vm102, %v44, 0
  %v143 = vsel %vm102, %v45, 0
  %v146 = vsel %vm102, %v46, 0
  %v149 = vsel %vm102, %v47, 0
  %v152 = vsel %vm102, %v48, 0
  %v155 = vsel %vm102, %v49, 0
  %v158 = vsel %vm102, %v50, 0
  %v161 = vsel %vm102, %v51, 0
  %v164 = vsel %vm102, %v52, 0
  %v167 = vsel %vm102, %v53, 0
  %v170 = vsel %vm102, %v54, 0
  %v173 = vsel %vm102, %v55, 0
  %v176 = vsel %vm102, %v56, 0
  %v179 = vsel %vm102, %v57, 0
  %v182 = vsel %vm102, %v58, 0
  %v185 = vsel %vm102, %v59, 0
  %v188 = vsel %vm102, %v60, 0
  %v191 = vsel %vm102, %v61, 0
  %v194 = vsel %vm102, %v62, 0
  %v197 = vsel %vm102, %v63, 0
  %v200 = vsel %vm102, %v64, 0
  %v203 = vsel %vm102, %v65, 0
  %v206 = vsel %vm102, %v66, 0
  %v209 = vsel %vm102, %v67, 0
  %v212 = vsel %vm102, %v68, 0
  %v215 = vsel %vm102, %v69, 0
  %v218 = vsel %vm102, %v70, 0
  %v221 = vsel %vm102, %v71, 0
  %v224 = vsel %vm102, %v72, 0
  %v227 = vsel %vm102, %v73, 0
  %v230 = vsel %vm102, %v74, 0
  %v233 = vsel %vm102, %v75, 0
  %v236 = vsel %vm102, %v76, 0
  %v239 = vsel %vm102, %v77, 0
  %v242 = vsel %vm102, %v78, 0
  %v245 = vsel %vm102, %v79, 0
  %v248 = vsel %vm102, %v80, 0
  %v251 = vsel %vm102, %v81, 0
  %v254 = vsel %vm102, %v82, 0
  %v257 = vsel %vm102, %v83, 0
  %v260 = vsel %vm102, %v84, 0
  %v263 = vsel %vm102, %v85, 0
  %v266 = vsel %vm102, %v86, 0
  %v269 = vsel %vm102, %v87, 0
  %v272 = vsel %vm102, %v88, 0
  %v275 = vsel %vm102, %v89, 0
  %v278 = vsel %vm102, %v90, 0
  %v281 = vsel %vm102, %v91, 0
  %v284 = vsel %vm102, %v92, 0
  %v287 = vsel %vm102, %v93, 0
  %v290 = vsel %vm102, %v94, 0
  %v293 = vsel %vm102, %v95, 0
  %vm295 = vcmask 1040384
  %v297 = vsel %vm295, %v97, 0
  %299 = vmatpush.msra.mxu0 0.0
  %300 = vmatpush.msra.mxu0 0.0
  %301 = vmatpush.msra.mxu0 0.0
  %302 = vmatpush.msra.mxu0 0.0
  %303 = vmatpush.msra.mxu0 0.0
  %304 = vmatpush.msra.mxu0 0.0
  %305 = vmatpush.msra.mxu0 0.0
  %306 = vmatpush.msra.mxu0 0.0
  %307 = vmatpush.msra.mxu0 0.0
  %308 = vmatpush.msra.mxu0 0.0
  %309 = vmatpush.msra.mxu0 0.0
  %310 = vmatpush.msra.mxu0 0.0
  %311 = vmatpush.msra.mxu0 0.0
  %312 = vmatpush.msra.mxu0 0.0
  %313 = vmatpush.msra.mxu0 %v297
  %314 = vmatpush.msra.mxu0 %v96
  %315 = vmatmul.f32.gmra.mxu0 %v104
  %v316 = vpop.f32.mrf.mxu0
  %v317 = vadd.f32 %v100, %v316
  %318 = vmatmul.f32.gmra.mxu0 %v107
  %v319 = vpop.f32.mrf.mxu0
  %v320 = vadd.f32 %v100, %v319
  %321 = vmatmul.f32.gmra.mxu0 %v110
  %v322 = vpop.f32.mrf.mxu0
  %v323 = vadd.f32 %v100, %v322
  %324 = vmatmul.f32.gmra.mxu0 %v113
  %v325 = vpop.f32.mrf.mxu0
  %v326 = vadd.f32 %v100, %v325
  %327 = vmatmul.f32.gmra.mxu0 %v116
  %v328 = vpop.f32.mrf.mxu0
  %v329 = vadd.f32 %v100, %v328
  %330 = vmatmul.f32.gmra.mxu0 %v119
  %v331 = vpop.f32.mrf.mxu0
  %v332 = vadd.f32 %v100, %v331
  %333 = vmatmul.f32.gmra.mxu0 %v122
  %v334 = vpop.f32.mrf.mxu0
  %v335 = vadd.f32 %v100, %v334
  %336 = vmatmul.f32.gmra.mxu0 %v125
  %v337 = vpop.f32.mrf.mxu0
  %v338 = vadd.f32 %v100, %v337
  %339 = vmatmul.f32.gmra.mxu0 %v128
  %v340 = vpop.f32.mrf.mxu0
  %v341 = vadd.f32 %v100, %v340
  %342 = vmatmul.f32.gmra.mxu0 %v131
  %v343 = vpop.f32.mrf.mxu0
  %v344 = vadd.f32 %v100, %v343
  %345 = vmatmul.f32.gmra.mxu0 %v134
  %v346 = vpop.f32.mrf.mxu0
  %v347 = vadd.f32 %v100, %v346
  %348 = vmatmul.f32.gmra.mxu0 %v137
  %v349 = vpop.f32.mrf.mxu0
  %v350 = vadd.f32 %v100, %v349
  %351 = vmatmul.f32.gmra.mxu0 %v140
  %v352 = vpop.f32.mrf.mxu0
  %v353 = vadd.f32 %v100, %v352
  %354 = vmatmul.f32.gmra.mxu0 %v143
  %v355 = vpop.f32.mrf.mxu0
  %v356 = vadd.f32 %v100, %v355
  %357 = vmatmul.f32.gmra.mxu0 %v146
  %v358 = vpop.f32.mrf.mxu0
  %v359 = vadd.f32 %v100, %v358
  %360 = vmatmul.f32.gmra.mxu0 %v149
  %v361 = vpop.f32.mrf.mxu0
  %v362 = vadd.f32 %v100, %v361
  %363 = vmatmul.f32.gmra.mxu0 %v152
  %v364 = vpop.f32.mrf.mxu0
  %v365 = vadd.f32 %v100, %v364
  %366 = vmatmul.f32.gmra.mxu0 %v155
  %v367 = vpop.f32.mrf.mxu0
  %v368 = vadd.f32 %v100, %v367
  %369 = vmatmul.f32.gmra.mxu0 %v158
  %v370 = vpop.f32.mrf.mxu0
  %v371 = vadd.f32 %v100, %v370
  %372 = vmatmul.f32.gmra.mxu0 %v161
  %v373 = vpop.f32.mrf.mxu0
  %v374 = vadd.f32 %v100, %v373
  %375 = vmatmul.f32.gmra.mxu0 %v164
  %v376 = vpop.f32.mrf.mxu0
  %v377 = vadd.f32 %v100, %v376
  %378 = vmatmul.f32.gmra.mxu0 %v167
  %v379 = vpop.f32.mrf.mxu0
  %v380 = vadd.f32 %v100, %v379
  %381 = vmatmul.f32.gmra.mxu0 %v170
  %v382 = vpop.f32.mrf.mxu0
  %v383 = vadd.f32 %v100, %v382
  %384 = vmatmul.f32.gmra.mxu0 %v173
  %v385 = vpop.f32.mrf.mxu0
  %v386 = vadd.f32 %v100, %v385
  %387 = vmatmul.f32.gmra.mxu0 %v176
  %v388 = vpop.f32.mrf.mxu0
  %v389 = vadd.f32 %v100, %v388
  %390 = vmatmul.f32.gmra.mxu0 %v179
  %v391 = vpop.f32.mrf.mxu0
  %v392 = vadd.f32 %v100, %v391
  %393 = vmatmul.f32.gmra.mxu0 %v182
  %v394 = vpop.f32.mrf.mxu0
  %v395 = vadd.f32 %v100, %v394
  %396 = vmatmul.f32.gmra.mxu0 %v185
  %v397 = vpop.f32.mrf.mxu0
  %v398 = vadd.f32 %v100, %v397
  %399 = vmatmul.f32.gmra.mxu0 %v188
  %v400 = vpop.f32.mrf.mxu0
  %v401 = vadd.f32 %v100, %v400
  %402 = vmatmul.f32.gmra.mxu0 %v191
  %v403 = vpop.f32.mrf.mxu0
  %v404 = vadd.f32 %v100, %v403
  %405 = vmatmul.f32.gmra.mxu0 %v194
  %v406 = vpop.f32.mrf.mxu0
  %v407 = vadd.f32 %v100, %v406
  %408 = vmatmul.f32.gmra.mxu0 %v197
  %v409 = vpop.f32.mrf.mxu0
  %v410 = vadd.f32 %v100, %v409
  %411 = vmatmul.f32.gmra.mxu0 %v200
  %v412 = vpop.f32.mrf.mxu0
  %v413 = vadd.f32 %v100, %v412
  %414 = vmatmul.f32.gmra.mxu0 %v203
  %v415 = vpop.f32.mrf.mxu0
  %v416 = vadd.f32 %v100, %v415
  %417 = vmatmul.f32.gmra.mxu0 %v206
  %v418 = vpop.f32.mrf.mxu0
  %v419 = vadd.f32 %v100, %v418
  %420 = vmatmul.f32.gmra.mxu0 %v209
  %v421 = vpop.f32.mrf.mxu0
  %v422 = vadd.f32 %v100, %v421
  %423 = vmatmul.f32.gmra.mxu0 %v212
  %v424 = vpop.f32.mrf.mxu0
  %v425 = vadd.f32 %v100, %v424
  %426 = vmatmul.f32.gmra.mxu0 %v215
  %v427 = vpop.f32.mrf.mxu0
  %v428 = vadd.f32 %v100, %v427
  %429 = vmatmul.f32.gmra.mxu0 %v218
  %v430 = vpop.f32.mrf.mxu0
  %v431 = vadd.f32 %v100, %v430
  %432 = vmatmul.f32.gmra.mxu0 %v221
  %v433 = vpop.f32.mrf.mxu0
  %v434 = vadd.f32 %v100, %v433
  %435 = vmatmul.f32.gmra.mxu0 %v224
  %v436 = vpop.f32.mrf.mxu0
  %v437 = vadd.f32 %v100, %v436
  %438 = vmatmul.f32.gmra.mxu0 %v227
  %v439 = vpop.f32.mrf.mxu0
  %v440 = vadd.f32 %v100, %v439
  %441 = vmatmul.f32.gmra.mxu0 %v230
  %v442 = vpop.f32.mrf.mxu0
  %v443 = vadd.f32 %v100, %v442
  %444 = vmatmul.f32.gmra.mxu0 %v233
  %v445 = vpop.f32.mrf.mxu0
  %v446 = vadd.f32 %v100, %v445
  %447 = vmatmul.f32.gmra.mxu0 %v236
  %v448 = vpop.f32.mrf.mxu0
  %v449 = vadd.f32 %v100, %v448
  %450 = vmatmul.f32.gmra.mxu0 %v239
  %v451 = vpop.f32.mrf.mxu0
  %v452 = vadd.f32 %v100, %v451
  %453 = vmatmul.f32.gmra.mxu0 %v242
  %v454 = vpop.f32.mrf.mxu0
  %v455 = vadd.f32 %v100, %v454
  %456 = vmatmul.f32.gmra.mxu0 %v245
  %v457 = vpop.f32.mrf.mxu0
  %v458 = vadd.f32 %v100, %v457
  %459 = vmatmul.f32.gmra.mxu0 %v248
  %v460 = vpop.f32.mrf.mxu0
  %v461 = vadd.f32 %v100, %v460
  %462 = vmatmul.f32.gmra.mxu0 %v251
  %v463 = vpop.f32.mrf.mxu0
  %v464 = vadd.f32 %v100, %v463
  %465 = vmatmul.f32.gmra.mxu0 %v254
  %v466 = vpop.f32.mrf.mxu0
  %v467 = vadd.f32 %v100, %v466
  %468 = vmatmul.f32.gmra.mxu0 %v257
  %v469 = vpop.f32.mrf.mxu0
  %v470 = vadd.f32 %v100, %v469
  %471 = vmatmul.f32.gmra.mxu0 %v260
  %v472 = vpop.f32.mrf.mxu0
  %v473 = vadd.f32 %v100, %v472
  %474 = vmatmul.f32.gmra.mxu0 %v263
  %v475 = vpop.f32.mrf.mxu0
  %v476 = vadd.f32 %v100, %v475
  %477 = vmatmul.f32.gmra.mxu0 %v266
  %v478 = vpop.f32.mrf.mxu0
  %v479 = vadd.f32 %v100, %v478
  %480 = vmatmul.f32.gmra.mxu0 %v269
  %v481 = vpop.f32.mrf.mxu0
  %v482 = vadd.f32 %v100, %v481
  %483 = vmatmul.f32.gmra.mxu0 %v272
  %v484 = vpop.f32.mrf.mxu0
  %v485 = vadd.f32 %v100, %v484
  %486 = vmatmul.f32.gmra.mxu0 %v275
  %v487 = vpop.f32.mrf.mxu0
  %v488 = vadd.f32 %v100, %v487
  %489 = vmatmul.f32.gmra.mxu0 %v278
  %v490 = vpop.f32.mrf.mxu0
  %v491 = vadd.f32 %v100, %v490
  %492 = vmatmul.f32.gmra.mxu0 %v281
  %v493 = vpop.f32.mrf.mxu0
  %v494 = vadd.f32 %v100, %v493
  %495 = vmatmul.f32.gmra.mxu0 %v284
  %v496 = vpop.f32.mrf.mxu0
  %v497 = vadd.f32 %v100, %v496
  %498 = vmatmul.f32.gmra.mxu0 %v287
  %v499 = vpop.f32.mrf.mxu0
  %v500 = vadd.f32 %v100, %v499
  %501 = vmatmul.f32.gmra.mxu0 %v290
  %v502 = vpop.f32.mrf.mxu0
  %v503 = vadd.f32 %v100, %v502
  %504 = vmatmul.f32.gmra.mxu0 %v293
  %v505 = vpop.f32.mrf.mxu0
  %v506 = vadd.f32 %v100, %v505
  %507 = vdwg.mxu0
  %vm508 = vcmask 244736
  %v509 = vsel %vm508, %v317, 0.0
  %v510 = vsel %vm508, %v320, 0.0
  %v511 = vadd.f32 %v509, %v510
  %v512 = vsel %vm508, %v323, 0.0
  %v513 = vadd.f32 %v511, %v512
  %v514 = vsel %vm508, %v326, 0.0
  %v515 = vadd.f32 %v513, %v514
  %v516 = vsel %vm508, %v329, 0.0
  %v517 = vadd.f32 %v515, %v516
  %v518 = vsel %vm508, %v332, 0.0
  %v519 = vadd.f32 %v517, %v518
  %v520 = vsel %vm508, %v335, 0.0
  %v521 = vadd.f32 %v519, %v520
  %v522 = vsel %vm508, %v338, 0.0
  %v523 = vadd.f32 %v521, %v522
  %v524 = vsel %vm508, %v341, 0.0
  %v525 = vadd.f32 %v523, %v524
  %v526 = vsel %vm508, %v344, 0.0
  %v527 = vadd.f32 %v525, %v526
  %v528 = vsel %vm508, %v347, 0.0
  %v529 = vadd.f32 %v527, %v528
  %v530 = vsel %vm508, %v350, 0.0
  %v531 = vadd.f32 %v529, %v530
  %v532 = vsel %vm508, %v353, 0.0
  %v533 = vadd.f32 %v531, %v532
  %v534 = vsel %vm508, %v356, 0.0
  %v535 = vadd.f32 %v533, %v534
  %v536 = vsel %vm508, %v359, 0.0
  %v537 = vadd.f32 %v535, %v536
  %v538 = vsel %vm508, %v362, 0.0
  %v539 = vadd.f32 %v537, %v538
  %v540 = vsel %vm508, %v365, 0.0
  %v541 = vadd.f32 %v539, %v540
  %v542 = vsel %vm508, %v368, 0.0
  %v543 = vadd.f32 %v541, %v542
  %v544 = vsel %vm508, %v371, 0.0
  %v545 = vadd.f32 %v543, %v544
  %v546 = vsel %vm508, %v374, 0.0
  %v547 = vadd.f32 %v545, %v546
  %v548 = vsel %vm508, %v377, 0.0
  %v549 = vadd.f32 %v547, %v548
  %v550 = vsel %vm508, %v380, 0.0
  %v551 = vadd.f32 %v549, %v550
  %v552 = vsel %vm508, %v383, 0.0
  %v553 = vadd.f32 %v551, %v552
  %v554 = vsel %vm508, %v386, 0.0
  %v555 = vadd.f32 %v553, %v554
  %v556 = vsel %vm508, %v389, 0.0
  %v557 = vadd.f32 %v555, %v556
  %v558 = vsel %vm508, %v392, 0.0
  %v559 = vadd.f32 %v557, %v558
  %v560 = vsel %vm508, %v395, 0.0
  %v561 = vadd.f32 %v559, %v560
  %v562 = vsel %vm508, %v398, 0.0
  %v563 = vadd.f32 %v561, %v562
  %v564 = vsel %vm508, %v401, 0.0
  %v565 = vadd.f32 %v563, %v564
  %v566 = vsel %vm508, %v404, 0.0
  %v567 = vadd.f32 %v565, %v566
  %v568 = vsel %vm508, %v407, 0.0
  %v569 = vadd.f32 %v567, %v568
  %v570 = vsel %vm508, %v410, 0.0
  %v571 = vadd.f32 %v569, %v570
  %v572 = vsel %vm508, %v413, 0.0
  %v573 = vadd.f32 %v571, %v572
  %v574 = vsel %vm508, %v416, 0.0
  %v575 = vadd.f32 %v573, %v574
  %v576 = vsel %vm508, %v419, 0.0
  %v577 = vadd.f32 %v575, %v576
  %v578 = vsel %vm508, %v422, 0.0
  %v579 = vadd.f32 %v577, %v578
  %v580 = vsel %vm508, %v425, 0.0
  %v581 = vadd.f32 %v579, %v580
  %v582 = vsel %vm508, %v428, 0.0
  %v583 = vadd.f32 %v581, %v582
  %v584 = vsel %vm508, %v431, 0.0
  %v585 = vadd.f32 %v583, %v584
  %v586 = vsel %vm508, %v434, 0.0
  %v587 = vadd.f32 %v585, %v586
  %v588 = vsel %vm508, %v437, 0.0
  %v589 = vadd.f32 %v587, %v588
  %v590 = vsel %vm508, %v440, 0.0
  %v591 = vadd.f32 %v589, %v590
  %v592 = vsel %vm508, %v443, 0.0
  %v593 = vadd.f32 %v591, %v592
  %v594 = vsel %vm508, %v446, 0.0
  %v595 = vadd.f32 %v593, %v594
  %v596 = vsel %vm508, %v449, 0.0
  %v597 = vadd.f32 %v595, %v596
  %v598 = vsel %vm508, %v452, 0.0
  %v599 = vadd.f32 %v597, %v598
  %v600 = vsel %vm508, %v455, 0.0
  %v601 = vadd.f32 %v599, %v600
  %v602 = vsel %vm508, %v458, 0.0
  %v603 = vadd.f32 %v601, %v602
  %v604 = vsel %vm508, %v461, 0.0
  %v605 = vadd.f32 %v603, %v604
  %v606 = vsel %vm508, %v464, 0.0
  %v607 = vadd.f32 %v605, %v606
  %v608 = vsel %vm508, %v467, 0.0
  %v609 = vadd.f32 %v607, %v608
  %v610 = vsel %vm508, %v470, 0.0
  %v611 = vadd.f32 %v609, %v610
  %v612 = vsel %vm508, %v473, 0.0
  %v613 = vadd.f32 %v611, %v612
  %v614 = vsel %vm508, %v476, 0.0
  %v615 = vadd.f32 %v613, %v614
  %v616 = vsel %vm508, %v479, 0.0
  %v617 = vadd.f32 %v615, %v616
  %v618 = vsel %vm508, %v482, 0.0
  %v619 = vadd.f32 %v617, %v618
  %v620 = vsel %vm508, %v485, 0.0
  %v621 = vadd.f32 %v619, %v620
  %v622 = vsel %vm508, %v488, 0.0
  %v623 = vadd.f32 %v621, %v622
  %v624 = vsel %vm508, %v491, 0.0
  %v625 = vadd.f32 %v623, %v624
  %v626 = vsel %vm508, %v494, 0.0
  %v627 = vadd.f32 %v625, %v626
  %v628 = vsel %vm508, %v497, 0.0
  %v629 = vadd.f32 %v627, %v628
  %v630 = vsel %vm508, %v500, 0.0
  %v631 = vadd.f32 %v629, %v630
  %v632 = vsel %vm508, %v503, 0.0
  %v633 = vadd.f32 %v631, %v632
  %v634 = vsel %vm508, %v506, 0.0
  %v635 = vadd.f32 %v633, %v634
  %v636 = vrot.slane %v635, 4
  %v637 = vadd.f32 %v635, %v636
  %v638 = vrot.slane %v637, 2
  %v639 = vadd.f32 %v637, %v638
  %v640 = vrot.slane %v639, 1
  %v641 = vadd.f32 %v639, %v640
  %v642 = vrcp.pop 512.0
  %v643 = vmul.f32 512.0, %v642
  %v644 = vsub.f32 1.0, %v643
  %v645 = vmul.f32 %v642, %v644
  %v646 = vadd.f32 %v642, %v645
  %vm647 = vweird.f32 %v642
  %v648 = vsel %vm647, %v642, %v646
  %v649 = vmul.f32 %v641, %v648
  %v650 = vsub.f32 %v317, %v649
  %v651 = vsub.f32 %v320, %v649
  %v652 = vsub.f32 %v323, %v649
  %v653 = vsub.f32 %v326, %v649
  %v654 = vsub.f32 %v329, %v649
  %v655 = vsub.f32 %v332, %v649
  %v656 = vsub.f32 %v335, %v649
  %v657 = vsub.f32 %v338, %v649
  %v658 = vsub.f32 %v341, %v649
  %v659 = vsub.f32 %v344, %v649
  %v660 = vsub.f32 %v347, %v649
  %v661 = vsub.f32 %v350, %v649
  %v662 = vsub.f32 %v353, %v649
  %v663 = vsub.f32 %v356, %v649
  %v664 = vsub.f32 %v359, %v649
  %v665 = vsub.f32 %v362, %v649
  %v666 = vsub.f32 %v365, %v649
  %v667 = vsub.f32 %v368, %v649
  %v668 = vsub.f32 %v371, %v649
  %v669 = vsub.f32 %v374, %v649
  %v670 = vsub.f32 %v377, %v649
  %v671 = vsub.f32 %v380, %v649
  %v672 = vsub.f32 %v383, %v649
  %v673 = vsub.f32 %v386, %v649
  %v674 = vsub.f32 %v389, %v649
  %v675 = vsub.f32 %v392, %v649
  %v676 = vsub.f32 %v395, %v649
  %v677 = vsub.f32 %v398, %v649
  %v678 = vsub.f32 %v401, %v649
  %v679 = vsub.f32 %v404, %v649
  %v680 = vsub.f32 %v407, %v649
  %v681 = vsub.f32 %v410, %v649
  %v682 = vsub.f32 %v413, %v649
  %v683 = vsub.f32 %v416, %v649
  %v684 = vsub.f32 %v419, %v649
  %v685 = vsub.f32 %v422, %v649
  %v686 = vsub.f32 %v425, %v649
  %v687 = vsub.f32 %v428, %v649
  %v688 = vsub.f32 %v431, %v649
  %v689 = vsub.f32 %v434, %v649
  %v690 = vsub.f32 %v437, %v649
  %v691 = vsub.f32 %v440, %v649
  %v692 = vsub.f32 %v443, %v649
  %v693 = vsub.f32 %v446, %v649
  %v694 = vsub.f32 %v449, %v649
  %v695 = vsub.f32 %v452, %v649
  %v696 = vsub.f32 %v455, %v649
  %v697 = vsub.f32 %v458, %v649
  %v698 = vsub.f32 %v461, %v649
  %v699 = vsub.f32 %v464, %v649
  %v700 = vsub.f32 %v467, %v649
  %v701 = vsub.f32 %v470, %v649
  %v702 = vsub.f32 %v473, %v649
  %v703 = vsub.f32 %v476, %v649
  %v704 = vsub.f32 %v479, %v649
  %v705 = vsub.f32 %v482, %v649
  %v706 = vsub.f32 %v485, %v649
  %v707 = vsub.f32 %v488, %v649
  %v708 = vsub.f32 %v491, %v649
  %v709 = vsub.f32 %v494, %v649
  %v710 = vsub.f32 %v497, %v649
  %v711 = vsub.f32 %v500, %v649
  %v712 = vsub.f32 %v503, %v649
  %v713 = vsub.f32 %v506, %v649
  %v714 = vmul.f32 %v650, %v650
  %v715 = vmul.f32 %v651, %v651
  %v716 = vmul.f32 %v652, %v652
  %v717 = vmul.f32 %v653, %v653
  %v718 = vmul.f32 %v654, %v654
  %v719 = vmul.f32 %v655, %v655
  %v720 = vmul.f32 %v656, %v656
  %v721 = vmul.f32 %v657, %v657
  %v722 = vmul.f32 %v658, %v658
  %v723 = vmul.f32 %v659, %v659
  %v724 = vmul.f32 %v660, %v660
  %v725 = vmul.f32 %v661, %v661
  %v726 = vmul.f32 %v662, %v662
  %v727 = vmul.f32 %v663, %v663
  %v728 = vmul.f32 %v664, %v664
  %v729 = vmul.f32 %v665, %v665
  %v730 = vmul.f32 %v666, %v666
  %v731 = vmul.f32 %v667, %v667
  %v732 = vmul.f32 %v668, %v668
  %v733 = vmul.f32 %v669, %v669
  %v734 = vmul.f32 %v670, %v670
  %v735 = vmul.f32 %v671, %v671
  %v736 = vmul.f32 %v672, %v672
  %v737 = vmul.f32 %v673, %v673
  %v738 = vmul.f32 %v674, %v674
  %v739 = vmul.f32 %v675, %v675
  %v740 = vmul.f32 %v676, %v676
  %v741 = vmul.f32 %v677, %v677
  %v742 = vmul.f32 %v678, %v678
  %v743 = vmul.f32 %v679, %v679
  %v744 = vmul.f32 %v680, %v680
  %v745 = vmul.f32 %v681, %v681
  %v746 = vmul.f32 %v682, %v682
  %v747 = vmul.f32 %v683, %v683
  %v748 = vmul.f32 %v684, %v684
  %v749 = vmul.f32 %v685, %v685
  %v750 = vmul.f32 %v686, %v686
  %v751 = vmul.f32 %v687, %v687
  %v752 = vmul.f32 %v688, %v688
  %v753 = vmul.f32 %v689, %v689
  %v754 = vmul.f32 %v690, %v690
  %v755 = vmul.f32 %v691, %v691
  %v756 = vmul.f32 %v692, %v692
  %v757 = vmul.f32 %v693, %v693
  %v758 = vmul.f32 %v694, %v694
  %v759 = vmul.f32 %v695, %v695
  %v760 = vmul.f32 %v696, %v696
  %v761 = vmul.f32 %v697, %v697
  %v762 = vmul.f32 %v698, %v698
  %v763 = vmul.f32 %v699, %v699
  %v764 = vmul.f32 %v700, %v700
  %v765 = vmul.f32 %v701, %v701
  %v766 = vmul.f32 %v702, %v702
  %v767 = vmul.f32 %v703, %v703
  %v768 = vmul.f32 %v704, %v704
  %v769 = vmul.f32 %v705, %v705
  %v770 = vmul.f32 %v706, %v706
  %v771 = vmul.f32 %v707, %v707
  %v772 = vmul.f32 %v708, %v708
  %v773 = vmul.f32 %v709, %v709
  %v774 = vmul.f32 %v710, %v710
  %v775 = vmul.f32 %v711, %v711
  %v776 = vmul.f32 %v712, %v712
  %v777 = vmul.f32 %v713, %v713
  %v778 = vsel %vm508, %v714, 0.0
  %v779 = vsel %vm508, %v715, 0.0
  %v780 = vadd.f32 %v778, %v779
  %v781 = vsel %vm508, %v716, 0.0
  %v782 = vadd.f32 %v780, %v781
  %v783 = vsel %vm508, %v717, 0.0
  %v784 = vadd.f32 %v782, %v783
  %v785 = vsel %vm508, %v718, 0.0
  %v786 = vadd.f32 %v784, %v785
  %v787 = vsel %vm508, %v719, 0.0
  %v788 = vadd.f32 %v786, %v787
  %v789 = vsel %vm508, %v720, 0.0
  %v790 = vadd.f32 %v788, %v789
  %v791 = vsel %vm508, %v721, 0.0
  %v792 = vadd.f32 %v790, %v791
  %v793 = vsel %vm508, %v722, 0.0
  %v794 = vadd.f32 %v792, %v793
  %v795 = vsel %vm508, %v723, 0.0
  %v796 = vadd.f32 %v794, %v795
  %v797 = vsel %vm508, %v724, 0.0
  %v798 = vadd.f32 %v796, %v797
  %v799 = vsel %vm508, %v725, 0.0
  %v800 = vadd.f32 %v798, %v799
  %v801 = vsel %vm508, %v726, 0.0
  %v802 = vadd.f32 %v800, %v801
  %v803 = vsel %vm508, %v727, 0.0
  %v804 = vadd.f32 %v802, %v803
  %v805 = vsel %vm508, %v728, 0.0
  %v806 = vadd.f32 %v804, %v805
  %v807 = vsel %vm508, %v729, 0.0
  %v808 = vadd.f32 %v806, %v807
  %v809 = vsel %vm508, %v730, 0.0
  %v810 = vadd.f32 %v808, %v809
  %v811 = vsel %vm508, %v731, 0.0
  %v812 = vadd.f32 %v810, %v811
  %v813 = vsel %vm508, %v732, 0.0
  %v814 = vadd.f32 %v812, %v813
  %v815 = vsel %vm508, %v733, 0.0
  %v816 = vadd.f32 %v814, %v815
  %v817 = vsel %vm508, %v734, 0.0
  %v818 = vadd.f32 %v816, %v817
  %v819 = vsel %vm508, %v735, 0.0
  %v820 = vadd.f32 %v818, %v819
  %v821 = vsel %vm508, %v736, 0.0
  %v822 = vadd.f32 %v820, %v821
  %v823 = vsel %vm508, %v737, 0.0
  %v824 = vadd.f32 %v822, %v823
  %v825 = vsel %vm508, %v738, 0.0
  %v826 = vadd.f32 %v824, %v825
  %v827 = vsel %vm508, %v739, 0.0
  %v828 = vadd.f32 %v826, %v827
  %v829 = vsel %vm508, %v740, 0.0
  %v830 = vadd.f32 %v828, %v829
  %v831 = vsel %vm508, %v741, 0.0
  %v832 = vadd.f32 %v830, %v831
  %v833 = vsel %vm508, %v742, 0.0
  %v834 = vadd.f32 %v832, %v833
  %v835 = vsel %vm508, %v743, 0.0
  %v836 = vadd.f32 %v834, %v835
  %v837 = vsel %vm508, %v744, 0.0
  %v838 = vadd.f32 %v836, %v837
  %v839 = vsel %vm508, %v745, 0.0
  %v840 = vadd.f32 %v838, %v839
  %v841 = vsel %vm508, %v746, 0.0
  %v842 = vadd.f32 %v840, %v841
  %v843 = vsel %vm508, %v747, 0.0
  %v844 = vadd.f32 %v842, %v843
  %v845 = vsel %vm508, %v748, 0.0
  %v846 = vadd.f32 %v844, %v845
  %v847 = vsel %vm508, %v749, 0.0
  %v848 = vadd.f32 %v846, %v847
  %v849 = vsel %vm508, %v750, 0.0
  %v850 = vadd.f32 %v848, %v849
  %v851 = vsel %vm508, %v751, 0.0
  %v852 = vadd.f32 %v850, %v851
  %v853 = vsel %vm508, %v752, 0.0
  %v854 = vadd.f32 %v852, %v853
  %v855 = vsel %vm508, %v753, 0.0
  %v856 = vadd.f32 %v854, %v855
  %v857 = vsel %vm508, %v754, 0.0
  %v858 = vadd.f32 %v856, %v857
  %v859 = vsel %vm508, %v755, 0.0
  %v860 = vadd.f32 %v858, %v859
  %v861 = vsel %vm508, %v756, 0.0
  %v862 = vadd.f32 %v860, %v861
  %v863 = vsel %vm508, %v757, 0.0
  %v864 = vadd.f32 %v862, %v863
  %v865 = vsel %vm508, %v758, 0.0
  %v866 = vadd.f32 %v864, %v865
  %v867 = vsel %vm508, %v759, 0.0
  %v868 = vadd.f32 %v866, %v867
  %v869 = vsel %vm508, %v760, 0.0
  %v870 = vadd.f32 %v868, %v869
  %v871 = vsel %vm508, %v761, 0.0
  %v872 = vadd.f32 %v870, %v871
  %v873 = vsel %vm508, %v762, 0.0
  %v874 = vadd.f32 %v872, %v873
  %v875 = vsel %vm508, %v763, 0.0
  %v876 = vadd.f32 %v874, %v875
  %v877 = vsel %vm508, %v764, 0.0
  %v878 = vadd.f32 %v876, %v877
  %v879 = vsel %vm508, %v765, 0.0
  %v880 = vadd.f32 %v878, %v879
  %v881 = vsel %vm508, %v766, 0.0
  %v882 = vadd.f32 %v880, %v881
  %v883 = vsel %vm508, %v767, 0.0
  %v884 = vadd.f32 %v882, %v883
  %v885 = vsel %vm508, %v768, 0.0
  %v886 = vadd.f32 %v884, %v885
  %v887 = vsel %vm508, %v769, 0.0
  %v888 = vadd.f32 %v886, %v887
  %v889 = vsel %vm508, %v770, 0.0
  %v890 = vadd.f32 %v888, %v889
  %v891 = vsel %vm508, %v771, 0.0
  %v892 = vadd.f32 %v890, %v891
  %v893 = vsel %vm508, %v772, 0.0
  %v894 = vadd.f32 %v892, %v893
  %v895 = vsel %vm508, %v773, 0.0
  %v896 = vadd.f32 %v894, %v895
  %v897 = vsel %vm508, %v774, 0.0
  %v898 = vadd.f32 %v896, %v897
  %v899 = vsel %vm508, %v775, 0.0
  %v900 = vadd.f32 %v898, %v899
  %v901 = vsel %vm508, %v776, 0.0
  %v902 = vadd.f32 %v900, %v901
  %v903 = vsel %vm508, %v777, 0.0
  %v904 = vadd.f32 %v902, %v903
  %v905 = vrot.slane %v904, 4
  %v906 = vadd.f32 %v904, %v905
  %v907 = vrot.slane %v906, 2
  %v908 = vadd.f32 %v906, %v907
  %v909 = vrot.slane %v908, 1
  %v910 = vadd.f32 %v908, %v909
  %v911 = vmul.f32 %v910, %v648
  %v912 = vld [vmem:[%s3] sm:$0x1]
  %v913 = vadd.f32 %v911, 1e-05
  %v914 = vrsqrt.pop %v913
  %v915 = vmul.f32 %v914, %v913
  %v916 = vmul.f32 %v915, %v914
  %v917 = vmul.f32 0.5, %v916
  %v918 = vsub.f32 1.5, %v917
  %v919 = vmul.f32 %v914, %v918
  %vm920 = vweird.f32 %v913
  %vm921 = vweird.f32 %v914
  %vm922 = vmor %vm920, %vm921
  %v923 = vsel %vm922, %v914, %v919
  %v924 = vmul.f32 %v912, %v923
  %v926 = vperm.slane %v924, 0
  %v928 = vmul.f32 %v650, %v926
  %v929 = vmul.f32 %v651, %v926
  %v930 = vmul.f32 %v652, %v926
  %v931 = vmul.f32 %v653, %v926
  %v932 = vmul.f32 %v654, %v926
  %v933 = vmul.f32 %v655, %v926
  %v934 = vmul.f32 %v656, %v926
  %v935 = vmul.f32 %v657, %v926
  %v936 = vmul.f32 %v658, %v926
  %v937 = vmul.f32 %v659, %v926
  %v938 = vmul.f32 %v660, %v926
  %v939 = vmul.f32 %v661, %v926
  %v940 = vmul.f32 %v662, %v926
  %v941 = vmul.f32 %v663, %v926
  %v942 = vmul.f32 %v664, %v926
  %v943 = vmul.f32 %v665, %v926
  %v944 = vmul.f32 %v666, %v926
  %v945 = vmul.f32 %v667, %v926
  %v946 = vmul.f32 %v668, %v926
  %v947 = vmul.f32 %v669, %v926
  %v948 = vmul.f32 %v670, %v926
  %v949 = vmul.f32 %v671, %v926
  %v950 = vmul.f32 %v672, %v926
  %v951 = vmul.f32 %v673, %v926
  %v952 = vmul.f32 %v674, %v926
  %v953 = vmul.f32 %v675, %v926
  %v954 = vmul.f32 %v676, %v926
  %v955 = vmul.f32 %v677, %v926
  %v956 = vmul.f32 %v678, %v926
  %v957 = vmul.f32 %v679, %v926
  %v958 = vmul.f32 %v680, %v926
  %v959 = vmul.f32 %v681, %v926
  %v960 = vmul.f32 %v682, %v926
  %v961 = vmul.f32 %v683, %v926
  %v962 = vmul.f32 %v684, %v926
  %v963 = vmul.f32 %v685, %v926
  %v964 = vmul.f32 %v686, %v926
  %v965 = vmul.f32 %v687, %v926
  %v966 = vmul.f32 %v688, %v926
  %v967 = vmul.f32 %v689, %v926
  %v968 = vmul.f32 %v690, %v926
  %v969 = vmul.f32 %v691, %v926
  %v970 = vmul.f32 %v692, %v926
  %v971 = vmul.f32 %v693, %v926
  %v972 = vmul.f32 %v694, %v926
  %v973 = vmul.f32 %v695, %v926
  %v974 = vmul.f32 %v696, %v926
  %v975 = vmul.f32 %v697, %v926
  %v976 = vmul.f32 %v698, %v926
  %v977 = vmul.f32 %v699, %v926
  %v978 = vmul.f32 %v700, %v926
  %v979 = vmul.f32 %v701, %v926
  %v980 = vmul.f32 %v702, %v926
  %v981 = vmul.f32 %v703, %v926
  %v982 = vmul.f32 %v704, %v926
  %v983 = vmul.f32 %v705, %v926
  %v984 = vmul.f32 %v706, %v926
  %v985 = vmul.f32 %v707, %v926
  %v986 = vmul.f32 %v708, %v926
  %v987 = vmul.f32 %v709, %v926
  %v988 = vmul.f32 %v710, %v926
  %v989 = vmul.f32 %v711, %v926
  %v990 = vmul.f32 %v712, %v926
  %v991 = vmul.f32 %v713, %v926
  %v992 = vld [vmem:[%s4] sm:$0x1]
  %v994 = vperm.slane %v992, 0
  %v996 = vadd.f32 %v928, %v994
  %v997 = vadd.f32 %v929, %v994
  %v998 = vadd.f32 %v930, %v994
  %v999 = vadd.f32 %v931, %v994
  %v1000 = vadd.f32 %v932, %v994
  %v1001 = vadd.f32 %v933, %v994
  %v1002 = vadd.f32 %v934, %v994
  %v1003 = vadd.f32 %v935, %v994
  %v1004 = vadd.f32 %v936, %v994
  %v1005 = vadd.f32 %v937, %v994
  %v1006 = vadd.f32 %v938, %v994
  %v1007 = vadd.f32 %v939, %v994
  %v1008 = vadd.f32 %v940, %v994
  %v1009 = vadd.f32 %v941, %v994
  %v1010 = vadd.f32 %v942, %v994
  %v1011 = vadd.f32 %v943, %v994
  %v1012 = vadd.f32 %v944, %v994
  %v1013 = vadd.f32 %v945, %v994
  %v1014 = vadd.f32 %v946, %v994
  %v1015 = vadd.f32 %v947, %v994
  %v1016 = vadd.f32 %v948, %v994
  %v1017 = vadd.f32 %v949, %v994
  %v1018 = vadd.f32 %v950, %v994
  %v1019 = vadd.f32 %v951, %v994
  %v1020 = vadd.f32 %v952, %v994
  %v1021 = vadd.f32 %v953, %v994
  %v1022 = vadd.f32 %v954, %v994
  %v1023 = vadd.f32 %v955, %v994
  %v1024 = vadd.f32 %v956, %v994
  %v1025 = vadd.f32 %v957, %v994
  %v1026 = vadd.f32 %v958, %v994
  %v1027 = vadd.f32 %v959, %v994
  %v1028 = vadd.f32 %v960, %v994
  %v1029 = vadd.f32 %v961, %v994
  %v1030 = vadd.f32 %v962, %v994
  %v1031 = vadd.f32 %v963, %v994
  %v1032 = vadd.f32 %v964, %v994
  %v1033 = vadd.f32 %v965, %v994
  %v1034 = vadd.f32 %v966, %v994
  %v1035 = vadd.f32 %v967, %v994
  %v1036 = vadd.f32 %v968, %v994
  %v1037 = vadd.f32 %v969, %v994
  %v1038 = vadd.f32 %v970, %v994
  %v1039 = vadd.f32 %v971, %v994
  %v1040 = vadd.f32 %v972, %v994
  %v1041 = vadd.f32 %v973, %v994
  %v1042 = vadd.f32 %v974, %v994
  %v1043 = vadd.f32 %v975, %v994
  %v1044 = vadd.f32 %v976, %v994
  %v1045 = vadd.f32 %v977, %v994
  %v1046 = vadd.f32 %v978, %v994
  %v1047 = vadd.f32 %v979, %v994
  %v1048 = vadd.f32 %v980, %v994
  %v1049 = vadd.f32 %v981, %v994
  %v1050 = vadd.f32 %v982, %v994
  %v1051 = vadd.f32 %v983, %v994
  %v1052 = vadd.f32 %v984, %v994
  %v1053 = vadd.f32 %v985, %v994
  %v1054 = vadd.f32 %v986, %v994
  %v1055 = vadd.f32 %v987, %v994
  %v1056 = vadd.f32 %v988, %v994
  %v1057 = vadd.f32 %v989, %v994
  %v1058 = vadd.f32 %v990, %v994
  %v1059 = vadd.f32 %v991, %v994
  %v1060 = vmax.f32 %v996, 0.0
  %v1061 = vmax.f32 %v997, 0.0
  %v1062 = vmax.f32 %v998, 0.0
  %v1063 = vmax.f32 %v999, 0.0
  %v1064 = vmax.f32 %v1000, 0.0
  %v1065 = vmax.f32 %v1001, 0.0
  %v1066 = vmax.f32 %v1002, 0.0
  %v1067 = vmax.f32 %v1003, 0.0
  %v1068 = vmax.f32 %v1004, 0.0
  %v1069 = vmax.f32 %v1005, 0.0
  %v1070 = vmax.f32 %v1006, 0.0
  %v1071 = vmax.f32 %v1007, 0.0
  %v1072 = vmax.f32 %v1008, 0.0
  %v1073 = vmax.f32 %v1009, 0.0
  %v1074 = vmax.f32 %v1010, 0.0
  %v1075 = vmax.f32 %v1011, 0.0
  %v1076 = vmax.f32 %v1012, 0.0
  %v1077 = vmax.f32 %v1013, 0.0
  %v1078 = vmax.f32 %v1014, 0.0
  %v1079 = vmax.f32 %v1015, 0.0
  %v1080 = vmax.f32 %v1016, 0.0
  %v1081 = vmax.f32 %v1017, 0.0
  %v1082 = vmax.f32 %v1018, 0.0
  %v1083 = vmax.f32 %v1019, 0.0
  %v1084 = vmax.f32 %v1020, 0.0
  %v1085 = vmax.f32 %v1021, 0.0
  %v1086 = vmax.f32 %v1022, 0.0
  %v1087 = vmax.f32 %v1023, 0.0
  %v1088 = vmax.f32 %v1024, 0.0
  %v1089 = vmax.f32 %v1025, 0.0
  %v1090 = vmax.f32 %v1026, 0.0
  %v1091 = vmax.f32 %v1027, 0.0
  %v1092 = vmax.f32 %v1028, 0.0
  %v1093 = vmax.f32 %v1029, 0.0
  %v1094 = vmax.f32 %v1030, 0.0
  %v1095 = vmax.f32 %v1031, 0.0
  %v1096 = vmax.f32 %v1032, 0.0
  %v1097 = vmax.f32 %v1033, 0.0
  %v1098 = vmax.f32 %v1034, 0.0
  %v1099 = vmax.f32 %v1035, 0.0
  %v1100 = vmax.f32 %v1036, 0.0
  %v1101 = vmax.f32 %v1037, 0.0
  %v1102 = vmax.f32 %v1038, 0.0
  %v1103 = vmax.f32 %v1039, 0.0
  %v1104 = vmax.f32 %v1040, 0.0
  %v1105 = vmax.f32 %v1041, 0.0
  %v1106 = vmax.f32 %v1042, 0.0
  %v1107 = vmax.f32 %v1043, 0.0
  %v1108 = vmax.f32 %v1044, 0.0
  %v1109 = vmax.f32 %v1045, 0.0
  %v1110 = vmax.f32 %v1046, 0.0
  %v1111 = vmax.f32 %v1047, 0.0
  %v1112 = vmax.f32 %v1048, 0.0
  %v1113 = vmax.f32 %v1049, 0.0
  %v1114 = vmax.f32 %v1050, 0.0
  %v1115 = vmax.f32 %v1051, 0.0
  %v1116 = vmax.f32 %v1052, 0.0
  %v1117 = vmax.f32 %v1053, 0.0
  %v1118 = vmax.f32 %v1054, 0.0
  %v1119 = vmax.f32 %v1055, 0.0
  %v1120 = vmax.f32 %v1056, 0.0
  %v1121 = vmax.f32 %v1057, 0.0
  %v1122 = vmax.f32 %v1058, 0.0
  %v1123 = vmax.f32 %v1059, 0.0
  %v1188 = vrot.slane %v1060, 2
  %v1189 = vrot.slane %v1060, 4
  %v1190 = vrot.slane %v1060, 6
  %v1191 = vrot.slane %v1061, 2
  %v1192 = vrot.slane %v1061, 4
  %v1193 = vrot.slane %v1061, 6
  %v1194 = vrot.slane %v1062, 2
  %v1195 = vrot.slane %v1062, 4
  %v1196 = vrot.slane %v1062, 6
  %v1197 = vrot.slane %v1063, 2
  %v1198 = vrot.slane %v1063, 4
  %v1199 = vrot.slane %v1063, 6
  %v1200 = vrot.slane %v1064, 2
  %v1201 = vrot.slane %v1064, 4
  %v1202 = vrot.slane %v1064, 6
  %v1203 = vrot.slane %v1065, 2
  %v1204 = vrot.slane %v1065, 4
  %v1205 = vrot.slane %v1065, 6
  %v1206 = vrot.slane %v1066, 2
  %v1207 = vrot.slane %v1066, 4
  %v1208 = vrot.slane %v1066, 6
  %v1209 = vrot.slane %v1067, 2
  %v1210 = vrot.slane %v1067, 4
  %v1211 = vrot.slane %v1067, 6
  %v1212 = vrot.slane %v1068, 2
  %v1213 = vrot.slane %v1068, 4
  %v1214 = vrot.slane %v1068, 6
  %v1215 = vrot.slane %v1069, 2
  %v1216 = vrot.slane %v1069, 4
  %v1217 = vrot.slane %v1069, 6
  %v1218 = vrot.slane %v1070, 2
  %v1219 = vrot.slane %v1070, 4
  %v1220 = vrot.slane %v1070, 6
  %v1221 = vrot.slane %v1071, 2
  %v1222 = vrot.slane %v1071, 4
  %v1223 = vrot.slane %v1071, 6
  %v1224 = vrot.slane %v1072, 2
  %v1225 = vrot.slane %v1072, 4
  %v1226 = vrot.slane %v1072, 6
  %v1227 = vrot.slane %v1073, 2
  %v1228 = vrot.slane %v1073, 4
  %v1229 = vrot.slane %v1073, 6
  %v1230 = vrot.slane %v1074, 2
  %v1231 = vrot.slane %v1074, 4
  %v1232 = vrot.slane %v1074, 6
  %v1233 = vrot.slane %v1075, 2
  %v1234 = vrot.slane %v1075, 4
  %v1235 = vrot.slane %v1075, 6
  %v1236 = vrot.slane %v1076, 2
  %v1237 = vrot.slane %v1076, 4
  %v1238 = vrot.slane %v1076, 6
  %v1239 = vrot.slane %v1077, 2
  %v1240 = vrot.slane %v1077, 4
  %v1241 = vrot.slane %v1077, 6
  %v1242 = vrot.slane %v1078, 2
  %v1243 = vrot.slane %v1078, 4
  %v1244 = vrot.slane %v1078, 6
  %v1245 = vrot.slane %v1079, 2
  %v1246 = vrot.slane %v1079, 4
  %v1247 = vrot.slane %v1079, 6
  %v1248 = vrot.slane %v1080, 2
  %v1249 = vrot.slane %v1080, 4
  %v1250 = vrot.slane %v1080, 6
  %v1251 = vrot.slane %v1081, 2
  %v1252 = vrot.slane %v1081, 4
  %v1253 = vrot.slane %v1081, 6
  %v1254 = vrot.slane %v1082, 2
  %v1255 = vrot.slane %v1082, 4
  %v1256 = vrot.slane %v1082, 6
  %v1257 = vrot.slane %v1083, 2
  %v1258 = vrot.slane %v1083, 4
  %v1259 = vrot.slane %v1083, 6
  %v1260 = vrot.slane %v1084, 2
  %v1261 = vrot.slane %v1084, 4
  %v1262 = vrot.slane %v1084, 6
  %v1263 = vrot.slane %v1085, 2
  %v1264 = vrot.slane %v1085, 4
  %v1265 = vrot.slane %v1085, 6
  %v1266 = vrot.slane %v1086, 2
  %v1267 = vrot.slane %v1086, 4
  %v1268 = vrot.slane %v1086, 6
  %v1269 = vrot.slane %v1087, 2
  %v1270 = vrot.slane %v1087, 4
  %v1271 = vrot.slane %v1087, 6
  %v1272 = vrot.slane %v1088, 2
  %v1273 = vrot.slane %v1088, 4
  %v1274 = vrot.slane %v1088, 6
  %v1275 = vrot.slane %v1089, 2
  %v1276 = vrot.slane %v1089, 4
  %v1277 = vrot.slane %v1089, 6
  %v1278 = vrot.slane %v1090, 2
  %v1279 = vrot.slane %v1090, 4
  %v1280 = vrot.slane %v1090, 6
  %v1281 = vrot.slane %v1091, 2
  %v1282 = vrot.slane %v1091, 4
  %v1283 = vrot.slane %v1091, 6
  %v1284 = vrot.slane %v1092, 2
  %v1285 = vrot.slane %v1092, 4
  %v1286 = vrot.slane %v1092, 6
  %v1287 = vrot.slane %v1093, 2
  %v1288 = vrot.slane %v1093, 4
  %v1289 = vrot.slane %v1093, 6
  %v1290 = vrot.slane %v1094, 2
  %v1291 = vrot.slane %v1094, 4
  %v1292 = vrot.slane %v1094, 6
  %v1293 = vrot.slane %v1095, 2
  %v1294 = vrot.slane %v1095, 4
  %v1295 = vrot.slane %v1095, 6
  %v1296 = vrot.slane %v1096, 2
  %v1297 = vrot.slane %v1096, 4
  %v1298 = vrot.slane %v1096, 6
  %v1299 = vrot.slane %v1097, 2
  %v1300 = vrot.slane %v1097, 4
  %v1301 = vrot.slane %v1097, 6
  %v1302 = vrot.slane %v1098, 2
  %v1303 = vrot.slane %v1098, 4
  %v1304 = vrot.slane %v1098, 6
  %v1305 = vrot.slane %v1099, 2
  %v1306 = vrot.slane %v1099, 4
  %v1307 = vrot.slane %v1099, 6
  %v1308 = vrot.slane %v1100, 2
  %v1309 = vrot.slane %v1100, 4
  %v1310 = vrot.slane %v1100, 6
  %v1311 = vrot.slane %v1101, 2
  %v1312 = vrot.slane %v1101, 4
  %v1313 = vrot.slane %v1101, 6
  %v1314 = vrot.slane %v1102, 2
  %v1315 = vrot.slane %v1102, 4
  %v1316 = vrot.slane %v1102, 6
  %v1317 = vrot.slane %v1103, 2
  %v1318 = vrot.slane %v1103, 4
  %v1319 = vrot.slane %v1103, 6
  %v1320 = vrot.slane %v1104, 2
  %v1321 = vrot.slane %v1104, 4
  %v1322 = vrot.slane %v1104, 6
  %v1323 = vrot.slane %v1105, 2
  %v1324 = vrot.slane %v1105, 4
  %v1325 = vrot.slane %v1105, 6
  %v1326 = vrot.slane %v1106, 2
  %v1327 = vrot.slane %v1106, 4
  %v1328 = vrot.slane %v1106, 6
  %v1329 = vrot.slane %v1107, 2
  %v1330 = vrot.slane %v1107, 4
  %v1331 = vrot.slane %v1107, 6
  %v1332 = vrot.slane %v1108, 2
  %v1333 = vrot.slane %v1108, 4
  %v1334 = vrot.slane %v1108, 6
  %v1335 = vrot.slane %v1109, 2
  %v1336 = vrot.slane %v1109, 4
  %v1337 = vrot.slane %v1109, 6
  %v1338 = vrot.slane %v1110, 2
  %v1339 = vrot.slane %v1110, 4
  %v1340 = vrot.slane %v1110, 6
  %v1341 = vrot.slane %v1111, 2
  %v1342 = vrot.slane %v1111, 4
  %v1343 = vrot.slane %v1111, 6
  %v1344 = vrot.slane %v1112, 2
  %v1345 = vrot.slane %v1112, 4
  %v1346 = vrot.slane %v1112, 6
  %v1347 = vrot.slane %v1113, 2
  %v1348 = vrot.slane %v1113, 4
  %v1349 = vrot.slane %v1113, 6
  %v1350 = vrot.slane %v1114, 2
  %v1351 = vrot.slane %v1114, 4
  %v1352 = vrot.slane %v1114, 6
  %v1353 = vrot.slane %v1115, 2
  %v1354 = vrot.slane %v1115, 4
  %v1355 = vrot.slane %v1115, 6
  %v1356 = vrot.slane %v1116, 2
  %v1357 = vrot.slane %v1116, 4
  %v1358 = vrot.slane %v1116, 6
  %v1359 = vrot.slane %v1117, 2
  %v1360 = vrot.slane %v1117, 4
  %v1361 = vrot.slane %v1117, 6
  %v1362 = vrot.slane %v1118, 2
  %v1363 = vrot.slane %v1118, 4
  %v1364 = vrot.slane %v1118, 6
  %v1365 = vrot.slane %v1119, 2
  %v1366 = vrot.slane %v1119, 4
  %v1367 = vrot.slane %v1119, 6
  %v1368 = vrot.slane %v1120, 2
  %v1369 = vrot.slane %v1120, 4
  %v1370 = vrot.slane %v1120, 6
  %v1371 = vrot.slane %v1121, 2
  %v1372 = vrot.slane %v1121, 4
  %v1373 = vrot.slane %v1121, 6
  %v1374 = vrot.slane %v1122, 2
  %v1375 = vrot.slane %v1122, 4
  %v1376 = vrot.slane %v1122, 6
  %v1377 = vrot.slane %v1123, 2
  %v1378 = vrot.slane %v1123, 4
  %v1379 = vrot.slane %v1123, 6
  %vm1572 = vcmask 238592
  %v1573 = vsel %vm1572, %v1060, -inf
  %v1574 = vrot.slane %v1573, 4
  %v1575 = vmax.f32 %v1573, %v1574
  %v1576 = vrot.slane %v1575, 2
  %v1577 = vmax.f32 %v1575, %v1576
  %v1578 = vrot.slane %v1577, 1
  %v1579 = vmax.f32 %v1577, %v1578
  %v1580 = vsel %vm1572, %v1188, -inf
  %v1581 = vrot.slane %v1580, 4
  %v1582 = vmax.f32 %v1580, %v1581
  %v1583 = vrot.slane %v1582, 2
  %v1584 = vmax.f32 %v1582, %v1583
  %v1585 = vrot.slane %v1584, 1
  %v1586 = vmax.f32 %v1584, %v1585
  %v1587 = vsel %vm1572, %v1189, -inf
  %v1588 = vrot.slane %v1587, 4
  %v1589 = vmax.f32 %v1587, %v1588
  %v1590 = vrot.slane %v1589, 2
  %v1591 = vmax.f32 %v1589, %v1590
  %v1592 = vrot.slane %v1591, 1
  %v1593 = vmax.f32 %v1591, %v1592
  %v1594 = vsel %vm1572, %v1190, -inf
  %v1595 = vrot.slane %v1594, 4
  %v1596 = vmax.f32 %v1594, %v1595
  %v1597 = vrot.slane %v1596, 2
  %v1598 = vmax.f32 %v1596, %v1597
  %v1599 = vrot.slane %v1598, 1
  %v1600 = vmax.f32 %v1598, %v1599
  %v1601 = vsel %vm1572, %v1061, -inf
  %v1602 = vrot.slane %v1601, 4
  %v1603 = vmax.f32 %v1601, %v1602
  %v1604 = vrot.slane %v1603, 2
  %v1605 = vmax.f32 %v1603, %v1604
  %v1606 = vrot.slane %v1605, 1
  %v1607 = vmax.f32 %v1605, %v1606
  %v1608 = vsel %vm1572, %v1191, -inf
  %v1609 = vrot.slane %v1608, 4
  %v1610 = vmax.f32 %v1608, %v1609
  %v1611 = vrot.slane %v1610, 2
  %v1612 = vmax.f32 %v1610, %v1611
  %v1613 = vrot.slane %v1612, 1
  %v1614 = vmax.f32 %v1612, %v1613
  %v1615 = vsel %vm1572, %v1192, -inf
  %v1616 = vrot.slane %v1615, 4
  %v1617 = vmax.f32 %v1615, %v1616
  %v1618 = vrot.slane %v1617, 2
  %v1619 = vmax.f32 %v1617, %v1618
  %v1620 = vrot.slane %v1619, 1
  %v1621 = vmax.f32 %v1619, %v1620
  %v1622 = vsel %vm1572, %v1193, -inf
  %v1623 = vrot.slane %v1622, 4
  %v1624 = vmax.f32 %v1622, %v1623
  %v1625 = vrot.slane %v1624, 2
  %v1626 = vmax.f32 %v1624, %v1625
  %v1627 = vrot.slane %v1626, 1
  %v1628 = vmax.f32 %v1626, %v1627
  %v1629 = vsel %vm1572, %v1062, -inf
  %v1630 = vrot.slane %v1629, 4
  %v1631 = vmax.f32 %v1629, %v1630
  %v1632 = vrot.slane %v1631, 2
  %v1633 = vmax.f32 %v1631, %v1632
  %v1634 = vrot.slane %v1633, 1
  %v1635 = vmax.f32 %v1633, %v1634
  %v1636 = vsel %vm1572, %v1194, -inf
  %v1637 = vrot.slane %v1636, 4
  %v1638 = vmax.f32 %v1636, %v1637
  %v1639 = vrot.slane %v1638, 2
  %v1640 = vmax.f32 %v1638, %v1639
  %v1641 = vrot.slane %v1640, 1
  %v1642 = vmax.f32 %v1640, %v1641
  %v1643 = vsel %vm1572, %v1195, -inf
  %v1644 = vrot.slane %v1643, 4
  %v1645 = vmax.f32 %v1643, %v1644
  %v1646 = vrot.slane %v1645, 2
  %v1647 = vmax.f32 %v1645, %v1646
  %v1648 = vrot.slane %v1647, 1
  %v1649 = vmax.f32 %v1647, %v1648
  %v1650 = vsel %vm1572, %v1196, -inf
  %v1651 = vrot.slane %v1650, 4
  %v1652 = vmax.f32 %v1650, %v1651
  %v1653 = vrot.slane %v1652, 2
  %v1654 = vmax.f32 %v1652, %v1653
  %v1655 = vrot.slane %v1654, 1
  %v1656 = vmax.f32 %v1654, %v1655
  %v1657 = vsel %vm1572, %v1063, -inf
  %v1658 = vrot.slane %v1657, 4
  %v1659 = vmax.f32 %v1657, %v1658
  %v1660 = vrot.slane %v1659, 2
  %v1661 = vmax.f32 %v1659, %v1660
  %v1662 = vrot.slane %v1661, 1
  %v1663 = vmax.f32 %v1661, %v1662
  %v1664 = vsel %vm1572, %v1197, -inf
  %v1665 = vrot.slane %v1664, 4
  %v1666 = vmax.f32 %v1664, %v1665
  %v1667 = vrot.slane %v1666, 2
  %v1668 = vmax.f32 %v1666, %v1667
  %v1669 = vrot.slane %v1668, 1
  %v1670 = vmax.f32 %v1668, %v1669
  %v1671 = vsel %vm1572, %v1198, -inf
  %v1672 = vrot.slane %v1671, 4
  %v1673 = vmax.f32 %v1671, %v1672
  %v1674 = vrot.slane %v1673, 2
  %v1675 = vmax.f32 %v1673, %v1674
  %v1676 = vrot.slane %v1675, 1
  %v1677 = vmax.f32 %v1675, %v1676
  %v1678 = vsel %vm1572, %v1199, -inf
  %v1679 = vrot.slane %v1678, 4
  %v1680 = vmax.f32 %v1678, %v1679
  %v1681 = vrot.slane %v1680, 2
  %v1682 = vmax.f32 %v1680, %v1681
  %v1683 = vrot.slane %v1682, 1
  %v1684 = vmax.f32 %v1682, %v1683
  %v1685 = vsel %vm1572, %v1064, -inf
  %v1686 = vrot.slane %v1685, 4
  %v1687 = vmax.f32 %v1685, %v1686
  %v1688 = vrot.slane %v1687, 2
  %v1689 = vmax.f32 %v1687, %v1688
  %v1690 = vrot.slane %v1689, 1
  %v1691 = vmax.f32 %v1689, %v1690
  %v1692 = vsel %vm1572, %v1200, -inf
  %v1693 = vrot.slane %v1692, 4
  %v1694 = vmax.f32 %v1692, %v1693
  %v1695 = vrot.slane %v1694, 2
  %v1696 = vmax.f32 %v1694, %v1695
  %v1697 = vrot.slane %v1696, 1
  %v1698 = vmax.f32 %v1696, %v1697
  %v1699 = vsel %vm1572, %v1201, -inf
  %v1700 = vrot.slane %v1699, 4
  %v1701 = vmax.f32 %v1699, %v1700
  %v1702 = vrot.slane %v1701, 2
  %v1703 = vmax.f32 %v1701, %v1702
  %v1704 = vrot.slane %v1703, 1
  %v1705 = vmax.f32 %v1703, %v1704
  %v1706 = vsel %vm1572, %v1202, -inf
  %v1707 = vrot.slane %v1706, 4
  %v1708 = vmax.f32 %v1706, %v1707
  %v1709 = vrot.slane %v1708, 2
  %v1710 = vmax.f32 %v1708, %v1709
  %v1711 = vrot.slane %v1710, 1
  %v1712 = vmax.f32 %v1710, %v1711
  %v1713 = vsel %vm1572, %v1065, -inf
  %v1714 = vrot.slane %v1713, 4
  %v1715 = vmax.f32 %v1713, %v1714
  %v1716 = vrot.slane %v1715, 2
  %v1717 = vmax.f32 %v1715, %v1716
  %v1718 = vrot.slane %v1717, 1
  %v1719 = vmax.f32 %v1717, %v1718
  %v1720 = vsel %vm1572, %v1203, -inf
  %v1721 = vrot.slane %v1720, 4
  %v1722 = vmax.f32 %v1720, %v1721
  %v1723 = vrot.slane %v1722, 2
  %v1724 = vmax.f32 %v1722, %v1723
  %v1725 = vrot.slane %v1724, 1
  %v1726 = vmax.f32 %v1724, %v1725
  %v1727 = vsel %vm1572, %v1204, -inf
  %v1728 = vrot.slane %v1727, 4
  %v1729 = vmax.f32 %v1727, %v1728
  %v1730 = vrot.slane %v1729, 2
  %v1731 = vmax.f32 %v1729, %v1730
  %v1732 = vrot.slane %v1731, 1
  %v1733 = vmax.f32 %v1731, %v1732
  %v1734 = vsel %vm1572, %v1205, -inf
  %v1735 = vrot.slane %v1734, 4
  %v1736 = vmax.f32 %v1734, %v1735
  %v1737 = vrot.slane %v1736, 2
  %v1738 = vmax.f32 %v1736, %v1737
  %v1739 = vrot.slane %v1738, 1
  %v1740 = vmax.f32 %v1738, %v1739
  %v1741 = vsel %vm1572, %v1066, -inf
  %v1742 = vrot.slane %v1741, 4
  %v1743 = vmax.f32 %v1741, %v1742
  %v1744 = vrot.slane %v1743, 2
  %v1745 = vmax.f32 %v1743, %v1744
  %v1746 = vrot.slane %v1745, 1
  %v1747 = vmax.f32 %v1745, %v1746
  %v1748 = vsel %vm1572, %v1206, -inf
  %v1749 = vrot.slane %v1748, 4
  %v1750 = vmax.f32 %v1748, %v1749
  %v1751 = vrot.slane %v1750, 2
  %v1752 = vmax.f32 %v1750, %v1751
  %v1753 = vrot.slane %v1752, 1
  %v1754 = vmax.f32 %v1752, %v1753
  %v1755 = vsel %vm1572, %v1207, -inf
  %v1756 = vrot.slane %v1755, 4
  %v1757 = vmax.f32 %v1755, %v1756
  %v1758 = vrot.slane %v1757, 2
  %v1759 = vmax.f32 %v1757, %v1758
  %v1760 = vrot.slane %v1759, 1
  %v1761 = vmax.f32 %v1759, %v1760
  %v1762 = vsel %vm1572, %v1208, -inf
  %v1763 = vrot.slane %v1762, 4
  %v1764 = vmax.f32 %v1762, %v1763
  %v1765 = vrot.slane %v1764, 2
  %v1766 = vmax.f32 %v1764, %v1765
  %v1767 = vrot.slane %v1766, 1
  %v1768 = vmax.f32 %v1766, %v1767
  %v1769 = vsel %vm1572, %v1067, -inf
  %v1770 = vrot.slane %v1769, 4
  %v1771 = vmax.f32 %v1769, %v1770
  %v1772 = vrot.slane %v1771, 2
  %v1773 = vmax.f32 %v1771, %v1772
  %v1774 = vrot.slane %v1773, 1
  %v1775 = vmax.f32 %v1773, %v1774
  %v1776 = vsel %vm1572, %v1209, -inf
  %v1777 = vrot.slane %v1776, 4
  %v1778 = vmax.f32 %v1776, %v1777
  %v1779 = vrot.slane %v1778, 2
  %v1780 = vmax.f32 %v1778, %v1779
  %v1781 = vrot.slane %v1780, 1
  %v1782 = vmax.f32 %v1780, %v1781
  %v1783 = vsel %vm1572, %v1210, -inf
  %v1784 = vrot.slane %v1783, 4
  %v1785 = vmax.f32 %v1783, %v1784
  %v1786 = vrot.slane %v1785, 2
  %v1787 = vmax.f32 %v1785, %v1786
  %v1788 = vrot.slane %v1787, 1
  %v1789 = vmax.f32 %v1787, %v1788
  %v1790 = vsel %vm1572, %v1211, -inf
  %v1791 = vrot.slane %v1790, 4
  %v1792 = vmax.f32 %v1790, %v1791
  %v1793 = vrot.slane %v1792, 2
  %v1794 = vmax.f32 %v1792, %v1793
  %v1795 = vrot.slane %v1794, 1
  %v1796 = vmax.f32 %v1794, %v1795
  %v1797 = vsel %vm1572, %v1068, -inf
  %v1798 = vrot.slane %v1797, 4
  %v1799 = vmax.f32 %v1797, %v1798
  %v1800 = vrot.slane %v1799, 2
  %v1801 = vmax.f32 %v1799, %v1800
  %v1802 = vrot.slane %v1801, 1
  %v1803 = vmax.f32 %v1801, %v1802
  %v1804 = vsel %vm1572, %v1212, -inf
  %v1805 = vrot.slane %v1804, 4
  %v1806 = vmax.f32 %v1804, %v1805
  %v1807 = vrot.slane %v1806, 2
  %v1808 = vmax.f32 %v1806, %v1807
  %v1809 = vrot.slane %v1808, 1
  %v1810 = vmax.f32 %v1808, %v1809
  %v1811 = vsel %vm1572, %v1213, -inf
  %v1812 = vrot.slane %v1811, 4
  %v1813 = vmax.f32 %v1811, %v1812
  %v1814 = vrot.slane %v1813, 2
  %v1815 = vmax.f32 %v1813, %v1814
  %v1816 = vrot.slane %v1815, 1
  %v1817 = vmax.f32 %v1815, %v1816
  %v1818 = vsel %vm1572, %v1214, -inf
  %v1819 = vrot.slane %v1818, 4
  %v1820 = vmax.f32 %v1818, %v1819
  %v1821 = vrot.slane %v1820, 2
  %v1822 = vmax.f32 %v1820, %v1821
  %v1823 = vrot.slane %v1822, 1
  %v1824 = vmax.f32 %v1822, %v1823
  %v1825 = vsel %vm1572, %v1069, -inf
  %v1826 = vrot.slane %v1825, 4
  %v1827 = vmax.f32 %v1825, %v1826
  %v1828 = vrot.slane %v1827, 2
  %v1829 = vmax.f32 %v1827, %v1828
  %v1830 = vrot.slane %v1829, 1
  %v1831 = vmax.f32 %v1829, %v1830
  %v1832 = vsel %vm1572, %v1215, -inf
  %v1833 = vrot.slane %v1832, 4
  %v1834 = vmax.f32 %v1832, %v1833
  %v1835 = vrot.slane %v1834, 2
  %v1836 = vmax.f32 %v1834, %v1835
  %v1837 = vrot.slane %v1836, 1
  %v1838 = vmax.f32 %v1836, %v1837
  %v1839 = vsel %vm1572, %v1216, -inf
  %v1840 = vrot.slane %v1839, 4
  %v1841 = vmax.f32 %v1839, %v1840
  %v1842 = vrot.slane %v1841, 2
  %v1843 = vmax.f32 %v1841, %v1842
  %v1844 = vrot.slane %v1843, 1
  %v1845 = vmax.f32 %v1843, %v1844
  %v1846 = vsel %vm1572, %v1217, -inf
  %v1847 = vrot.slane %v1846, 4
  %v1848 = vmax.f32 %v1846, %v1847
  %v1849 = vrot.slane %v1848, 2
  %v1850 = vmax.f32 %v1848, %v1849
  %v1851 = vrot.slane %v1850, 1
  %v1852 = vmax.f32 %v1850, %v1851
  %v1853 = vsel %vm1572, %v1070, -inf
  %v1854 = vrot.slane %v1853, 4
  %v1855 = vmax.f32 %v1853, %v1854
  %v1856 = vrot.slane %v1855, 2
  %v1857 = vmax.f32 %v1855, %v1856
  %v1858 = vrot.slane %v1857, 1
  %v1859 = vmax.f32 %v1857, %v1858
  %v1860 = vsel %vm1572, %v1218, -inf
  %v1861 = vrot.slane %v1860, 4
  %v1862 = vmax.f32 %v1860, %v1861
  %v1863 = vrot.slane %v1862, 2
  %v1864 = vmax.f32 %v1862, %v1863
  %v1865 = vrot.slane %v1864, 1
  %v1866 = vmax.f32 %v1864, %v1865
  %v1867 = vsel %vm1572, %v1219, -inf
  %v1868 = vrot.slane %v1867, 4
  %v1869 = vmax.f32 %v1867, %v1868
  %v1870 = vrot.slane %v1869, 2
  %v1871 = vmax.f32 %v1869, %v1870
  %v1872 = vrot.slane %v1871, 1
  %v1873 = vmax.f32 %v1871, %v1872
  %v1874 = vsel %vm1572, %v1220, -inf
  %v1875 = vrot.slane %v1874, 4
  %v1876 = vmax.f32 %v1874, %v1875
  %v1877 = vrot.slane %v1876, 2
  %v1878 = vmax.f32 %v1876, %v1877
  %v1879 = vrot.slane %v1878, 1
  %v1880 = vmax.f32 %v1878, %v1879
  %v1881 = vsel %vm1572, %v1071, -inf
  %v1882 = vrot.slane %v1881, 4
  %v1883 = vmax.f32 %v1881, %v1882
  %v1884 = vrot.slane %v1883, 2
  %v1885 = vmax.f32 %v1883, %v1884
  %v1886 = vrot.slane %v1885, 1
  %v1887 = vmax.f32 %v1885, %v1886
  %v1888 = vsel %vm1572, %v1221, -inf
  %v1889 = vrot.slane %v1888, 4
  %v1890 = vmax.f32 %v1888, %v1889
  %v1891 = vrot.slane %v1890, 2
  %v1892 = vmax.f32 %v1890, %v1891
  %v1893 = vrot.slane %v1892, 1
  %v1894 = vmax.f32 %v1892, %v1893
  %v1895 = vsel %vm1572, %v1222, -inf
  %v1896 = vrot.slane %v1895, 4
  %v1897 = vmax.f32 %v1895, %v1896
  %v1898 = vrot.slane %v1897, 2
  %v1899 = vmax.f32 %v1897, %v1898
  %v1900 = vrot.slane %v1899, 1
  %v1901 = vmax.f32 %v1899, %v1900
  %v1902 = vsel %vm1572, %v1223, -inf
  %v1903 = vrot.slane %v1902, 4
  %v1904 = vmax.f32 %v1902, %v1903
  %v1905 = vrot.slane %v1904, 2
  %v1906 = vmax.f32 %v1904, %v1905
  %v1907 = vrot.slane %v1906, 1
  %v1908 = vmax.f32 %v1906, %v1907
  %v1909 = vsel %vm1572, %v1072, -inf
  %v1910 = vrot.slane %v1909, 4
  %v1911 = vmax.f32 %v1909, %v1910
  %v1912 = vrot.slane %v1911, 2
  %v1913 = vmax.f32 %v1911, %v1912
  %v1914 = vrot.slane %v1913, 1
  %v1915 = vmax.f32 %v1913, %v1914
  %v1916 = vsel %vm1572, %v1224, -inf
  %v1917 = vrot.slane %v1916, 4
  %v1918 = vmax.f32 %v1916, %v1917
  %v1919 = vrot.slane %v1918, 2
  %v1920 = vmax.f32 %v1918, %v1919
  %v1921 = vrot.slane %v1920, 1
  %v1922 = vmax.f32 %v1920, %v1921
  %v1923 = vsel %vm1572, %v1225, -inf
  %v1924 = vrot.slane %v1923, 4
  %v1925 = vmax.f32 %v1923, %v1924
  %v1926 = vrot.slane %v1925, 2
  %v1927 = vmax.f32 %v1925, %v1926
  %v1928 = vrot.slane %v1927, 1
  %v1929 = vmax.f32 %v1927, %v1928
  %v1930 = vsel %vm1572, %v1226, -inf
  %v1931 = vrot.slane %v1930, 4
  %v1932 = vmax.f32 %v1930, %v1931
  %v1933 = vrot.slane %v1932, 2
  %v1934 = vmax.f32 %v1932, %v1933
  %v1935 = vrot.slane %v1934, 1
  %v1936 = vmax.f32 %v1934, %v1935
  %v1937 = vsel %vm1572, %v1073, -inf
  %v1938 = vrot.slane %v1937, 4
  %v1939 = vmax.f32 %v1937, %v1938
  %v1940 = vrot.slane %v1939, 2
  %v1941 = vmax.f32 %v1939, %v1940
  %v1942 = vrot.slane %v1941, 1
  %v1943 = vmax.f32 %v1941, %v1942
  %v1944 = vsel %vm1572, %v1227, -inf
  %v1945 = vrot.slane %v1944, 4
  %v1946 = vmax.f32 %v1944, %v1945
  %v1947 = vrot.slane %v1946, 2
  %v1948 = vmax.f32 %v1946, %v1947
  %v1949 = vrot.slane %v1948, 1
  %v1950 = vmax.f32 %v1948, %v1949
  %v1951 = vsel %vm1572, %v1228, -inf
  %v1952 = vrot.slane %v1951, 4
  %v1953 = vmax.f32 %v1951, %v1952
  %v1954 = vrot.slane %v1953, 2
  %v1955 = vmax.f32 %v1953, %v1954
  %v1956 = vrot.slane %v1955, 1
  %v1957 = vmax.f32 %v1955, %v1956
  %v1958 = vsel %vm1572, %v1229, -inf
  %v1959 = vrot.slane %v1958, 4
  %v1960 = vmax.f32 %v1958, %v1959
  %v1961 = vrot.slane %v1960, 2
  %v1962 = vmax.f32 %v1960, %v1961
  %v1963 = vrot.slane %v1962, 1
  %v1964 = vmax.f32 %v1962, %v1963
  %v1965 = vsel %vm1572, %v1074, -inf
  %v1966 = vrot.slane %v1965, 4
  %v1967 = vmax.f32 %v1965, %v1966
  %v1968 = vrot.slane %v1967, 2
  %v1969 = vmax.f32 %v1967, %v1968
  %v1970 = vrot.slane %v1969, 1
  %v1971 = vmax.f32 %v1969, %v1970
  %v1972 = vsel %vm1572, %v1230, -inf
  %v1973 = vrot.slane %v1972, 4
  %v1974 = vmax.f32 %v1972, %v1973
  %v1975 = vrot.slane %v1974, 2
  %v1976 = vmax.f32 %v1974, %v1975
  %v1977 = vrot.slane %v1976, 1
  %v1978 = vmax.f32 %v1976, %v1977
  %v1979 = vsel %vm1572, %v1231, -inf
  %v1980 = vrot.slane %v1979, 4
  %v1981 = vmax.f32 %v1979, %v1980
  %v1982 = vrot.slane %v1981, 2
  %v1983 = vmax.f32 %v1981, %v1982
  %v1984 = vrot.slane %v1983, 1
  %v1985 = vmax.f32 %v1983, %v1984
  %v1986 = vsel %vm1572, %v1232, -inf
  %v1987 = vrot.slane %v1986, 4
  %v1988 = vmax.f32 %v1986, %v1987
  %v1989 = vrot.slane %v1988, 2
  %v1990 = vmax.f32 %v1988, %v1989
  %v1991 = vrot.slane %v1990, 1
  %v1992 = vmax.f32 %v1990, %v1991
  %v1993 = vsel %vm1572, %v1075, -inf
  %v1994 = vrot.slane %v1993, 4
  %v1995 = vmax.f32 %v1993, %v1994
  %v1996 = vrot.slane %v1995, 2
  %v1997 = vmax.f32 %v1995, %v1996
  %v1998 = vrot.slane %v1997, 1
  %v1999 = vmax.f32 %v1997, %v1998
  %v2000 = vsel %vm1572, %v1233, -inf
  %v2001 = vrot.slane %v2000, 4
  %v2002 = vmax.f32 %v2000, %v2001
  %v2003 = vrot.slane %v2002, 2
  %v2004 = vmax.f32 %v2002, %v2003
  %v2005 = vrot.slane %v2004, 1
  %v2006 = vmax.f32 %v2004, %v2005
  %v2007 = vsel %vm1572, %v1234, -inf
  %v2008 = vrot.slane %v2007, 4
  %v2009 = vmax.f32 %v2007, %v2008
  %v2010 = vrot.slane %v2009, 2
  %v2011 = vmax.f32 %v2009, %v2010
  %v2012 = vrot.slane %v2011, 1
  %v2013 = vmax.f32 %v2011, %v2012
  %v2014 = vsel %vm1572, %v1235, -inf
  %v2015 = vrot.slane %v2014, 4
  %v2016 = vmax.f32 %v2014, %v2015
  %v2017 = vrot.slane %v2016, 2
  %v2018 = vmax.f32 %v2016, %v2017
  %v2019 = vrot.slane %v2018, 1
  %v2020 = vmax.f32 %v2018, %v2019
  %v2021 = vsel %vm1572, %v1076, -inf
  %v2022 = vrot.slane %v2021, 4
  %v2023 = vmax.f32 %v2021, %v2022
  %v2024 = vrot.slane %v2023, 2
  %v2025 = vmax.f32 %v2023, %v2024
  %v2026 = vrot.slane %v2025, 1
  %v2027 = vmax.f32 %v2025, %v2026
  %v2028 = vsel %vm1572, %v1236, -inf
  %v2029 = vrot.slane %v2028, 4
  %v2030 = vmax.f32 %v2028, %v2029
  %v2031 = vrot.slane %v2030, 2
  %v2032 = vmax.f32 %v2030, %v2031
  %v2033 = vrot.slane %v2032, 1
  %v2034 = vmax.f32 %v2032, %v2033
  %v2035 = vsel %vm1572, %v1237, -inf
  %v2036 = vrot.slane %v2035, 4
  %v2037 = vmax.f32 %v2035, %v2036
  %v2038 = vrot.slane %v2037, 2
  %v2039 = vmax.f32 %v2037, %v2038
  %v2040 = vrot.slane %v2039, 1
  %v2041 = vmax.f32 %v2039, %v2040
  %v2042 = vsel %vm1572, %v1238, -inf
  %v2043 = vrot.slane %v2042, 4
  %v2044 = vmax.f32 %v2042, %v2043
  %v2045 = vrot.slane %v2044, 2
  %v2046 = vmax.f32 %v2044, %v2045
  %v2047 = vrot.slane %v2046, 1
  %v2048 = vmax.f32 %v2046, %v2047
  %v2049 = vsel %vm1572, %v1077, -inf
  %v2050 = vrot.slane %v2049, 4
  %v2051 = vmax.f32 %v2049, %v2050
  %v2052 = vrot.slane %v2051, 2
  %v2053 = vmax.f32 %v2051, %v2052
  %v2054 = vrot.slane %v2053, 1
  %v2055 = vmax.f32 %v2053, %v2054
  %v2056 = vsel %vm1572, %v1239, -inf
  %v2057 = vrot.slane %v2056, 4
  %v2058 = vmax.f32 %v2056, %v2057
  %v2059 = vrot.slane %v2058, 2
  %v2060 = vmax.f32 %v2058, %v2059
  %v2061 = vrot.slane %v2060, 1
  %v2062 = vmax.f32 %v2060, %v2061
  %v2063 = vsel %vm1572, %v1240, -inf
  %v2064 = vrot.slane %v2063, 4
  %v2065 = vmax.f32 %v2063, %v2064
  %v2066 = vrot.slane %v2065, 2
  %v2067 = vmax.f32 %v2065, %v2066
  %v2068 = vrot.slane %v2067, 1
  %v2069 = vmax.f32 %v2067, %v2068
  %v2070 = vsel %vm1572, %v1241, -inf
  %v2071 = vrot.slane %v2070, 4
  %v2072 = vmax.f32 %v2070, %v2071
  %v2073 = vrot.slane %v2072, 2
  %v2074 = vmax.f32 %v2072, %v2073
  %v2075 = vrot.slane %v2074, 1
  %v2076 = vmax.f32 %v2074, %v2075
  %v2077 = vsel %vm1572, %v1078, -inf
  %v2078 = vrot.slane %v2077, 4
  %v2079 = vmax.f32 %v2077, %v2078
  %v2080 = vrot.slane %v2079, 2
  %v2081 = vmax.f32 %v2079, %v2080
  %v2082 = vrot.slane %v2081, 1
  %v2083 = vmax.f32 %v2081, %v2082
  %v2084 = vsel %vm1572, %v1242, -inf
  %v2085 = vrot.slane %v2084, 4
  %v2086 = vmax.f32 %v2084, %v2085
  %v2087 = vrot.slane %v2086, 2
  %v2088 = vmax.f32 %v2086, %v2087
  %v2089 = vrot.slane %v2088, 1
  %v2090 = vmax.f32 %v2088, %v2089
  %v2091 = vsel %vm1572, %v1243, -inf
  %v2092 = vrot.slane %v2091, 4
  %v2093 = vmax.f32 %v2091, %v2092
  %v2094 = vrot.slane %v2093, 2
  %v2095 = vmax.f32 %v2093, %v2094
  %v2096 = vrot.slane %v2095, 1
  %v2097 = vmax.f32 %v2095, %v2096
  %v2098 = vsel %vm1572, %v1244, -inf
  %v2099 = vrot.slane %v2098, 4
  %v2100 = vmax.f32 %v2098, %v2099
  %v2101 = vrot.slane %v2100, 2
  %v2102 = vmax.f32 %v2100, %v2101
  %v2103 = vrot.slane %v2102, 1
  %v2104 = vmax.f32 %v2102, %v2103
  %v2105 = vsel %vm1572, %v1079, -inf
  %v2106 = vrot.slane %v2105, 4
  %v2107 = vmax.f32 %v2105, %v2106
  %v2108 = vrot.slane %v2107, 2
  %v2109 = vmax.f32 %v2107, %v2108
  %v2110 = vrot.slane %v2109, 1
  %v2111 = vmax.f32 %v2109, %v2110
  %v2112 = vsel %vm1572, %v1245, -inf
  %v2113 = vrot.slane %v2112, 4
  %v2114 = vmax.f32 %v2112, %v2113
  %v2115 = vrot.slane %v2114, 2
  %v2116 = vmax.f32 %v2114, %v2115
  %v2117 = vrot.slane %v2116, 1
  %v2118 = vmax.f32 %v2116, %v2117
  %v2119 = vsel %vm1572, %v1246, -inf
  %v2120 = vrot.slane %v2119, 4
  %v2121 = vmax.f32 %v2119, %v2120
  %v2122 = vrot.slane %v2121, 2
  %v2123 = vmax.f32 %v2121, %v2122
  %v2124 = vrot.slane %v2123, 1
  %v2125 = vmax.f32 %v2123, %v2124
  %v2126 = vsel %vm1572, %v1247, -inf
  %v2127 = vrot.slane %v2126, 4
  %v2128 = vmax.f32 %v2126, %v2127
  %v2129 = vrot.slane %v2128, 2
  %v2130 = vmax.f32 %v2128, %v2129
  %v2131 = vrot.slane %v2130, 1
  %v2132 = vmax.f32 %v2130, %v2131
  %v2133 = vsel %vm1572, %v1080, -inf
  %v2134 = vrot.slane %v2133, 4
  %v2135 = vmax.f32 %v2133, %v2134
  %v2136 = vrot.slane %v2135, 2
  %v2137 = vmax.f32 %v2135, %v2136
  %v2138 = vrot.slane %v2137, 1
  %v2139 = vmax.f32 %v2137, %v2138
  %v2140 = vsel %vm1572, %v1248, -inf
  %v2141 = vrot.slane %v2140, 4
  %v2142 = vmax.f32 %v2140, %v2141
  %v2143 = vrot.slane %v2142, 2
  %v2144 = vmax.f32 %v2142, %v2143
  %v2145 = vrot.slane %v2144, 1
  %v2146 = vmax.f32 %v2144, %v2145
  %v2147 = vsel %vm1572, %v1249, -inf
  %v2148 = vrot.slane %v2147, 4
  %v2149 = vmax.f32 %v2147, %v2148
  %v2150 = vrot.slane %v2149, 2
  %v2151 = vmax.f32 %v2149, %v2150
  %v2152 = vrot.slane %v2151, 1
  %v2153 = vmax.f32 %v2151, %v2152
  %v2154 = vsel %vm1572, %v1250, -inf
  %v2155 = vrot.slane %v2154, 4
  %v2156 = vmax.f32 %v2154, %v2155
  %v2157 = vrot.slane %v2156, 2
  %v2158 = vmax.f32 %v2156, %v2157
  %v2159 = vrot.slane %v2158, 1
  %v2160 = vmax.f32 %v2158, %v2159
  %v2161 = vsel %vm1572, %v1081, -inf
  %v2162 = vrot.slane %v2161, 4
  %v2163 = vmax.f32 %v2161, %v2162
  %v2164 = vrot.slane %v2163, 2
  %v2165 = vmax.f32 %v2163, %v2164
  %v2166 = vrot.slane %v2165, 1
  %v2167 = vmax.f32 %v2165, %v2166
  %v2168 = vsel %vm1572, %v1251, -inf
  %v2169 = vrot.slane %v2168, 4
  %v2170 = vmax.f32 %v2168, %v2169
  %v2171 = vrot.slane %v2170, 2
  %v2172 = vmax.f32 %v2170, %v2171
  %v2173 = vrot.slane %v2172, 1
  %v2174 = vmax.f32 %v2172, %v2173
  %v2175 = vsel %vm1572, %v1252, -inf
  %v2176 = vrot.slane %v2175, 4
  %v2177 = vmax.f32 %v2175, %v2176
  %v2178 = vrot.slane %v2177, 2
  %v2179 = vmax.f32 %v2177, %v2178
  %v2180 = vrot.slane %v2179, 1
  %v2181 = vmax.f32 %v2179, %v2180
  %v2182 = vsel %vm1572, %v1253, -inf
  %v2183 = vrot.slane %v2182, 4
  %v2184 = vmax.f32 %v2182, %v2183
  %v2185 = vrot.slane %v2184, 2
  %v2186 = vmax.f32 %v2184, %v2185
  %v2187 = vrot.slane %v2186, 1
  %v2188 = vmax.f32 %v2186, %v2187
  %v2189 = vsel %vm1572, %v1082, -inf
  %v2190 = vrot.slane %v2189, 4
  %v2191 = vmax.f32 %v2189, %v2190
  %v2192 = vrot.slane %v2191, 2
  %v2193 = vmax.f32 %v2191, %v2192
  %v2194 = vrot.slane %v2193, 1
  %v2195 = vmax.f32 %v2193, %v2194
  %v2196 = vsel %vm1572, %v1254, -inf
  %v2197 = vrot.slane %v2196, 4
  %v2198 = vmax.f32 %v2196, %v2197
  %v2199 = vrot.slane %v2198, 2
  %v2200 = vmax.f32 %v2198, %v2199
  %v2201 = vrot.slane %v2200, 1
  %v2202 = vmax.f32 %v2200, %v2201
  %v2203 = vsel %vm1572, %v1255, -inf
  %v2204 = vrot.slane %v2203, 4
  %v2205 = vmax.f32 %v2203, %v2204
  %v2206 = vrot.slane %v2205, 2
  %v2207 = vmax.f32 %v2205, %v2206
  %v2208 = vrot.slane %v2207, 1
  %v2209 = vmax.f32 %v2207, %v2208
  %v2210 = vsel %vm1572, %v1256, -inf
  %v2211 = vrot.slane %v2210, 4
  %v2212 = vmax.f32 %v2210, %v2211
  %v2213 = vrot.slane %v2212, 2
  %v2214 = vmax.f32 %v2212, %v2213
  %v2215 = vrot.slane %v2214, 1
  %v2216 = vmax.f32 %v2214, %v2215
  %v2217 = vsel %vm1572, %v1083, -inf
  %v2218 = vrot.slane %v2217, 4
  %v2219 = vmax.f32 %v2217, %v2218
  %v2220 = vrot.slane %v2219, 2
  %v2221 = vmax.f32 %v2219, %v2220
  %v2222 = vrot.slane %v2221, 1
  %v2223 = vmax.f32 %v2221, %v2222
  %v2224 = vsel %vm1572, %v1257, -inf
  %v2225 = vrot.slane %v2224, 4
  %v2226 = vmax.f32 %v2224, %v2225
  %v2227 = vrot.slane %v2226, 2
  %v2228 = vmax.f32 %v2226, %v2227
  %v2229 = vrot.slane %v2228, 1
  %v2230 = vmax.f32 %v2228, %v2229
  %v2231 = vsel %vm1572, %v1258, -inf
  %v2232 = vrot.slane %v2231, 4
  %v2233 = vmax.f32 %v2231, %v2232
  %v2234 = vrot.slane %v2233, 2
  %v2235 = vmax.f32 %v2233, %v2234
  %v2236 = vrot.slane %v2235, 1
  %v2237 = vmax.f32 %v2235, %v2236
  %v2238 = vsel %vm1572, %v1259, -inf
  %v2239 = vrot.slane %v2238, 4
  %v2240 = vmax.f32 %v2238, %v2239
  %v2241 = vrot.slane %v2240, 2
  %v2242 = vmax.f32 %v2240, %v2241
  %v2243 = vrot.slane %v2242, 1
  %v2244 = vmax.f32 %v2242, %v2243
  %v2245 = vsel %vm1572, %v1084, -inf
  %v2246 = vrot.slane %v2245, 4
  %v2247 = vmax.f32 %v2245, %v2246
  %v2248 = vrot.slane %v2247, 2
  %v2249 = vmax.f32 %v2247, %v2248
  %v2250 = vrot.slane %v2249, 1
  %v2251 = vmax.f32 %v2249, %v2250
  %v2252 = vsel %vm1572, %v1260, -inf
  %v2253 = vrot.slane %v2252, 4
  %v2254 = vmax.f32 %v2252, %v2253
  %v2255 = vrot.slane %v2254, 2
  %v2256 = vmax.f32 %v2254, %v2255
  %v2257 = vrot.slane %v2256, 1
  %v2258 = vmax.f32 %v2256, %v2257
  %v2259 = vsel %vm1572, %v1261, -inf
  %v2260 = vrot.slane %v2259, 4
  %v2261 = vmax.f32 %v2259, %v2260
  %v2262 = vrot.slane %v2261, 2
  %v2263 = vmax.f32 %v2261, %v2262
  %v2264 = vrot.slane %v2263, 1
  %v2265 = vmax.f32 %v2263, %v2264
  %v2266 = vsel %vm1572, %v1262, -inf
  %v2267 = vrot.slane %v2266, 4
  %v2268 = vmax.f32 %v2266, %v2267
  %v2269 = vrot.slane %v2268, 2
  %v2270 = vmax.f32 %v2268, %v2269
  %v2271 = vrot.slane %v2270, 1
  %v2272 = vmax.f32 %v2270, %v2271
  %v2273 = vsel %vm1572, %v1085, -inf
  %v2274 = vrot.slane %v2273, 4
  %v2275 = vmax.f32 %v2273, %v2274
  %v2276 = vrot.slane %v2275, 2
  %v2277 = vmax.f32 %v2275, %v2276
  %v2278 = vrot.slane %v2277, 1
  %v2279 = vmax.f32 %v2277, %v2278
  %v2280 = vsel %vm1572, %v1263, -inf
  %v2281 = vrot.slane %v2280, 4
  %v2282 = vmax.f32 %v2280, %v2281
  %v2283 = vrot.slane %v2282, 2
  %v2284 = vmax.f32 %v2282, %v2283
  %v2285 = vrot.slane %v2284, 1
  %v2286 = vmax.f32 %v2284, %v2285
  %v2287 = vsel %vm1572, %v1264, -inf
  %v2288 = vrot.slane %v2287, 4
  %v2289 = vmax.f32 %v2287, %v2288
  %v2290 = vrot.slane %v2289, 2
  %v2291 = vmax.f32 %v2289, %v2290
  %v2292 = vrot.slane %v2291, 1
  %v2293 = vmax.f32 %v2291, %v2292
  %v2294 = vsel %vm1572, %v1265, -inf
  %v2295 = vrot.slane %v2294, 4
  %v2296 = vmax.f32 %v2294, %v2295
  %v2297 = vrot.slane %v2296, 2
  %v2298 = vmax.f32 %v2296, %v2297
  %v2299 = vrot.slane %v2298, 1
  %v2300 = vmax.f32 %v2298, %v2299
  %v2301 = vsel %vm1572, %v1086, -inf
  %v2302 = vrot.slane %v2301, 4
  %v2303 = vmax.f32 %v2301, %v2302
  %v2304 = vrot.slane %v2303, 2
  %v2305 = vmax.f32 %v2303, %v2304
  %v2306 = vrot.slane %v2305, 1
  %v2307 = vmax.f32 %v2305, %v2306
  %v2308 = vsel %vm1572, %v1266, -inf
  %v2309 = vrot.slane %v2308, 4
  %v2310 = vmax.f32 %v2308, %v2309
  %v2311 = vrot.slane %v2310, 2
  %v2312 = vmax.f32 %v2310, %v2311
  %v2313 = vrot.slane %v2312, 1
  %v2314 = vmax.f32 %v2312, %v2313
  %v2315 = vsel %vm1572, %v1267, -inf
  %v2316 = vrot.slane %v2315, 4
  %v2317 = vmax.f32 %v2315, %v2316
  %v2318 = vrot.slane %v2317, 2
  %v2319 = vmax.f32 %v2317, %v2318
  %v2320 = vrot.slane %v2319, 1
  %v2321 = vmax.f32 %v2319, %v2320
  %v2322 = vsel %vm1572, %v1268, -inf
  %v2323 = vrot.slane %v2322, 4
  %v2324 = vmax.f32 %v2322, %v2323
  %v2325 = vrot.slane %v2324, 2
  %v2326 = vmax.f32 %v2324, %v2325
  %v2327 = vrot.slane %v2326, 1
  %v2328 = vmax.f32 %v2326, %v2327
  %v2329 = vsel %vm1572, %v1087, -inf
  %v2330 = vrot.slane %v2329, 4
  %v2331 = vmax.f32 %v2329, %v2330
  %v2332 = vrot.slane %v2331, 2
  %v2333 = vmax.f32 %v2331, %v2332
  %v2334 = vrot.slane %v2333, 1
  %v2335 = vmax.f32 %v2333, %v2334
  %v2336 = vsel %vm1572, %v1269, -inf
  %v2337 = vrot.slane %v2336, 4
  %v2338 = vmax.f32 %v2336, %v2337
  %v2339 = vrot.slane %v2338, 2
  %v2340 = vmax.f32 %v2338, %v2339
  %v2341 = vrot.slane %v2340, 1
  %v2342 = vmax.f32 %v2340, %v2341
  %v2343 = vsel %vm1572, %v1270, -inf
  %v2344 = vrot.slane %v2343, 4
  %v2345 = vmax.f32 %v2343, %v2344
  %v2346 = vrot.slane %v2345, 2
  %v2347 = vmax.f32 %v2345, %v2346
  %v2348 = vrot.slane %v2347, 1
  %v2349 = vmax.f32 %v2347, %v2348
  %v2350 = vsel %vm1572, %v1271, -inf
  %v2351 = vrot.slane %v2350, 4
  %v2352 = vmax.f32 %v2350, %v2351
  %v2353 = vrot.slane %v2352, 2
  %v2354 = vmax.f32 %v2352, %v2353
  %v2355 = vrot.slane %v2354, 1
  %v2356 = vmax.f32 %v2354, %v2355
  %v2357 = vsel %vm1572, %v1088, -inf
  %v2358 = vrot.slane %v2357, 4
  %v2359 = vmax.f32 %v2357, %v2358
  %v2360 = vrot.slane %v2359, 2
  %v2361 = vmax.f32 %v2359, %v2360
  %v2362 = vrot.slane %v2361, 1
  %v2363 = vmax.f32 %v2361, %v2362
  %v2364 = vsel %vm1572, %v1272, -inf
  %v2365 = vrot.slane %v2364, 4
  %v2366 = vmax.f32 %v2364, %v2365
  %v2367 = vrot.slane %v2366, 2
  %v2368 = vmax.f32 %v2366, %v2367
  %v2369 = vrot.slane %v2368, 1
  %v2370 = vmax.f32 %v2368, %v2369
  %v2371 = vsel %vm1572, %v1273, -inf
  %v2372 = vrot.slane %v2371, 4
  %v2373 = vmax.f32 %v2371, %v2372
  %v2374 = vrot.slane %v2373, 2
  %v2375 = vmax.f32 %v2373, %v2374
  %v2376 = vrot.slane %v2375, 1
  %v2377 = vmax.f32 %v2375, %v2376
  %v2378 = vsel %vm1572, %v1274, -inf
  %v2379 = vrot.slane %v2378, 4
  %v2380 = vmax.f32 %v2378, %v2379
  %v2381 = vrot.slane %v2380, 2
  %v2382 = vmax.f32 %v2380, %v2381
  %v2383 = vrot.slane %v2382, 1
  %v2384 = vmax.f32 %v2382, %v2383
  %v2385 = vsel %vm1572, %v1089, -inf
  %v2386 = vrot.slane %v2385, 4
  %v2387 = vmax.f32 %v2385, %v2386
  %v2388 = vrot.slane %v2387, 2
  %v2389 = vmax.f32 %v2387, %v2388
  %v2390 = vrot.slane %v2389, 1
  %v2391 = vmax.f32 %v2389, %v2390
  %v2392 = vsel %vm1572, %v1275, -inf
  %v2393 = vrot.slane %v2392, 4
  %v2394 = vmax.f32 %v2392, %v2393
  %v2395 = vrot.slane %v2394, 2
  %v2396 = vmax.f32 %v2394, %v2395
  %v2397 = vrot.slane %v2396, 1
  %v2398 = vmax.f32 %v2396, %v2397
  %v2399 = vsel %vm1572, %v1276, -inf
  %v2400 = vrot.slane %v2399, 4
  %v2401 = vmax.f32 %v2399, %v2400
  %v2402 = vrot.slane %v2401, 2
  %v2403 = vmax.f32 %v2401, %v2402
  %v2404 = vrot.slane %v2403, 1
  %v2405 = vmax.f32 %v2403, %v2404
  %v2406 = vsel %vm1572, %v1277, -inf
  %v2407 = vrot.slane %v2406, 4
  %v2408 = vmax.f32 %v2406, %v2407
  %v2409 = vrot.slane %v2408, 2
  %v2410 = vmax.f32 %v2408, %v2409
  %v2411 = vrot.slane %v2410, 1
  %v2412 = vmax.f32 %v2410, %v2411
  %v2413 = vsel %vm1572, %v1090, -inf
  %v2414 = vrot.slane %v2413, 4
  %v2415 = vmax.f32 %v2413, %v2414
  %v2416 = vrot.slane %v2415, 2
  %v2417 = vmax.f32 %v2415, %v2416
  %v2418 = vrot.slane %v2417, 1
  %v2419 = vmax.f32 %v2417, %v2418
  %v2420 = vsel %vm1572, %v1278, -inf
  %v2421 = vrot.slane %v2420, 4
  %v2422 = vmax.f32 %v2420, %v2421
  %v2423 = vrot.slane %v2422, 2
  %v2424 = vmax.f32 %v2422, %v2423
  %v2425 = vrot.slane %v2424, 1
  %v2426 = vmax.f32 %v2424, %v2425
  %v2427 = vsel %vm1572, %v1279, -inf
  %v2428 = vrot.slane %v2427, 4
  %v2429 = vmax.f32 %v2427, %v2428
  %v2430 = vrot.slane %v2429, 2
  %v2431 = vmax.f32 %v2429, %v2430
  %v2432 = vrot.slane %v2431, 1
  %v2433 = vmax.f32 %v2431, %v2432
  %v2434 = vsel %vm1572, %v1280, -inf
  %v2435 = vrot.slane %v2434, 4
  %v2436 = vmax.f32 %v2434, %v2435
  %v2437 = vrot.slane %v2436, 2
  %v2438 = vmax.f32 %v2436, %v2437
  %v2439 = vrot.slane %v2438, 1
  %v2440 = vmax.f32 %v2438, %v2439
  %v2441 = vsel %vm1572, %v1091, -inf
  %v2442 = vrot.slane %v2441, 4
  %v2443 = vmax.f32 %v2441, %v2442
  %v2444 = vrot.slane %v2443, 2
  %v2445 = vmax.f32 %v2443, %v2444
  %v2446 = vrot.slane %v2445, 1
  %v2447 = vmax.f32 %v2445, %v2446
  %v2448 = vsel %vm1572, %v1281, -inf
  %v2449 = vrot.slane %v2448, 4
  %v2450 = vmax.f32 %v2448, %v2449
  %v2451 = vrot.slane %v2450, 2
  %v2452 = vmax.f32 %v2450, %v2451
  %v2453 = vrot.slane %v2452, 1
  %v2454 = vmax.f32 %v2452, %v2453
  %v2455 = vsel %vm1572, %v1282, -inf
  %v2456 = vrot.slane %v2455, 4
  %v2457 = vmax.f32 %v2455, %v2456
  %v2458 = vrot.slane %v2457, 2
  %v2459 = vmax.f32 %v2457, %v2458
  %v2460 = vrot.slane %v2459, 1
  %v2461 = vmax.f32 %v2459, %v2460
  %v2462 = vsel %vm1572, %v1283, -inf
  %v2463 = vrot.slane %v2462, 4
  %v2464 = vmax.f32 %v2462, %v2463
  %v2465 = vrot.slane %v2464, 2
  %v2466 = vmax.f32 %v2464, %v2465
  %v2467 = vrot.slane %v2466, 1
  %v2468 = vmax.f32 %v2466, %v2467
  %v2469 = vsel %vm1572, %v1092, -inf
  %v2470 = vrot.slane %v2469, 4
  %v2471 = vmax.f32 %v2469, %v2470
  %v2472 = vrot.slane %v2471, 2
  %v2473 = vmax.f32 %v2471, %v2472
  %v2474 = vrot.slane %v2473, 1
  %v2475 = vmax.f32 %v2473, %v2474
  %v2476 = vsel %vm1572, %v1284, -inf
  %v2477 = vrot.slane %v2476, 4
  %v2478 = vmax.f32 %v2476, %v2477
  %v2479 = vrot.slane %v2478, 2
  %v2480 = vmax.f32 %v2478, %v2479
  %v2481 = vrot.slane %v2480, 1
  %v2482 = vmax.f32 %v2480, %v2481
  %v2483 = vsel %vm1572, %v1285, -inf
  %v2484 = vrot.slane %v2483, 4
  %v2485 = vmax.f32 %v2483, %v2484
  %v2486 = vrot.slane %v2485, 2
  %v2487 = vmax.f32 %v2485, %v2486
  %v2488 = vrot.slane %v2487, 1
  %v2489 = vmax.f32 %v2487, %v2488
  %v2490 = vsel %vm1572, %v1286, -inf
  %v2491 = vrot.slane %v2490, 4
  %v2492 = vmax.f32 %v2490, %v2491
  %v2493 = vrot.slane %v2492, 2
  %v2494 = vmax.f32 %v2492, %v2493
  %v2495 = vrot.slane %v2494, 1
  %v2496 = vmax.f32 %v2494, %v2495
  %v2497 = vsel %vm1572, %v1093, -inf
  %v2498 = vrot.slane %v2497, 4
  %v2499 = vmax.f32 %v2497, %v2498
  %v2500 = vrot.slane %v2499, 2
  %v2501 = vmax.f32 %v2499, %v2500
  %v2502 = vrot.slane %v2501, 1
  %v2503 = vmax.f32 %v2501, %v2502
  %v2504 = vsel %vm1572, %v1287, -inf
  %v2505 = vrot.slane %v2504, 4
  %v2506 = vmax.f32 %v2504, %v2505
  %v2507 = vrot.slane %v2506, 2
  %v2508 = vmax.f32 %v2506, %v2507
  %v2509 = vrot.slane %v2508, 1
  %v2510 = vmax.f32 %v2508, %v2509
  %v2511 = vsel %vm1572, %v1288, -inf
  %v2512 = vrot.slane %v2511, 4
  %v2513 = vmax.f32 %v2511, %v2512
  %v2514 = vrot.slane %v2513, 2
  %v2515 = vmax.f32 %v2513, %v2514
  %v2516 = vrot.slane %v2515, 1
  %v2517 = vmax.f32 %v2515, %v2516
  %v2518 = vsel %vm1572, %v1289, -inf
  %v2519 = vrot.slane %v2518, 4
  %v2520 = vmax.f32 %v2518, %v2519
  %v2521 = vrot.slane %v2520, 2
  %v2522 = vmax.f32 %v2520, %v2521
  %v2523 = vrot.slane %v2522, 1
  %v2524 = vmax.f32 %v2522, %v2523
  %v2525 = vsel %vm1572, %v1094, -inf
  %v2526 = vrot.slane %v2525, 4
  %v2527 = vmax.f32 %v2525, %v2526
  %v2528 = vrot.slane %v2527, 2
  %v2529 = vmax.f32 %v2527, %v2528
  %v2530 = vrot.slane %v2529, 1
  %v2531 = vmax.f32 %v2529, %v2530
  %v2532 = vsel %vm1572, %v1290, -inf
  %v2533 = vrot.slane %v2532, 4
  %v2534 = vmax.f32 %v2532, %v2533
  %v2535 = vrot.slane %v2534, 2
  %v2536 = vmax.f32 %v2534, %v2535
  %v2537 = vrot.slane %v2536, 1
  %v2538 = vmax.f32 %v2536, %v2537
  %v2539 = vsel %vm1572, %v1291, -inf
  %v2540 = vrot.slane %v2539, 4
  %v2541 = vmax.f32 %v2539, %v2540
  %v2542 = vrot.slane %v2541, 2
  %v2543 = vmax.f32 %v2541, %v2542
  %v2544 = vrot.slane %v2543, 1
  %v2545 = vmax.f32 %v2543, %v2544
  %v2546 = vsel %vm1572, %v1292, -inf
  %v2547 = vrot.slane %v2546, 4
  %v2548 = vmax.f32 %v2546, %v2547
  %v2549 = vrot.slane %v2548, 2
  %v2550 = vmax.f32 %v2548, %v2549
  %v2551 = vrot.slane %v2550, 1
  %v2552 = vmax.f32 %v2550, %v2551
  %v2553 = vsel %vm1572, %v1095, -inf
  %v2554 = vrot.slane %v2553, 4
  %v2555 = vmax.f32 %v2553, %v2554
  %v2556 = vrot.slane %v2555, 2
  %v2557 = vmax.f32 %v2555, %v2556
  %v2558 = vrot.slane %v2557, 1
  %v2559 = vmax.f32 %v2557, %v2558
  %v2560 = vsel %vm1572, %v1293, -inf
  %v2561 = vrot.slane %v2560, 4
  %v2562 = vmax.f32 %v2560, %v2561
  %v2563 = vrot.slane %v2562, 2
  %v2564 = vmax.f32 %v2562, %v2563
  %v2565 = vrot.slane %v2564, 1
  %v2566 = vmax.f32 %v2564, %v2565
  %v2567 = vsel %vm1572, %v1294, -inf
  %v2568 = vrot.slane %v2567, 4
  %v2569 = vmax.f32 %v2567, %v2568
  %v2570 = vrot.slane %v2569, 2
  %v2571 = vmax.f32 %v2569, %v2570
  %v2572 = vrot.slane %v2571, 1
  %v2573 = vmax.f32 %v2571, %v2572
  %v2574 = vsel %vm1572, %v1295, -inf
  %v2575 = vrot.slane %v2574, 4
  %v2576 = vmax.f32 %v2574, %v2575
  %v2577 = vrot.slane %v2576, 2
  %v2578 = vmax.f32 %v2576, %v2577
  %v2579 = vrot.slane %v2578, 1
  %v2580 = vmax.f32 %v2578, %v2579
  %v2581 = vsel %vm1572, %v1096, -inf
  %v2582 = vrot.slane %v2581, 4
  %v2583 = vmax.f32 %v2581, %v2582
  %v2584 = vrot.slane %v2583, 2
  %v2585 = vmax.f32 %v2583, %v2584
  %v2586 = vrot.slane %v2585, 1
  %v2587 = vmax.f32 %v2585, %v2586
  %v2588 = vsel %vm1572, %v1296, -inf
  %v2589 = vrot.slane %v2588, 4
  %v2590 = vmax.f32 %v2588, %v2589
  %v2591 = vrot.slane %v2590, 2
  %v2592 = vmax.f32 %v2590, %v2591
  %v2593 = vrot.slane %v2592, 1
  %v2594 = vmax.f32 %v2592, %v2593
  %v2595 = vsel %vm1572, %v1297, -inf
  %v2596 = vrot.slane %v2595, 4
  %v2597 = vmax.f32 %v2595, %v2596
  %v2598 = vrot.slane %v2597, 2
  %v2599 = vmax.f32 %v2597, %v2598
  %v2600 = vrot.slane %v2599, 1
  %v2601 = vmax.f32 %v2599, %v2600
  %v2602 = vsel %vm1572, %v1298, -inf
  %v2603 = vrot.slane %v2602, 4
  %v2604 = vmax.f32 %v2602, %v2603
  %v2605 = vrot.slane %v2604, 2
  %v2606 = vmax.f32 %v2604, %v2605
  %v2607 = vrot.slane %v2606, 1
  %v2608 = vmax.f32 %v2606, %v2607
  %v2609 = vsel %vm1572, %v1097, -inf
  %v2610 = vrot.slane %v2609, 4
  %v2611 = vmax.f32 %v2609, %v2610
  %v2612 = vrot.slane %v2611, 2
  %v2613 = vmax.f32 %v2611, %v2612
  %v2614 = vrot.slane %v2613, 1
  %v2615 = vmax.f32 %v2613, %v2614
  %v2616 = vsel %vm1572, %v1299, -inf
  %v2617 = vrot.slane %v2616, 4
  %v2618 = vmax.f32 %v2616, %v2617
  %v2619 = vrot.slane %v2618, 2
  %v2620 = vmax.f32 %v2618, %v2619
  %v2621 = vrot.slane %v2620, 1
  %v2622 = vmax.f32 %v2620, %v2621
  %v2623 = vsel %vm1572, %v1300, -inf
  %v2624 = vrot.slane %v2623, 4
  %v2625 = vmax.f32 %v2623, %v2624
  %v2626 = vrot.slane %v2625, 2
  %v2627 = vmax.f32 %v2625, %v2626
  %v2628 = vrot.slane %v2627, 1
  %v2629 = vmax.f32 %v2627, %v2628
  %v2630 = vsel %vm1572, %v1301, -inf
  %v2631 = vrot.slane %v2630, 4
  %v2632 = vmax.f32 %v2630, %v2631
  %v2633 = vrot.slane %v2632, 2
  %v2634 = vmax.f32 %v2632, %v2633
  %v2635 = vrot.slane %v2634, 1
  %v2636 = vmax.f32 %v2634, %v2635
  %v2637 = vsel %vm1572, %v1098, -inf
  %v2638 = vrot.slane %v2637, 4
  %v2639 = vmax.f32 %v2637, %v2638
  %v2640 = vrot.slane %v2639, 2
  %v2641 = vmax.f32 %v2639, %v2640
  %v2642 = vrot.slane %v2641, 1
  %v2643 = vmax.f32 %v2641, %v2642
  %v2644 = vsel %vm1572, %v1302, -inf
  %v2645 = vrot.slane %v2644, 4
  %v2646 = vmax.f32 %v2644, %v2645
  %v2647 = vrot.slane %v2646, 2
  %v2648 = vmax.f32 %v2646, %v2647
  %v2649 = vrot.slane %v2648, 1
  %v2650 = vmax.f32 %v2648, %v2649
  %v2651 = vsel %vm1572, %v1303, -inf
  %v2652 = vrot.slane %v2651, 4
  %v2653 = vmax.f32 %v2651, %v2652
  %v2654 = vrot.slane %v2653, 2
  %v2655 = vmax.f32 %v2653, %v2654
  %v2656 = vrot.slane %v2655, 1
  %v2657 = vmax.f32 %v2655, %v2656
  %v2658 = vsel %vm1572, %v1304, -inf
  %v2659 = vrot.slane %v2658, 4
  %v2660 = vmax.f32 %v2658, %v2659
  %v2661 = vrot.slane %v2660, 2
  %v2662 = vmax.f32 %v2660, %v2661
  %v2663 = vrot.slane %v2662, 1
  %v2664 = vmax.f32 %v2662, %v2663
  %v2665 = vsel %vm1572, %v1099, -inf
  %v2666 = vrot.slane %v2665, 4
  %v2667 = vmax.f32 %v2665, %v2666
  %v2668 = vrot.slane %v2667, 2
  %v2669 = vmax.f32 %v2667, %v2668
  %v2670 = vrot.slane %v2669, 1
  %v2671 = vmax.f32 %v2669, %v2670
  %v2672 = vsel %vm1572, %v1305, -inf
  %v2673 = vrot.slane %v2672, 4
  %v2674 = vmax.f32 %v2672, %v2673
  %v2675 = vrot.slane %v2674, 2
  %v2676 = vmax.f32 %v2674, %v2675
  %v2677 = vrot.slane %v2676, 1
  %v2678 = vmax.f32 %v2676, %v2677
  %v2679 = vsel %vm1572, %v1306, -inf
  %v2680 = vrot.slane %v2679, 4
  %v2681 = vmax.f32 %v2679, %v2680
  %v2682 = vrot.slane %v2681, 2
  %v2683 = vmax.f32 %v2681, %v2682
  %v2684 = vrot.slane %v2683, 1
  %v2685 = vmax.f32 %v2683, %v2684
  %v2686 = vsel %vm1572, %v1307, -inf
  %v2687 = vrot.slane %v2686, 4
  %v2688 = vmax.f32 %v2686, %v2687
  %v2689 = vrot.slane %v2688, 2
  %v2690 = vmax.f32 %v2688, %v2689
  %v2691 = vrot.slane %v2690, 1
  %v2692 = vmax.f32 %v2690, %v2691
  %v2693 = vsel %vm1572, %v1100, -inf
  %v2694 = vrot.slane %v2693, 4
  %v2695 = vmax.f32 %v2693, %v2694
  %v2696 = vrot.slane %v2695, 2
  %v2697 = vmax.f32 %v2695, %v2696
  %v2698 = vrot.slane %v2697, 1
  %v2699 = vmax.f32 %v2697, %v2698
  %v2700 = vsel %vm1572, %v1308, -inf
  %v2701 = vrot.slane %v2700, 4
  %v2702 = vmax.f32 %v2700, %v2701
  %v2703 = vrot.slane %v2702, 2
  %v2704 = vmax.f32 %v2702, %v2703
  %v2705 = vrot.slane %v2704, 1
  %v2706 = vmax.f32 %v2704, %v2705
  %v2707 = vsel %vm1572, %v1309, -inf
  %v2708 = vrot.slane %v2707, 4
  %v2709 = vmax.f32 %v2707, %v2708
  %v2710 = vrot.slane %v2709, 2
  %v2711 = vmax.f32 %v2709, %v2710
  %v2712 = vrot.slane %v2711, 1
  %v2713 = vmax.f32 %v2711, %v2712
  %v2714 = vsel %vm1572, %v1310, -inf
  %v2715 = vrot.slane %v2714, 4
  %v2716 = vmax.f32 %v2714, %v2715
  %v2717 = vrot.slane %v2716, 2
  %v2718 = vmax.f32 %v2716, %v2717
  %v2719 = vrot.slane %v2718, 1
  %v2720 = vmax.f32 %v2718, %v2719
  %v2721 = vsel %vm1572, %v1101, -inf
  %v2722 = vrot.slane %v2721, 4
  %v2723 = vmax.f32 %v2721, %v2722
  %v2724 = vrot.slane %v2723, 2
  %v2725 = vmax.f32 %v2723, %v2724
  %v2726 = vrot.slane %v2725, 1
  %v2727 = vmax.f32 %v2725, %v2726
  %v2728 = vsel %vm1572, %v1311, -inf
  %v2729 = vrot.slane %v2728, 4
  %v2730 = vmax.f32 %v2728, %v2729
  %v2731 = vrot.slane %v2730, 2
  %v2732 = vmax.f32 %v2730, %v2731
  %v2733 = vrot.slane %v2732, 1
  %v2734 = vmax.f32 %v2732, %v2733
  %v2735 = vsel %vm1572, %v1312, -inf
  %v2736 = vrot.slane %v2735, 4
  %v2737 = vmax.f32 %v2735, %v2736
  %v2738 = vrot.slane %v2737, 2
  %v2739 = vmax.f32 %v2737, %v2738
  %v2740 = vrot.slane %v2739, 1
  %v2741 = vmax.f32 %v2739, %v2740
  %v2742 = vsel %vm1572, %v1313, -inf
  %v2743 = vrot.slane %v2742, 4
  %v2744 = vmax.f32 %v2742, %v2743
  %v2745 = vrot.slane %v2744, 2
  %v2746 = vmax.f32 %v2744, %v2745
  %v2747 = vrot.slane %v2746, 1
  %v2748 = vmax.f32 %v2746, %v2747
  %v2749 = vsel %vm1572, %v1102, -inf
  %v2750 = vrot.slane %v2749, 4
  %v2751 = vmax.f32 %v2749, %v2750
  %v2752 = vrot.slane %v2751, 2
  %v2753 = vmax.f32 %v2751, %v2752
  %v2754 = vrot.slane %v2753, 1
  %v2755 = vmax.f32 %v2753, %v2754
  %v2756 = vsel %vm1572, %v1314, -inf
  %v2757 = vrot.slane %v2756, 4
  %v2758 = vmax.f32 %v2756, %v2757
  %v2759 = vrot.slane %v2758, 2
  %v2760 = vmax.f32 %v2758, %v2759
  %v2761 = vrot.slane %v2760, 1
  %v2762 = vmax.f32 %v2760, %v2761
  %v2763 = vsel %vm1572, %v1315, -inf
  %v2764 = vrot.slane %v2763, 4
  %v2765 = vmax.f32 %v2763, %v2764
  %v2766 = vrot.slane %v2765, 2
  %v2767 = vmax.f32 %v2765, %v2766
  %v2768 = vrot.slane %v2767, 1
  %v2769 = vmax.f32 %v2767, %v2768
  %v2770 = vsel %vm1572, %v1316, -inf
  %v2771 = vrot.slane %v2770, 4
  %v2772 = vmax.f32 %v2770, %v2771
  %v2773 = vrot.slane %v2772, 2
  %v2774 = vmax.f32 %v2772, %v2773
  %v2775 = vrot.slane %v2774, 1
  %v2776 = vmax.f32 %v2774, %v2775
  %v2777 = vsel %vm1572, %v1103, -inf
  %v2778 = vrot.slane %v2777, 4
  %v2779 = vmax.f32 %v2777, %v2778
  %v2780 = vrot.slane %v2779, 2
  %v2781 = vmax.f32 %v2779, %v2780
  %v2782 = vrot.slane %v2781, 1
  %v2783 = vmax.f32 %v2781, %v2782
  %v2784 = vsel %vm1572, %v1317, -inf
  %v2785 = vrot.slane %v2784, 4
  %v2786 = vmax.f32 %v2784, %v2785
  %v2787 = vrot.slane %v2786, 2
  %v2788 = vmax.f32 %v2786, %v2787
  %v2789 = vrot.slane %v2788, 1
  %v2790 = vmax.f32 %v2788, %v2789
  %v2791 = vsel %vm1572, %v1318, -inf
  %v2792 = vrot.slane %v2791, 4
  %v2793 = vmax.f32 %v2791, %v2792
  %v2794 = vrot.slane %v2793, 2
  %v2795 = vmax.f32 %v2793, %v2794
  %v2796 = vrot.slane %v2795, 1
  %v2797 = vmax.f32 %v2795, %v2796
  %v2798 = vsel %vm1572, %v1319, -inf
  %v2799 = vrot.slane %v2798, 4
  %v2800 = vmax.f32 %v2798, %v2799
  %v2801 = vrot.slane %v2800, 2
  %v2802 = vmax.f32 %v2800, %v2801
  %v2803 = vrot.slane %v2802, 1
  %v2804 = vmax.f32 %v2802, %v2803
  %v2805 = vsel %vm1572, %v1104, -inf
  %v2806 = vrot.slane %v2805, 4
  %v2807 = vmax.f32 %v2805, %v2806
  %v2808 = vrot.slane %v2807, 2
  %v2809 = vmax.f32 %v2807, %v2808
  %v2810 = vrot.slane %v2809, 1
  %v2811 = vmax.f32 %v2809, %v2810
  %v2812 = vsel %vm1572, %v1320, -inf
  %v2813 = vrot.slane %v2812, 4
  %v2814 = vmax.f32 %v2812, %v2813
  %v2815 = vrot.slane %v2814, 2
  %v2816 = vmax.f32 %v2814, %v2815
  %v2817 = vrot.slane %v2816, 1
  %v2818 = vmax.f32 %v2816, %v2817
  %v2819 = vsel %vm1572, %v1321, -inf
  %v2820 = vrot.slane %v2819, 4
  %v2821 = vmax.f32 %v2819, %v2820
  %v2822 = vrot.slane %v2821, 2
  %v2823 = vmax.f32 %v2821, %v2822
  %v2824 = vrot.slane %v2823, 1
  %v2825 = vmax.f32 %v2823, %v2824
  %v2826 = vsel %vm1572, %v1322, -inf
  %v2827 = vrot.slane %v2826, 4
  %v2828 = vmax.f32 %v2826, %v2827
  %v2829 = vrot.slane %v2828, 2
  %v2830 = vmax.f32 %v2828, %v2829
  %v2831 = vrot.slane %v2830, 1
  %v2832 = vmax.f32 %v2830, %v2831
  %v2833 = vsel %vm1572, %v1105, -inf
  %v2834 = vrot.slane %v2833, 4
  %v2835 = vmax.f32 %v2833, %v2834
  %v2836 = vrot.slane %v2835, 2
  %v2837 = vmax.f32 %v2835, %v2836
  %v2838 = vrot.slane %v2837, 1
  %v2839 = vmax.f32 %v2837, %v2838
  %v2840 = vsel %vm1572, %v1323, -inf
  %v2841 = vrot.slane %v2840, 4
  %v2842 = vmax.f32 %v2840, %v2841
  %v2843 = vrot.slane %v2842, 2
  %v2844 = vmax.f32 %v2842, %v2843
  %v2845 = vrot.slane %v2844, 1
  %v2846 = vmax.f32 %v2844, %v2845
  %v2847 = vsel %vm1572, %v1324, -inf
  %v2848 = vrot.slane %v2847, 4
  %v2849 = vmax.f32 %v2847, %v2848
  %v2850 = vrot.slane %v2849, 2
  %v2851 = vmax.f32 %v2849, %v2850
  %v2852 = vrot.slane %v2851, 1
  %v2853 = vmax.f32 %v2851, %v2852
  %v2854 = vsel %vm1572, %v1325, -inf
  %v2855 = vrot.slane %v2854, 4
  %v2856 = vmax.f32 %v2854, %v2855
  %v2857 = vrot.slane %v2856, 2
  %v2858 = vmax.f32 %v2856, %v2857
  %v2859 = vrot.slane %v2858, 1
  %v2860 = vmax.f32 %v2858, %v2859
  %v2861 = vsel %vm1572, %v1106, -inf
  %v2862 = vrot.slane %v2861, 4
  %v2863 = vmax.f32 %v2861, %v2862
  %v2864 = vrot.slane %v2863, 2
  %v2865 = vmax.f32 %v2863, %v2864
  %v2866 = vrot.slane %v2865, 1
  %v2867 = vmax.f32 %v2865, %v2866
  %v2868 = vsel %vm1572, %v1326, -inf
  %v2869 = vrot.slane %v2868, 4
  %v2870 = vmax.f32 %v2868, %v2869
  %v2871 = vrot.slane %v2870, 2
  %v2872 = vmax.f32 %v2870, %v2871
  %v2873 = vrot.slane %v2872, 1
  %v2874 = vmax.f32 %v2872, %v2873
  %v2875 = vsel %vm1572, %v1327, -inf
  %v2876 = vrot.slane %v2875, 4
  %v2877 = vmax.f32 %v2875, %v2876
  %v2878 = vrot.slane %v2877, 2
  %v2879 = vmax.f32 %v2877, %v2878
  %v2880 = vrot.slane %v2879, 1
  %v2881 = vmax.f32 %v2879, %v2880
  %v2882 = vsel %vm1572, %v1328, -inf
  %v2883 = vrot.slane %v2882, 4
  %v2884 = vmax.f32 %v2882, %v2883
  %v2885 = vrot.slane %v2884, 2
  %v2886 = vmax.f32 %v2884, %v2885
  %v2887 = vrot.slane %v2886, 1
  %v2888 = vmax.f32 %v2886, %v2887
  %v2889 = vsel %vm1572, %v1107, -inf
  %v2890 = vrot.slane %v2889, 4
  %v2891 = vmax.f32 %v2889, %v2890
  %v2892 = vrot.slane %v2891, 2
  %v2893 = vmax.f32 %v2891, %v2892
  %v2894 = vrot.slane %v2893, 1
  %v2895 = vmax.f32 %v2893, %v2894
  %v2896 = vsel %vm1572, %v1329, -inf
  %v2897 = vrot.slane %v2896, 4
  %v2898 = vmax.f32 %v2896, %v2897
  %v2899 = vrot.slane %v2898, 2
  %v2900 = vmax.f32 %v2898, %v2899
  %v2901 = vrot.slane %v2900, 1
  %v2902 = vmax.f32 %v2900, %v2901
  %v2903 = vsel %vm1572, %v1330, -inf
  %v2904 = vrot.slane %v2903, 4
  %v2905 = vmax.f32 %v2903, %v2904
  %v2906 = vrot.slane %v2905, 2
  %v2907 = vmax.f32 %v2905, %v2906
  %v2908 = vrot.slane %v2907, 1
  %v2909 = vmax.f32 %v2907, %v2908
  %v2910 = vsel %vm1572, %v1331, -inf
  %v2911 = vrot.slane %v2910, 4
  %v2912 = vmax.f32 %v2910, %v2911
  %v2913 = vrot.slane %v2912, 2
  %v2914 = vmax.f32 %v2912, %v2913
  %v2915 = vrot.slane %v2914, 1
  %v2916 = vmax.f32 %v2914, %v2915
  %v2917 = vsel %vm1572, %v1108, -inf
  %v2918 = vrot.slane %v2917, 4
  %v2919 = vmax.f32 %v2917, %v2918
  %v2920 = vrot.slane %v2919, 2
  %v2921 = vmax.f32 %v2919, %v2920
  %v2922 = vrot.slane %v2921, 1
  %v2923 = vmax.f32 %v2921, %v2922
  %v2924 = vsel %vm1572, %v1332, -inf
  %v2925 = vrot.slane %v2924, 4
  %v2926 = vmax.f32 %v2924, %v2925
  %v2927 = vrot.slane %v2926, 2
  %v2928 = vmax.f32 %v2926, %v2927
  %v2929 = vrot.slane %v2928, 1
  %v2930 = vmax.f32 %v2928, %v2929
  %v2931 = vsel %vm1572, %v1333, -inf
  %v2932 = vrot.slane %v2931, 4
  %v2933 = vmax.f32 %v2931, %v2932
  %v2934 = vrot.slane %v2933, 2
  %v2935 = vmax.f32 %v2933, %v2934
  %v2936 = vrot.slane %v2935, 1
  %v2937 = vmax.f32 %v2935, %v2936
  %v2938 = vsel %vm1572, %v1334, -inf
  %v2939 = vrot.slane %v2938, 4
  %v2940 = vmax.f32 %v2938, %v2939
  %v2941 = vrot.slane %v2940, 2
  %v2942 = vmax.f32 %v2940, %v2941
  %v2943 = vrot.slane %v2942, 1
  %v2944 = vmax.f32 %v2942, %v2943
  %v2945 = vsel %vm1572, %v1109, -inf
  %v2946 = vrot.slane %v2945, 4
  %v2947 = vmax.f32 %v2945, %v2946
  %v2948 = vrot.slane %v2947, 2
  %v2949 = vmax.f32 %v2947, %v2948
  %v2950 = vrot.slane %v2949, 1
  %v2951 = vmax.f32 %v2949, %v2950
  %v2952 = vsel %vm1572, %v1335, -inf
  %v2953 = vrot.slane %v2952, 4
  %v2954 = vmax.f32 %v2952, %v2953
  %v2955 = vrot.slane %v2954, 2
  %v2956 = vmax.f32 %v2954, %v2955
  %v2957 = vrot.slane %v2956, 1
  %v2958 = vmax.f32 %v2956, %v2957
  %v2959 = vsel %vm1572, %v1336, -inf
  %v2960 = vrot.slane %v2959, 4
  %v2961 = vmax.f32 %v2959, %v2960
  %v2962 = vrot.slane %v2961, 2
  %v2963 = vmax.f32 %v2961, %v2962
  %v2964 = vrot.slane %v2963, 1
  %v2965 = vmax.f32 %v2963, %v2964
  %v2966 = vsel %vm1572, %v1337, -inf
  %v2967 = vrot.slane %v2966, 4
  %v2968 = vmax.f32 %v2966, %v2967
  %v2969 = vrot.slane %v2968, 2
  %v2970 = vmax.f32 %v2968, %v2969
  %v2971 = vrot.slane %v2970, 1
  %v2972 = vmax.f32 %v2970, %v2971
  %v2973 = vsel %vm1572, %v1110, -inf
  %v2974 = vrot.slane %v2973, 4
  %v2975 = vmax.f32 %v2973, %v2974
  %v2976 = vrot.slane %v2975, 2
  %v2977 = vmax.f32 %v2975, %v2976
  %v2978 = vrot.slane %v2977, 1
  %v2979 = vmax.f32 %v2977, %v2978
  %v2980 = vsel %vm1572, %v1338, -inf
  %v2981 = vrot.slane %v2980, 4
  %v2982 = vmax.f32 %v2980, %v2981
  %v2983 = vrot.slane %v2982, 2
  %v2984 = vmax.f32 %v2982, %v2983
  %v2985 = vrot.slane %v2984, 1
  %v2986 = vmax.f32 %v2984, %v2985
  %v2987 = vsel %vm1572, %v1339, -inf
  %v2988 = vrot.slane %v2987, 4
  %v2989 = vmax.f32 %v2987, %v2988
  %v2990 = vrot.slane %v2989, 2
  %v2991 = vmax.f32 %v2989, %v2990
  %v2992 = vrot.slane %v2991, 1
  %v2993 = vmax.f32 %v2991, %v2992
  %v2994 = vsel %vm1572, %v1340, -inf
  %v2995 = vrot.slane %v2994, 4
  %v2996 = vmax.f32 %v2994, %v2995
  %v2997 = vrot.slane %v2996, 2
  %v2998 = vmax.f32 %v2996, %v2997
  %v2999 = vrot.slane %v2998, 1
  %v3000 = vmax.f32 %v2998, %v2999
  %v3001 = vsel %vm1572, %v1111, -inf
  %v3002 = vrot.slane %v3001, 4
  %v3003 = vmax.f32 %v3001, %v3002
  %v3004 = vrot.slane %v3003, 2
  %v3005 = vmax.f32 %v3003, %v3004
  %v3006 = vrot.slane %v3005, 1
  %v3007 = vmax.f32 %v3005, %v3006
  %v3008 = vsel %vm1572, %v1341, -inf
  %v3009 = vrot.slane %v3008, 4
  %v3010 = vmax.f32 %v3008, %v3009
  %v3011 = vrot.slane %v3010, 2
  %v3012 = vmax.f32 %v3010, %v3011
  %v3013 = vrot.slane %v3012, 1
  %v3014 = vmax.f32 %v3012, %v3013
  %v3015 = vsel %vm1572, %v1342, -inf
  %v3016 = vrot.slane %v3015, 4
  %v3017 = vmax.f32 %v3015, %v3016
  %v3018 = vrot.slane %v3017, 2
  %v3019 = vmax.f32 %v3017, %v3018
  %v3020 = vrot.slane %v3019, 1
  %v3021 = vmax.f32 %v3019, %v3020
  %v3022 = vsel %vm1572, %v1343, -inf
  %v3023 = vrot.slane %v3022, 4
  %v3024 = vmax.f32 %v3022, %v3023
  %v3025 = vrot.slane %v3024, 2
  %v3026 = vmax.f32 %v3024, %v3025
  %v3027 = vrot.slane %v3026, 1
  %v3028 = vmax.f32 %v3026, %v3027
  %v3029 = vsel %vm1572, %v1112, -inf
  %v3030 = vrot.slane %v3029, 4
  %v3031 = vmax.f32 %v3029, %v3030
  %v3032 = vrot.slane %v3031, 2
  %v3033 = vmax.f32 %v3031, %v3032
  %v3034 = vrot.slane %v3033, 1
  %v3035 = vmax.f32 %v3033, %v3034
  %v3036 = vsel %vm1572, %v1344, -inf
  %v3037 = vrot.slane %v3036, 4
  %v3038 = vmax.f32 %v3036, %v3037
  %v3039 = vrot.slane %v3038, 2
  %v3040 = vmax.f32 %v3038, %v3039
  %v3041 = vrot.slane %v3040, 1
  %v3042 = vmax.f32 %v3040, %v3041
  %v3043 = vsel %vm1572, %v1345, -inf
  %v3044 = vrot.slane %v3043, 4
  %v3045 = vmax.f32 %v3043, %v3044
  %v3046 = vrot.slane %v3045, 2
  %v3047 = vmax.f32 %v3045, %v3046
  %v3048 = vrot.slane %v3047, 1
  %v3049 = vmax.f32 %v3047, %v3048
  %v3050 = vsel %vm1572, %v1346, -inf
  %v3051 = vrot.slane %v3050, 4
  %v3052 = vmax.f32 %v3050, %v3051
  %v3053 = vrot.slane %v3052, 2
  %v3054 = vmax.f32 %v3052, %v3053
  %v3055 = vrot.slane %v3054, 1
  %v3056 = vmax.f32 %v3054, %v3055
  %v3057 = vsel %vm1572, %v1113, -inf
  %v3058 = vrot.slane %v3057, 4
  %v3059 = vmax.f32 %v3057, %v3058
  %v3060 = vrot.slane %v3059, 2
  %v3061 = vmax.f32 %v3059, %v3060
  %v3062 = vrot.slane %v3061, 1
  %v3063 = vmax.f32 %v3061, %v3062
  %v3064 = vsel %vm1572, %v1347, -inf
  %v3065 = vrot.slane %v3064, 4
  %v3066 = vmax.f32 %v3064, %v3065
  %v3067 = vrot.slane %v3066, 2
  %v3068 = vmax.f32 %v3066, %v3067
  %v3069 = vrot.slane %v3068, 1
  %v3070 = vmax.f32 %v3068, %v3069
  %v3071 = vsel %vm1572, %v1348, -inf
  %v3072 = vrot.slane %v3071, 4
  %v3073 = vmax.f32 %v3071, %v3072
  %v3074 = vrot.slane %v3073, 2
  %v3075 = vmax.f32 %v3073, %v3074
  %v3076 = vrot.slane %v3075, 1
  %v3077 = vmax.f32 %v3075, %v3076
  %v3078 = vsel %vm1572, %v1349, -inf
  %v3079 = vrot.slane %v3078, 4
  %v3080 = vmax.f32 %v3078, %v3079
  %v3081 = vrot.slane %v3080, 2
  %v3082 = vmax.f32 %v3080, %v3081
  %v3083 = vrot.slane %v3082, 1
  %v3084 = vmax.f32 %v3082, %v3083
  %v3085 = vsel %vm1572, %v1114, -inf
  %v3086 = vrot.slane %v3085, 4
  %v3087 = vmax.f32 %v3085, %v3086
  %v3088 = vrot.slane %v3087, 2
  %v3089 = vmax.f32 %v3087, %v3088
  %v3090 = vrot.slane %v3089, 1
  %v3091 = vmax.f32 %v3089, %v3090
  %v3092 = vsel %vm1572, %v1350, -inf
  %v3093 = vrot.slane %v3092, 4
  %v3094 = vmax.f32 %v3092, %v3093
  %v3095 = vrot.slane %v3094, 2
  %v3096 = vmax.f32 %v3094, %v3095
  %v3097 = vrot.slane %v3096, 1
  %v3098 = vmax.f32 %v3096, %v3097
  %v3099 = vsel %vm1572, %v1351, -inf
  %v3100 = vrot.slane %v3099, 4
  %v3101 = vmax.f32 %v3099, %v3100
  %v3102 = vrot.slane %v3101, 2
  %v3103 = vmax.f32 %v3101, %v3102
  %v3104 = vrot.slane %v3103, 1
  %v3105 = vmax.f32 %v3103, %v3104
  %v3106 = vsel %vm1572, %v1352, -inf
  %v3107 = vrot.slane %v3106, 4
  %v3108 = vmax.f32 %v3106, %v3107
  %v3109 = vrot.slane %v3108, 2
  %v3110 = vmax.f32 %v3108, %v3109
  %v3111 = vrot.slane %v3110, 1
  %v3112 = vmax.f32 %v3110, %v3111
  %v3113 = vsel %vm1572, %v1115, -inf
  %v3114 = vrot.slane %v3113, 4
  %v3115 = vmax.f32 %v3113, %v3114
  %v3116 = vrot.slane %v3115, 2
  %v3117 = vmax.f32 %v3115, %v3116
  %v3118 = vrot.slane %v3117, 1
  %v3119 = vmax.f32 %v3117, %v3118
  %v3120 = vsel %vm1572, %v1353, -inf
  %v3121 = vrot.slane %v3120, 4
  %v3122 = vmax.f32 %v3120, %v3121
  %v3123 = vrot.slane %v3122, 2
  %v3124 = vmax.f32 %v3122, %v3123
  %v3125 = vrot.slane %v3124, 1
  %v3126 = vmax.f32 %v3124, %v3125
  %v3127 = vsel %vm1572, %v1354, -inf
  %v3128 = vrot.slane %v3127, 4
  %v3129 = vmax.f32 %v3127, %v3128
  %v3130 = vrot.slane %v3129, 2
  %v3131 = vmax.f32 %v3129, %v3130
  %v3132 = vrot.slane %v3131, 1
  %v3133 = vmax.f32 %v3131, %v3132
  %v3134 = vsel %vm1572, %v1355, -inf
  %v3135 = vrot.slane %v3134, 4
  %v3136 = vmax.f32 %v3134, %v3135
  %v3137 = vrot.slane %v3136, 2
  %v3138 = vmax.f32 %v3136, %v3137
  %v3139 = vrot.slane %v3138, 1
  %v3140 = vmax.f32 %v3138, %v3139
  %v3141 = vsel %vm1572, %v1116, -inf
  %v3142 = vrot.slane %v3141, 4
  %v3143 = vmax.f32 %v3141, %v3142
  %v3144 = vrot.slane %v3143, 2
  %v3145 = vmax.f32 %v3143, %v3144
  %v3146 = vrot.slane %v3145, 1
  %v3147 = vmax.f32 %v3145, %v3146
  %v3148 = vsel %vm1572, %v1356, -inf
  %v3149 = vrot.slane %v3148, 4
  %v3150 = vmax.f32 %v3148, %v3149
  %v3151 = vrot.slane %v3150, 2
  %v3152 = vmax.f32 %v3150, %v3151
  %v3153 = vrot.slane %v3152, 1
  %v3154 = vmax.f32 %v3152, %v3153
  %v3155 = vsel %vm1572, %v1357, -inf
  %v3156 = vrot.slane %v3155, 4
  %v3157 = vmax.f32 %v3155, %v3156
  %v3158 = vrot.slane %v3157, 2
  %v3159 = vmax.f32 %v3157, %v3158
  %v3160 = vrot.slane %v3159, 1
  %v3161 = vmax.f32 %v3159, %v3160
  %v3162 = vsel %vm1572, %v1358, -inf
  %v3163 = vrot.slane %v3162, 4
  %v3164 = vmax.f32 %v3162, %v3163
  %v3165 = vrot.slane %v3164, 2
  %v3166 = vmax.f32 %v3164, %v3165
  %v3167 = vrot.slane %v3166, 1
  %v3168 = vmax.f32 %v3166, %v3167
  %v3169 = vsel %vm1572, %v1117, -inf
  %v3170 = vrot.slane %v3169, 4
  %v3171 = vmax.f32 %v3169, %v3170
  %v3172 = vrot.slane %v3171, 2
  %v3173 = vmax.f32 %v3171, %v3172
  %v3174 = vrot.slane %v3173, 1
  %v3175 = vmax.f32 %v3173, %v3174
  %v3176 = vsel %vm1572, %v1359, -inf
  %v3177 = vrot.slane %v3176, 4
  %v3178 = vmax.f32 %v3176, %v3177
  %v3179 = vrot.slane %v3178, 2
  %v3180 = vmax.f32 %v3178, %v3179
  %v3181 = vrot.slane %v3180, 1
  %v3182 = vmax.f32 %v3180, %v3181
  %v3183 = vsel %vm1572, %v1360, -inf
  %v3184 = vrot.slane %v3183, 4
  %v3185 = vmax.f32 %v3183, %v3184
  %v3186 = vrot.slane %v3185, 2
  %v3187 = vmax.f32 %v3185, %v3186
  %v3188 = vrot.slane %v3187, 1
  %v3189 = vmax.f32 %v3187, %v3188
  %v3190 = vsel %vm1572, %v1361, -inf
  %v3191 = vrot.slane %v3190, 4
  %v3192 = vmax.f32 %v3190, %v3191
  %v3193 = vrot.slane %v3192, 2
  %v3194 = vmax.f32 %v3192, %v3193
  %v3195 = vrot.slane %v3194, 1
  %v3196 = vmax.f32 %v3194, %v3195
  %v3197 = vsel %vm1572, %v1118, -inf
  %v3198 = vrot.slane %v3197, 4
  %v3199 = vmax.f32 %v3197, %v3198
  %v3200 = vrot.slane %v3199, 2
  %v3201 = vmax.f32 %v3199, %v3200
  %v3202 = vrot.slane %v3201, 1
  %v3203 = vmax.f32 %v3201, %v3202
  %v3204 = vsel %vm1572, %v1362, -inf
  %v3205 = vrot.slane %v3204, 4
  %v3206 = vmax.f32 %v3204, %v3205
  %v3207 = vrot.slane %v3206, 2
  %v3208 = vmax.f32 %v3206, %v3207
  %v3209 = vrot.slane %v3208, 1
  %v3210 = vmax.f32 %v3208, %v3209
  %v3211 = vsel %vm1572, %v1363, -inf
  %v3212 = vrot.slane %v3211, 4
  %v3213 = vmax.f32 %v3211, %v3212
  %v3214 = vrot.slane %v3213, 2
  %v3215 = vmax.f32 %v3213, %v3214
  %v3216 = vrot.slane %v3215, 1
  %v3217 = vmax.f32 %v3215, %v3216
  %v3218 = vsel %vm1572, %v1364, -inf
  %v3219 = vrot.slane %v3218, 4
  %v3220 = vmax.f32 %v3218, %v3219
  %v3221 = vrot.slane %v3220, 2
  %v3222 = vmax.f32 %v3220, %v3221
  %v3223 = vrot.slane %v3222, 1
  %v3224 = vmax.f32 %v3222, %v3223
  %v3225 = vsel %vm1572, %v1119, -inf
  %v3226 = vrot.slane %v3225, 4
  %v3227 = vmax.f32 %v3225, %v3226
  %v3228 = vrot.slane %v3227, 2
  %v3229 = vmax.f32 %v3227, %v3228
  %v3230 = vrot.slane %v3229, 1
  %v3231 = vmax.f32 %v3229, %v3230
  %v3232 = vsel %vm1572, %v1365, -inf
  %v3233 = vrot.slane %v3232, 4
  %v3234 = vmax.f32 %v3232, %v3233
  %v3235 = vrot.slane %v3234, 2
  %v3236 = vmax.f32 %v3234, %v3235
  %v3237 = vrot.slane %v3236, 1
  %v3238 = vmax.f32 %v3236, %v3237
  %v3239 = vsel %vm1572, %v1366, -inf
  %v3240 = vrot.slane %v3239, 4
  %v3241 = vmax.f32 %v3239, %v3240
  %v3242 = vrot.slane %v3241, 2
  %v3243 = vmax.f32 %v3241, %v3242
  %v3244 = vrot.slane %v3243, 1
  %v3245 = vmax.f32 %v3243, %v3244
  %v3246 = vsel %vm1572, %v1367, -inf
  %v3247 = vrot.slane %v3246, 4
  %v3248 = vmax.f32 %v3246, %v3247
  %v3249 = vrot.slane %v3248, 2
  %v3250 = vmax.f32 %v3248, %v3249
  %v3251 = vrot.slane %v3250, 1
  %v3252 = vmax.f32 %v3250, %v3251
  %v3253 = vsel %vm1572, %v1120, -inf
  %v3254 = vrot.slane %v3253, 4
  %v3255 = vmax.f32 %v3253, %v3254
  %v3256 = vrot.slane %v3255, 2
  %v3257 = vmax.f32 %v3255, %v3256
  %v3258 = vrot.slane %v3257, 1
  %v3259 = vmax.f32 %v3257, %v3258
  %v3260 = vsel %vm1572, %v1368, -inf
  %v3261 = vrot.slane %v3260, 4
  %v3262 = vmax.f32 %v3260, %v3261
  %v3263 = vrot.slane %v3262, 2
  %v3264 = vmax.f32 %v3262, %v3263
  %v3265 = vrot.slane %v3264, 1
  %v3266 = vmax.f32 %v3264, %v3265
  %v3267 = vsel %vm1572, %v1369, -inf
  %v3268 = vrot.slane %v3267, 4
  %v3269 = vmax.f32 %v3267, %v3268
  %v3270 = vrot.slane %v3269, 2
  %v3271 = vmax.f32 %v3269, %v3270
  %v3272 = vrot.slane %v3271, 1
  %v3273 = vmax.f32 %v3271, %v3272
  %v3274 = vsel %vm1572, %v1370, -inf
  %v3275 = vrot.slane %v3274, 4
  %v3276 = vmax.f32 %v3274, %v3275
  %v3277 = vrot.slane %v3276, 2
  %v3278 = vmax.f32 %v3276, %v3277
  %v3279 = vrot.slane %v3278, 1
  %v3280 = vmax.f32 %v3278, %v3279
  %v3281 = vsel %vm1572, %v1121, -inf
  %v3282 = vrot.slane %v3281, 4
  %v3283 = vmax.f32 %v3281, %v3282
  %v3284 = vrot.slane %v3283, 2
  %v3285 = vmax.f32 %v3283, %v3284
  %v3286 = vrot.slane %v3285, 1
  %v3287 = vmax.f32 %v3285, %v3286
  %v3288 = vsel %vm1572, %v1371, -inf
  %v3289 = vrot.slane %v3288, 4
  %v3290 = vmax.f32 %v3288, %v3289
  %v3291 = vrot.slane %v3290, 2
  %v3292 = vmax.f32 %v3290, %v3291
  %v3293 = vrot.slane %v3292, 1
  %v3294 = vmax.f32 %v3292, %v3293
  %v3295 = vsel %vm1572, %v1372, -inf
  %v3296 = vrot.slane %v3295, 4
  %v3297 = vmax.f32 %v3295, %v3296
  %v3298 = vrot.slane %v3297, 2
  %v3299 = vmax.f32 %v3297, %v3298
  %v3300 = vrot.slane %v3299, 1
  %v3301 = vmax.f32 %v3299, %v3300
  %v3302 = vsel %vm1572, %v1373, -inf
  %v3303 = vrot.slane %v3302, 4
  %v3304 = vmax.f32 %v3302, %v3303
  %v3305 = vrot.slane %v3304, 2
  %v3306 = vmax.f32 %v3304, %v3305
  %v3307 = vrot.slane %v3306, 1
  %v3308 = vmax.f32 %v3306, %v3307
  %v3309 = vsel %vm1572, %v1122, -inf
  %v3310 = vrot.slane %v3309, 4
  %v3311 = vmax.f32 %v3309, %v3310
  %v3312 = vrot.slane %v3311, 2
  %v3313 = vmax.f32 %v3311, %v3312
  %v3314 = vrot.slane %v3313, 1
  %v3315 = vmax.f32 %v3313, %v3314
  %v3316 = vsel %vm1572, %v1374, -inf
  %v3317 = vrot.slane %v3316, 4
  %v3318 = vmax.f32 %v3316, %v3317
  %v3319 = vrot.slane %v3318, 2
  %v3320 = vmax.f32 %v3318, %v3319
  %v3321 = vrot.slane %v3320, 1
  %v3322 = vmax.f32 %v3320, %v3321
  %v3323 = vsel %vm1572, %v1375, -inf
  %v3324 = vrot.slane %v3323, 4
  %v3325 = vmax.f32 %v3323, %v3324
  %v3326 = vrot.slane %v3325, 2
  %v3327 = vmax.f32 %v3325, %v3326
  %v3328 = vrot.slane %v3327, 1
  %v3329 = vmax.f32 %v3327, %v3328
  %v3330 = vsel %vm1572, %v1376, -inf
  %v3331 = vrot.slane %v3330, 4
  %v3332 = vmax.f32 %v3330, %v3331
  %v3333 = vrot.slane %v3332, 2
  %v3334 = vmax.f32 %v3332, %v3333
  %v3335 = vrot.slane %v3334, 1
  %v3336 = vmax.f32 %v3334, %v3335
  %v3337 = vsel %vm1572, %v1123, -inf
  %v3338 = vrot.slane %v3337, 4
  %v3339 = vmax.f32 %v3337, %v3338
  %v3340 = vrot.slane %v3339, 2
  %v3341 = vmax.f32 %v3339, %v3340
  %v3342 = vrot.slane %v3341, 1
  %v3343 = vmax.f32 %v3341, %v3342
  %v3344 = vsel %vm1572, %v1377, -inf
  %v3345 = vrot.slane %v3344, 4
  %v3346 = vmax.f32 %v3344, %v3345
  %v3347 = vrot.slane %v3346, 2
  %v3348 = vmax.f32 %v3346, %v3347
  %v3349 = vrot.slane %v3348, 1
  %v3350 = vmax.f32 %v3348, %v3349
  %v3351 = vsel %vm1572, %v1378, -inf
  %v3352 = vrot.slane %v3351, 4
  %v3353 = vmax.f32 %v3351, %v3352
  %v3354 = vrot.slane %v3353, 2
  %v3355 = vmax.f32 %v3353, %v3354
  %v3356 = vrot.slane %v3355, 1
  %v3357 = vmax.f32 %v3355, %v3356
  %v3358 = vsel %vm1572, %v1379, -inf
  %v3359 = vrot.slane %v3358, 4
  %v3360 = vmax.f32 %v3358, %v3359
  %v3361 = vrot.slane %v3360, 2
  %v3362 = vmax.f32 %v3360, %v3361
  %v3363 = vrot.slane %v3362, 1
  %v3364 = vmax.f32 %v3362, %v3363
  %v3365 = vsel %vm508, %v1579, -inf
  %v3366 = vsel %vm508, %v1635, -inf
  %v3367 = vmax.f32 %v3365, %v3366
  %v3368 = vsel %vm508, %v1586, -inf
  %v3369 = vsel %vm508, %v1642, -inf
  %v3370 = vmax.f32 %v3368, %v3369
  %v3371 = vsel %vm508, %v1593, -inf
  %v3372 = vsel %vm508, %v1649, -inf
  %v3373 = vmax.f32 %v3371, %v3372
  %v3374 = vsel %vm508, %v1600, -inf
  %v3375 = vsel %vm508, %v1656, -inf
  %v3376 = vmax.f32 %v3374, %v3375
  %v3377 = vsel %vm508, %v1607, -inf
  %v3378 = vsel %vm508, %v1663, -inf
  %v3379 = vmax.f32 %v3377, %v3378
  %v3380 = vsel %vm508, %v1614, -inf
  %v3381 = vsel %vm508, %v1670, -inf
  %v3382 = vmax.f32 %v3380, %v3381
  %v3383 = vsel %vm508, %v1621, -inf
  %v3384 = vsel %vm508, %v1677, -inf
  %v3385 = vmax.f32 %v3383, %v3384
  %v3386 = vsel %vm508, %v1628, -inf
  %v3387 = vsel %vm508, %v1684, -inf
  %v3388 = vmax.f32 %v3386, %v3387
  %v3389 = vsel %vm508, %v1691, -inf
  %v3390 = vsel %vm508, %v1747, -inf
  %v3391 = vmax.f32 %v3389, %v3390
  %v3392 = vsel %vm508, %v1698, -inf
  %v3393 = vsel %vm508, %v1754, -inf
  %v3394 = vmax.f32 %v3392, %v3393
  %v3395 = vsel %vm508, %v1705, -inf
  %v3396 = vsel %vm508, %v1761, -inf
  %v3397 = vmax.f32 %v3395, %v3396
  %v3398 = vsel %vm508, %v1712, -inf
  %v3399 = vsel %vm508, %v1768, -inf
  %v3400 = vmax.f32 %v3398, %v3399
  %v3401 = vsel %vm508, %v1719, -inf
  %v3402 = vsel %vm508, %v1775, -inf
  %v3403 = vmax.f32 %v3401, %v3402
  %v3404 = vsel %vm508, %v1726, -inf
  %v3405 = vsel %vm508, %v1782, -inf
  %v3406 = vmax.f32 %v3404, %v3405
  %v3407 = vsel %vm508, %v1733, -inf
  %v3408 = vsel %vm508, %v1789, -inf
  %v3409 = vmax.f32 %v3407, %v3408
  %v3410 = vsel %vm508, %v1740, -inf
  %v3411 = vsel %vm508, %v1796, -inf
  %v3412 = vmax.f32 %v3410, %v3411
  %v3413 = vsel %vm508, %v1803, -inf
  %v3414 = vsel %vm508, %v1859, -inf
  %v3415 = vmax.f32 %v3413, %v3414
  %v3416 = vsel %vm508, %v1810, -inf
  %v3417 = vsel %vm508, %v1866, -inf
  %v3418 = vmax.f32 %v3416, %v3417
  %v3419 = vsel %vm508, %v1817, -inf
  %v3420 = vsel %vm508, %v1873, -inf
  %v3421 = vmax.f32 %v3419, %v3420
  %v3422 = vsel %vm508, %v1824, -inf
  %v3423 = vsel %vm508, %v1880, -inf
  %v3424 = vmax.f32 %v3422, %v3423
  %v3425 = vsel %vm508, %v1831, -inf
  %v3426 = vsel %vm508, %v1887, -inf
  %v3427 = vmax.f32 %v3425, %v3426
  %v3428 = vsel %vm508, %v1838, -inf
  %v3429 = vsel %vm508, %v1894, -inf
  %v3430 = vmax.f32 %v3428, %v3429
  %v3431 = vsel %vm508, %v1845, -inf
  %v3432 = vsel %vm508, %v1901, -inf
  %v3433 = vmax.f32 %v3431, %v3432
  %v3434 = vsel %vm508, %v1852, -inf
  %v3435 = vsel %vm508, %v1908, -inf
  %v3436 = vmax.f32 %v3434, %v3435
  %v3437 = vsel %vm508, %v1915, -inf
  %v3438 = vsel %vm508, %v1971, -inf
  %v3439 = vmax.f32 %v3437, %v3438
  %v3440 = vsel %vm508, %v1922, -inf
  %v3441 = vsel %vm508, %v1978, -inf
  %v3442 = vmax.f32 %v3440, %v3441
  %v3443 = vsel %vm508, %v1929, -inf
  %v3444 = vsel %vm508, %v1985, -inf
  %v3445 = vmax.f32 %v3443, %v3444
  %v3446 = vsel %vm508, %v1936, -inf
  %v3447 = vsel %vm508, %v1992, -inf
  %v3448 = vmax.f32 %v3446, %v3447
  %v3449 = vsel %vm508, %v1943, -inf
  %v3450 = vsel %vm508, %v1999, -inf
  %v3451 = vmax.f32 %v3449, %v3450
  %v3452 = vsel %vm508, %v1950, -inf
  %v3453 = vsel %vm508, %v2006, -inf
  %v3454 = vmax.f32 %v3452, %v3453
  %v3455 = vsel %vm508, %v1957, -inf
  %v3456 = vsel %vm508, %v2013, -inf
  %v3457 = vmax.f32 %v3455, %v3456
  %v3458 = vsel %vm508, %v1964, -inf
  %v3459 = vsel %vm508, %v2020, -inf
  %v3460 = vmax.f32 %v3458, %v3459
  %v3461 = vsel %vm508, %v2027, -inf
  %v3462 = vsel %vm508, %v2083, -inf
  %v3463 = vmax.f32 %v3461, %v3462
  %v3464 = vsel %vm508, %v2034, -inf
  %v3465 = vsel %vm508, %v2090, -inf
  %v3466 = vmax.f32 %v3464, %v3465
  %v3467 = vsel %vm508, %v2041, -inf
  %v3468 = vsel %vm508, %v2097, -inf
  %v3469 = vmax.f32 %v3467, %v3468
  %v3470 = vsel %vm508, %v2048, -inf
  %v3471 = vsel %vm508, %v2104, -inf
  %v3472 = vmax.f32 %v3470, %v3471
  %v3473 = vsel %vm508, %v2055, -inf
  %v3474 = vsel %vm508, %v2111, -inf
  %v3475 = vmax.f32 %v3473, %v3474
  %v3476 = vsel %vm508, %v2062, -inf
  %v3477 = vsel %vm508, %v2118, -inf
  %v3478 = vmax.f32 %v3476, %v3477
  %v3479 = vsel %vm508, %v2069, -inf
  %v3480 = vsel %vm508, %v2125, -inf
  %v3481 = vmax.f32 %v3479, %v3480
  %v3482 = vsel %vm508, %v2076, -inf
  %v3483 = vsel %vm508, %v2132, -inf
  %v3484 = vmax.f32 %v3482, %v3483
  %v3485 = vsel %vm508, %v2139, -inf
  %v3486 = vsel %vm508, %v2195, -inf
  %v3487 = vmax.f32 %v3485, %v3486
  %v3488 = vsel %vm508, %v2146, -inf
  %v3489 = vsel %vm508, %v2202, -inf
  %v3490 = vmax.f32 %v3488, %v3489
  %v3491 = vsel %vm508, %v2153, -inf
  %v3492 = vsel %vm508, %v2209, -inf
  %v3493 = vmax.f32 %v3491, %v3492
  %v3494 = vsel %vm508, %v2160, -inf
  %v3495 = vsel %vm508, %v2216, -inf
  %v3496 = vmax.f32 %v3494, %v3495
  %v3497 = vsel %vm508, %v2167, -inf
  %v3498 = vsel %vm508, %v2223, -inf
  %v3499 = vmax.f32 %v3497, %v3498
  %v3500 = vsel %vm508, %v2174, -inf
  %v3501 = vsel %vm508, %v2230, -inf
  %v3502 = vmax.f32 %v3500, %v3501
  %v3503 = vsel %vm508, %v2181, -inf
  %v3504 = vsel %vm508, %v2237, -inf
  %v3505 = vmax.f32 %v3503, %v3504
  %v3506 = vsel %vm508, %v2188, -inf
  %v3507 = vsel %vm508, %v2244, -inf
  %v3508 = vmax.f32 %v3506, %v3507
  %v3509 = vsel %vm508, %v2251, -inf
  %v3510 = vsel %vm508, %v2307, -inf
  %v3511 = vmax.f32 %v3509, %v3510
  %v3512 = vsel %vm508, %v2258, -inf
  %v3513 = vsel %vm508, %v2314, -inf
  %v3514 = vmax.f32 %v3512, %v3513
  %v3515 = vsel %vm508, %v2265, -inf
  %v3516 = vsel %vm508, %v2321, -inf
  %v3517 = vmax.f32 %v3515, %v3516
  %v3518 = vsel %vm508, %v2272, -inf
  %v3519 = vsel %vm508, %v2328, -inf
  %v3520 = vmax.f32 %v3518, %v3519
  %v3521 = vsel %vm508, %v2279, -inf
  %v3522 = vsel %vm508, %v2335, -inf
  %v3523 = vmax.f32 %v3521, %v3522
  %v3524 = vsel %vm508, %v2286, -inf
  %v3525 = vsel %vm508, %v2342, -inf
  %v3526 = vmax.f32 %v3524, %v3525
  %v3527 = vsel %vm508, %v2293, -inf
  %v3528 = vsel %vm508, %v2349, -inf
  %v3529 = vmax.f32 %v3527, %v3528
  %v3530 = vsel %vm508, %v2300, -inf
  %v3531 = vsel %vm508, %v2356, -inf
  %v3532 = vmax.f32 %v3530, %v3531
  %v3533 = vsel %vm508, %v2363, -inf
  %v3534 = vsel %vm508, %v2419, -inf
  %v3535 = vmax.f32 %v3533, %v3534
  %v3536 = vsel %vm508, %v2370, -inf
  %v3537 = vsel %vm508, %v2426, -inf
  %v3538 = vmax.f32 %v3536, %v3537
  %v3539 = vsel %vm508, %v2377, -inf
  %v3540 = vsel %vm508, %v2433, -inf
  %v3541 = vmax.f32 %v3539, %v3540
  %v3542 = vsel %vm508, %v2384, -inf
  %v3543 = vsel %vm508, %v2440, -inf
  %v3544 = vmax.f32 %v3542, %v3543
  %v3545 = vsel %vm508, %v2391, -inf
  %v3546 = vsel %vm508, %v2447, -inf
  %v3547 = vmax.f32 %v3545, %v3546
  %v3548 = vsel %vm508, %v2398, -inf
  %v3549 = vsel %vm508, %v2454, -inf
  %v3550 = vmax.f32 %v3548, %v3549
  %v3551 = vsel %vm508, %v2405, -inf
  %v3552 = vsel %vm508, %v2461, -inf
  %v3553 = vmax.f32 %v3551, %v3552
  %v3554 = vsel %vm508, %v2412, -inf
  %v3555 = vsel %vm508, %v2468, -inf
  %v3556 = vmax.f32 %v3554, %v3555
  %v3557 = vsel %vm508, %v2475, -inf
  %v3558 = vsel %vm508, %v2531, -inf
  %v3559 = vmax.f32 %v3557, %v3558
  %v3560 = vsel %vm508, %v2482, -inf
  %v3561 = vsel %vm508, %v2538, -inf
  %v3562 = vmax.f32 %v3560, %v3561
  %v3563 = vsel %vm508, %v2489, -inf
  %v3564 = vsel %vm508, %v2545, -inf
  %v3565 = vmax.f32 %v3563, %v3564
  %v3566 = vsel %vm508, %v2496, -inf
  %v3567 = vsel %vm508, %v2552, -inf
  %v3568 = vmax.f32 %v3566, %v3567
  %v3569 = vsel %vm508, %v2503, -inf
  %v3570 = vsel %vm508, %v2559, -inf
  %v3571 = vmax.f32 %v3569, %v3570
  %v3572 = vsel %vm508, %v2510, -inf
  %v3573 = vsel %vm508, %v2566, -inf
  %v3574 = vmax.f32 %v3572, %v3573
  %v3575 = vsel %vm508, %v2517, -inf
  %v3576 = vsel %vm508, %v2573, -inf
  %v3577 = vmax.f32 %v3575, %v3576
  %v3578 = vsel %vm508, %v2524, -inf
  %v3579 = vsel %vm508, %v2580, -inf
  %v3580 = vmax.f32 %v3578, %v3579
  %v3581 = vsel %vm508, %v2587, -inf
  %v3582 = vsel %vm508, %v2643, -inf
  %v3583 = vmax.f32 %v3581, %v3582
  %v3584 = vsel %vm508, %v2594, -inf
  %v3585 = vsel %vm508, %v2650, -inf
  %v3586 = vmax.f32 %v3584, %v3585
  %v3587 = vsel %vm508, %v2601, -inf
  %v3588 = vsel %vm508, %v2657, -inf
  %v3589 = vmax.f32 %v3587, %v3588
  %v3590 = vsel %vm508, %v2608, -inf
  %v3591 = vsel %vm508, %v2664, -inf
  %v3592 = vmax.f32 %v3590, %v3591
  %v3593 = vsel %vm508, %v2615, -inf
  %v3594 = vsel %vm508, %v2671, -inf
  %v3595 = vmax.f32 %v3593, %v3594
  %v3596 = vsel %vm508, %v2622, -inf
  %v3597 = vsel %vm508, %v2678, -inf
  %v3598 = vmax.f32 %v3596, %v3597
  %v3599 = vsel %vm508, %v2629, -inf
  %v3600 = vsel %vm508, %v2685, -inf
  %v3601 = vmax.f32 %v3599, %v3600
  %v3602 = vsel %vm508, %v2636, -inf
  %v3603 = vsel %vm508, %v2692, -inf
  %v3604 = vmax.f32 %v3602, %v3603
  %v3605 = vsel %vm508, %v2699, -inf
  %v3606 = vsel %vm508, %v2755, -inf
  %v3607 = vmax.f32 %v3605, %v3606
  %v3608 = vsel %vm508, %v2706, -inf
  %v3609 = vsel %vm508, %v2762, -inf
  %v3610 = vmax.f32 %v3608, %v3609
  %v3611 = vsel %vm508, %v2713, -inf
  %v3612 = vsel %vm508, %v2769, -inf
  %v3613 = vmax.f32 %v3611, %v3612
  %v3614 = vsel %vm508, %v2720, -inf
  %v3615 = vsel %vm508, %v2776, -inf
  %v3616 = vmax.f32 %v3614, %v3615
  %v3617 = vsel %vm508, %v2727, -inf
  %v3618 = vsel %vm508, %v2783, -inf
  %v3619 = vmax.f32 %v3617, %v3618
  %v3620 = vsel %vm508, %v2734, -inf
  %v3621 = vsel %vm508, %v2790, -inf
  %v3622 = vmax.f32 %v3620, %v3621
  %v3623 = vsel %vm508, %v2741, -inf
  %v3624 = vsel %vm508, %v2797, -inf
  %v3625 = vmax.f32 %v3623, %v3624
  %v3626 = vsel %vm508, %v2748, -inf
  %v3627 = vsel %vm508, %v2804, -inf
  %v3628 = vmax.f32 %v3626, %v3627
  %v3629 = vsel %vm508, %v2811, -inf
  %v3630 = vsel %vm508, %v2867, -inf
  %v3631 = vmax.f32 %v3629, %v3630
  %v3632 = vsel %vm508, %v2818, -inf
  %v3633 = vsel %vm508, %v2874, -inf
  %v3634 = vmax.f32 %v3632, %v3633
  %v3635 = vsel %vm508, %v2825, -inf
  %v3636 = vsel %vm508, %v2881, -inf
  %v3637 = vmax.f32 %v3635, %v3636
  %v3638 = vsel %vm508, %v2832, -inf
  %v3639 = vsel %vm508, %v2888, -inf
  %v3640 = vmax.f32 %v3638, %v3639
  %v3641 = vsel %vm508, %v2839, -inf
  %v3642 = vsel %vm508, %v2895, -inf
  %v3643 = vmax.f32 %v3641, %v3642
  %v3644 = vsel %vm508, %v2846, -inf
  %v3645 = vsel %vm508, %v2902, -inf
  %v3646 = vmax.f32 %v3644, %v3645
  %v3647 = vsel %vm508, %v2853, -inf
  %v3648 = vsel %vm508, %v2909, -inf
  %v3649 = vmax.f32 %v3647, %v3648
  %v3650 = vsel %vm508, %v2860, -inf
  %v3651 = vsel %vm508, %v2916, -inf
  %v3652 = vmax.f32 %v3650, %v3651
  %v3653 = vsel %vm508, %v2923, -inf
  %v3654 = vsel %vm508, %v2979, -inf
  %v3655 = vmax.f32 %v3653, %v3654
  %v3656 = vsel %vm508, %v2930, -inf
  %v3657 = vsel %vm508, %v2986, -inf
  %v3658 = vmax.f32 %v3656, %v3657
  %v3659 = vsel %vm508, %v2937, -inf
  %v3660 = vsel %vm508, %v2993, -inf
  %v3661 = vmax.f32 %v3659, %v3660
  %v3662 = vsel %vm508, %v2944, -inf
  %v3663 = vsel %vm508, %v3000, -inf
  %v3664 = vmax.f32 %v3662, %v3663
  %v3665 = vsel %vm508, %v2951, -inf
  %v3666 = vsel %vm508, %v3007, -inf
  %v3667 = vmax.f32 %v3665, %v3666
  %v3668 = vsel %vm508, %v2958, -inf
  %v3669 = vsel %vm508, %v3014, -inf
  %v3670 = vmax.f32 %v3668, %v3669
  %v3671 = vsel %vm508, %v2965, -inf
  %v3672 = vsel %vm508, %v3021, -inf
  %v3673 = vmax.f32 %v3671, %v3672
  %v3674 = vsel %vm508, %v2972, -inf
  %v3675 = vsel %vm508, %v3028, -inf
  %v3676 = vmax.f32 %v3674, %v3675
  %v3677 = vsel %vm508, %v3035, -inf
  %v3678 = vsel %vm508, %v3091, -inf
  %v3679 = vmax.f32 %v3677, %v3678
  %v3680 = vsel %vm508, %v3042, -inf
  %v3681 = vsel %vm508, %v3098, -inf
  %v3682 = vmax.f32 %v3680, %v3681
  %v3683 = vsel %vm508, %v3049, -inf
  %v3684 = vsel %vm508, %v3105, -inf
  %v3685 = vmax.f32 %v3683, %v3684
  %v3686 = vsel %vm508, %v3056, -inf
  %v3687 = vsel %vm508, %v3112, -inf
  %v3688 = vmax.f32 %v3686, %v3687
  %v3689 = vsel %vm508, %v3063, -inf
  %v3690 = vsel %vm508, %v3119, -inf
  %v3691 = vmax.f32 %v3689, %v3690
  %v3692 = vsel %vm508, %v3070, -inf
  %v3693 = vsel %vm508, %v3126, -inf
  %v3694 = vmax.f32 %v3692, %v3693
  %v3695 = vsel %vm508, %v3077, -inf
  %v3696 = vsel %vm508, %v3133, -inf
  %v3697 = vmax.f32 %v3695, %v3696
  %v3698 = vsel %vm508, %v3084, -inf
  %v3699 = vsel %vm508, %v3140, -inf
  %v3700 = vmax.f32 %v3698, %v3699
  %v3701 = vsel %vm508, %v3147, -inf
  %v3702 = vsel %vm508, %v3203, -inf
  %v3703 = vmax.f32 %v3701, %v3702
  %v3704 = vsel %vm508, %v3154, -inf
  %v3705 = vsel %vm508, %v3210, -inf
  %v3706 = vmax.f32 %v3704, %v3705
  %v3707 = vsel %vm508, %v3161, -inf
  %v3708 = vsel %vm508, %v3217, -inf
  %v3709 = vmax.f32 %v3707, %v3708
  %v3710 = vsel %vm508, %v3168, -inf
  %v3711 = vsel %vm508, %v3224, -inf
  %v3712 = vmax.f32 %v3710, %v3711
  %v3713 = vsel %vm508, %v3175, -inf
  %v3714 = vsel %vm508, %v3231, -inf
  %v3715 = vmax.f32 %v3713, %v3714
  %v3716 = vsel %vm508, %v3182, -inf
  %v3717 = vsel %vm508, %v3238, -inf
  %v3718 = vmax.f32 %v3716, %v3717
  %v3719 = vsel %vm508, %v3189, -inf
  %v3720 = vsel %vm508, %v3245, -inf
  %v3721 = vmax.f32 %v3719, %v3720
  %v3722 = vsel %vm508, %v3196, -inf
  %v3723 = vsel %vm508, %v3252, -inf
  %v3724 = vmax.f32 %v3722, %v3723
  %v3725 = vsel %vm508, %v3259, -inf
  %v3726 = vsel %vm508, %v3315, -inf
  %v3727 = vmax.f32 %v3725, %v3726
  %v3728 = vsel %vm508, %v3266, -inf
  %v3729 = vsel %vm508, %v3322, -inf
  %v3730 = vmax.f32 %v3728, %v3729
  %v3731 = vsel %vm508, %v3273, -inf
  %v3732 = vsel %vm508, %v3329, -inf
  %v3733 = vmax.f32 %v3731, %v3732
  %v3734 = vsel %vm508, %v3280, -inf
  %v3735 = vsel %vm508, %v3336, -inf
  %v3736 = vmax.f32 %v3734, %v3735
  %v3737 = vsel %vm508, %v3287, -inf
  %v3738 = vsel %vm508, %v3343, -inf
  %v3739 = vmax.f32 %v3737, %v3738
  %v3740 = vsel %vm508, %v3294, -inf
  %v3741 = vsel %vm508, %v3350, -inf
  %v3742 = vmax.f32 %v3740, %v3741
  %v3743 = vsel %vm508, %v3301, -inf
  %v3744 = vsel %vm508, %v3357, -inf
  %v3745 = vmax.f32 %v3743, %v3744
  %v3746 = vsel %vm508, %v3308, -inf
  %v3747 = vsel %vm508, %v3364, -inf
  %v3748 = vmax.f32 %v3746, %v3747
  %3749 = vst.msk [vmem:[#allocation2] sm:$0xff] %vm508, 0.0
  %3750 = vst.msk [vmem:[#allocation2 + $0x8] sm:$0x3] %vm1572, 0.0
  %3751 = vst.msk [vmem:[#allocation2 + $0xa0] sm:$0xff] %vm508, 0.0
  %3752 = vst.msk [vmem:[#allocation2 + $0xa8] sm:$0x3] %vm1572, 0.0
  %s3753 = scalar_lea.vmem [#allocation2], 144
  %3754 = vst.msk [vmem:[%s3753] sm:$0xff] %vm508, 0.0
  %3755 = vst.msk [vmem:[%s3753 + $0x8] sm:$0x3] %vm1572, 0.0
  %3756 = vst.msk [vmem:[%s3753 + $0xa0] sm:$0xff] %vm508, 0.0
  %3757 = vst.msk [vmem:[%s3753 + $0xa8] sm:$0x3] %vm1572, 0.0
  %s3758 = scalar_lea.vmem [#allocation2], 16
  %vm3759 = vcmask 237568
  %3760 = vst.msk [vmem:[%s3758] sm:$0x1] %vm3759, 0.0
  %3761 = vst.msk [vmem:[%s3758 + $0x10] sm:$0x1] %vm3759, 0.0
  %3762 = vst.msk [vmem:[%s3758 + $0x20] sm:$0x1] %vm3759, 0.0
  %3763 = vst.msk [vmem:[%s3758 + $0x30] sm:$0x1] %vm3759, 0.0
  %3764 = vst.msk [vmem:[%s3758 + $0x40] sm:$0x1] %vm3759, 0.0
  %3765 = vst.msk [vmem:[%s3758 + $0x50] sm:$0x1] %vm3759, 0.0
  %3766 = vst.msk [vmem:[%s3758 + $0x60] sm:$0x1] %vm3759, 0.0
  %3767 = vst.msk [vmem:[%s3758 + $0x70] sm:$0x1] %vm3759, 0.0
  %3768 = vst.msk [vmem:[%s3758 + $0xa0] sm:$0x1] %vm3759, 0.0
  %3769 = vst.msk [vmem:[%s3758 + $0xb0] sm:$0x1] %vm3759, 0.0
  %3770 = vst.msk [vmem:[%s3758 + $0xc0] sm:$0x1] %vm3759, 0.0
  %3771 = vst.msk [vmem:[%s3758 + $0xd0] sm:$0x1] %vm3759, 0.0
  %3772 = vst.msk [vmem:[%s3758 + $0xe0] sm:$0x1] %vm3759, 0.0
  %3773 = vst.msk [vmem:[%s3758 + $0xf0] sm:$0x1] %vm3759, 0.0
  %3774 = vst.msk [vmem:[%s3758 + $0x100] sm:$0x1] %vm3759, 0.0
  %3775 = vst.msk [vmem:[%s3758 + $0x110] sm:$0x1] %vm3759, 0.0
  %3776 = vst.msk [vmem:[%s3758 + $0x9] sm:$0x1] %vm3759, 0.0
  %3777 = vst.msk [vmem:[%s3758 + $0x19] sm:$0x1] %vm3759, 0.0
  %3778 = vst.msk [vmem:[%s3758 + $0x29] sm:$0x1] %vm3759, 0.0
  %3779 = vst.msk [vmem:[%s3758 + $0x39] sm:$0x1] %vm3759, 0.0
  %3780 = vst.msk [vmem:[%s3758 + $0x49] sm:$0x1] %vm3759, 0.0
  %3781 = vst.msk [vmem:[%s3758 + $0x59] sm:$0x1] %vm3759, 0.0
  %3782 = vst.msk [vmem:[%s3758 + $0x69] sm:$0x1] %vm3759, 0.0
  %3783 = vst.msk [vmem:[%s3758 + $0x79] sm:$0x1] %vm3759, 0.0
  %3784 = vst.msk [vmem:[%s3758 + $0xa9] sm:$0x1] %vm3759, 0.0
  %3785 = vst.msk [vmem:[%s3758 + $0xb9] sm:$0x1] %vm3759, 0.0
  %3786 = vst.msk [vmem:[%s3758 + $0xc9] sm:$0x1] %vm3759, 0.0
  %3787 = vst.msk [vmem:[%s3758 + $0xd9] sm:$0x1] %vm3759, 0.0
  %3788 = vst.msk [vmem:[%s3758 + $0xe9] sm:$0x1] %vm3759, 0.0
  %3789 = vst.msk [vmem:[%s3758 + $0xf9] sm:$0x1] %vm3759, 0.0
  %3790 = vst.msk [vmem:[%s3758 + $0x109] sm:$0x1] %vm3759, 0.0
  %3791 = vst.msk [vmem:[%s3758 + $0x119] sm:$0x1] %vm3759, 0.0
  %vm3920 = vcmask 1041409
  %v3921 = vsel %vm3920, %v3370, %v3367
  %vm3922 = vcmask 1042434
  %v3923 = vsel %vm3922, %v3373, %v3921
  %vm3924 = vcmask 1043459
  %v3925 = vsel %vm3924, %v3376, %v3923
  %vm3926 = vcmask 1044484
  %v3927 = vsel %vm3926, %v3379, %v3925
  %vm3928 = vcmask 1045509
  %v3929 = vsel %vm3928, %v3382, %v3927
  %vm3930 = vcmask 1046534
  %v3931 = vsel %vm3930, %v3385, %v3929
  %vm3932 = vcmask 1047559
  %v3933 = vsel %vm3932, %v3388, %v3931
  %v3934 = vsel %vm3920, %v3394, %v3391
  %v3935 = vsel %vm3922, %v3397, %v3934
  %v3936 = vsel %vm3924, %v3400, %v3935
  %v3937 = vsel %vm3926, %v3403, %v3936
  %v3938 = vsel %vm3928, %v3406, %v3937
  %v3939 = vsel %vm3930, %v3409, %v3938
  %v3940 = vsel %vm3932, %v3412, %v3939
  %v3941 = vsel %vm3920, %v3418, %v3415
  %v3942 = vsel %vm3922, %v3421, %v3941
  %v3943 = vsel %vm3924, %v3424, %v3942
  %v3944 = vsel %vm3926, %v3427, %v3943
  %v3945 = vsel %vm3928, %v3430, %v3944
  %v3946 = vsel %vm3930, %v3433, %v3945
  %v3947 = vsel %vm3932, %v3436, %v3946
  %v3948 = vsel %vm3920, %v3442, %v3439
  %v3949 = vsel %vm3922, %v3445, %v3948
  %v3950 = vsel %vm3924, %v3448, %v3949
  %v3951 = vsel %vm3926, %v3451, %v3950
  %v3952 = vsel %vm3928, %v3454, %v3951
  %v3953 = vsel %vm3930, %v3457, %v3952
  %v3954 = vsel %vm3932, %v3460, %v3953
  %v3955 = vsel %vm3920, %v3466, %v3463
  %v3956 = vsel %vm3922, %v3469, %v3955
  %v3957 = vsel %vm3924, %v3472, %v3956
  %v3958 = vsel %vm3926, %v3475, %v3957
  %v3959 = vsel %vm3928, %v3478, %v3958
  %v3960 = vsel %vm3930, %v3481, %v3959
  %v3961 = vsel %vm3932, %v3484, %v3960
  %v3962 = vsel %vm3920, %v3490, %v3487
  %v3963 = vsel %vm3922, %v3493, %v3962
  %v3964 = vsel %vm3924, %v3496, %v3963
  %v3965 = vsel %vm3926, %v3499, %v3964
  %v3966 = vsel %vm3928, %v3502, %v3965
  %v3967 = vsel %vm3930, %v3505, %v3966
  %v3968 = vsel %vm3932, %v3508, %v3967
  %v3969 = vsel %vm3920, %v3514, %v3511
  %v3970 = vsel %vm3922, %v3517, %v3969
  %v3971 = vsel %vm3924, %v3520, %v3970
  %v3972 = vsel %vm3926, %v3523, %v3971
  %v3973 = vsel %vm3928, %v3526, %v3972
  %v3974 = vsel %vm3930, %v3529, %v3973
  %v3975 = vsel %vm3932, %v3532, %v3974
  %v3976 = vsel %vm3920, %v3538, %v3535
  %v3977 = vsel %vm3922, %v3541, %v3976
  %v3978 = vsel %vm3924, %v3544, %v3977
  %v3979 = vsel %vm3926, %v3547, %v3978
  %v3980 = vsel %vm3928, %v3550, %v3979
  %v3981 = vsel %vm3930, %v3553, %v3980
  %v3982 = vsel %vm3932, %v3556, %v3981
  %v3983 = vsel %vm3920, %v3562, %v3559
  %v3984 = vsel %vm3922, %v3565, %v3983
  %v3985 = vsel %vm3924, %v3568, %v3984
  %v3986 = vsel %vm3926, %v3571, %v3985
  %v3987 = vsel %vm3928, %v3574, %v3986
  %v3988 = vsel %vm3930, %v3577, %v3987
  %v3989 = vsel %vm3932, %v3580, %v3988
  %v3990 = vsel %vm3920, %v3586, %v3583
  %v3991 = vsel %vm3922, %v3589, %v3990
  %v3992 = vsel %vm3924, %v3592, %v3991
  %v3993 = vsel %vm3926, %v3595, %v3992
  %v3994 = vsel %vm3928, %v3598, %v3993
  %v3995 = vsel %vm3930, %v3601, %v3994
  %v3996 = vsel %vm3932, %v3604, %v3995
  %v3997 = vsel %vm3920, %v3610, %v3607
  %v3998 = vsel %vm3922, %v3613, %v3997
  %v3999 = vsel %vm3924, %v3616, %v3998
  %v4000 = vsel %vm3926, %v3619, %v3999
  %v4001 = vsel %vm3928, %v3622, %v4000
  %v4002 = vsel %vm3930, %v3625, %v4001
  %v4003 = vsel %vm3932, %v3628, %v4002
  %v4004 = vsel %vm3920, %v3634, %v3631
  %v4005 = vsel %vm3922, %v3637, %v4004
  %v4006 = vsel %vm3924, %v3640, %v4005
  %v4007 = vsel %vm3926, %v3643, %v4006
  %v4008 = vsel %vm3928, %v3646, %v4007
  %v4009 = vsel %vm3930, %v3649, %v4008
  %v4010 = vsel %vm3932, %v3652, %v4009
  %v4011 = vsel %vm3920, %v3658, %v3655
  %v4012 = vsel %vm3922, %v3661, %v4011
  %v4013 = vsel %vm3924, %v3664, %v4012
  %v4014 = vsel %vm3926, %v3667, %v4013
  %v4015 = vsel %vm3928, %v3670, %v4014
  %v4016 = vsel %vm3930, %v3673, %v4015
  %v4017 = vsel %vm3932, %v3676, %v4016
  %v4018 = vsel %vm3920, %v3682, %v3679
  %v4019 = vsel %vm3922, %v3685, %v4018
  %v4020 = vsel %vm3924, %v3688, %v4019
  %v4021 = vsel %vm3926, %v3691, %v4020
  %v4022 = vsel %vm3928, %v3694, %v4021
  %v4023 = vsel %vm3930, %v3697, %v4022
  %v4024 = vsel %vm3932, %v3700, %v4023
  %v4025 = vsel %vm3920, %v3706, %v3703
  %v4026 = vsel %vm3922, %v3709, %v4025
  %v4027 = vsel %vm3924, %v3712, %v4026
  %v4028 = vsel %vm3926, %v3715, %v4027
  %v4029 = vsel %vm3928, %v3718, %v4028
  %v4030 = vsel %vm3930, %v3721, %v4029
  %v4031 = vsel %vm3932, %v3724, %v4030
  %v4032 = vsel %vm3920, %v3730, %v3727
  %v4033 = vsel %vm3922, %v3733, %v4032
  %v4034 = vsel %vm3924, %v3736, %v4033
  %v4035 = vsel %vm3926, %v3739, %v4034
  %v4036 = vsel %vm3928, %v3742, %v4035
  %v4037 = vsel %vm3930, %v3745, %v4036
  %v4038 = vsel %vm3932, %v3748, %v4037
  %4055 = vst.msk [vmem:[%s3758 + $0x1] sm:$0xff] %vm508, %v3933
  %4056 = vst.msk [vmem:[%s3758 + $0x11] sm:$0xff] %vm508, %v3940
  %4057 = vst.msk [vmem:[%s3758 + $0x21] sm:$0xff] %vm508, %v3947
  %4058 = vst.msk [vmem:[%s3758 + $0x31] sm:$0xff] %vm508, %v3954
  %4059 = vst.msk [vmem:[%s3758 + $0x41] sm:$0xff] %vm508, %v3961
  %4060 = vst.msk [vmem:[%s3758 + $0x51] sm:$0xff] %vm508, %v3968
  %4061 = vst.msk [vmem:[%s3758 + $0x61] sm:$0xff] %vm508, %v3975
  %4062 = vst.msk [vmem:[%s3758 + $0x71] sm:$0xff] %vm508, %v3982
  %4063 = vst.msk [vmem:[%s3758 + $0xa1] sm:$0xff] %vm508, %v3989
  %4064 = vst.msk [vmem:[%s3758 + $0xb1] sm:$0xff] %vm508, %v3996
  %4065 = vst.msk [vmem:[%s3758 + $0xc1] sm:$0xff] %vm508, %v4003
  %4066 = vst.msk [vmem:[%s3758 + $0xd1] sm:$0xff] %vm508, %v4010
  %4067 = vst.msk [vmem:[%s3758 + $0xe1] sm:$0xff] %vm508, %v4017
  %4068 = vst.msk [vmem:[%s3758 + $0xf1] sm:$0xff] %vm508, %v4024
  %4069 = vst.msk [vmem:[%s3758 + $0x101] sm:$0xff] %vm508, %v4031
  %4070 = vst.msk [vmem:[%s3758 + $0x111] sm:$0xff] %vm508, %v4038
  %v4071 = vld [vmem:[#allocation2] sm:$0xff]
  %v4072 = vld [vmem:[#allocation2 + $0x10] sm:$0xff]
  %v4073 = vld [vmem:[#allocation2 + $0x20] sm:$0xff]
  %v4074 = vld [vmem:[#allocation2 + $0x30] sm:$0xff]
  %v4075 = vld [vmem:[#allocation2 + $0x40] sm:$0xff]
  %v4076 = vld [vmem:[#allocation2 + $0x50] sm:$0xff]
  %v4077 = vld [vmem:[#allocation2 + $0x60] sm:$0xff]
  %v4078 = vld [vmem:[#allocation2 + $0x70] sm:$0xff]
  %v4079 = vld [vmem:[#allocation2 + $0xa0] sm:$0xff]
  %v4080 = vld [vmem:[#allocation2 + $0xb0] sm:$0xff]
  %v4081 = vld [vmem:[#allocation2 + $0xc0] sm:$0xff]
  %v4082 = vld [vmem:[#allocation2 + $0xd0] sm:$0xff]
  %v4083 = vld [vmem:[#allocation2 + $0xe0] sm:$0xff]
  %v4084 = vld [vmem:[#allocation2 + $0xf0] sm:$0xff]
  %v4085 = vld [vmem:[#allocation2 + $0x100] sm:$0xff]
  %v4086 = vld [vmem:[#allocation2 + $0x110] sm:$0xff]
  %v4087 = vld [vmem:[%s5] sm:$0xff]
  %v4088 = vld [vmem:[%s5 + $0x8] sm:$0xff]
  %v4089 = vld [vmem:[%s5 + $0x10] sm:$0xff]
  %v4090 = vld [vmem:[%s5 + $0x18] sm:$0x3f]
  %v4091 = vld [vmem:[#allocation2 + $0x1] sm:$0xff]
  %v4092 = vld [vmem:[#allocation2 + $0x11] sm:$0xff]
  %v4093 = vld [vmem:[#allocation2 + $0x21] sm:$0xff]
  %v4094 = vld [vmem:[#allocation2 + $0x31] sm:$0xff]
  %v4095 = vld [vmem:[#allocation2 + $0x41] sm:$0xff]
  %v4096 = vld [vmem:[#allocation2 + $0x51] sm:$0xff]
  %v4097 = vld [vmem:[#allocation2 + $0x61] sm:$0xff]
  %v4098 = vld [vmem:[#allocation2 + $0x71] sm:$0xff]
  %v4099 = vld [vmem:[#allocation2 + $0xa1] sm:$0xff]
  %v4100 = vld [vmem:[#allocation2 + $0xb1] sm:$0xff]
  %v4101 = vld [vmem:[#allocation2 + $0xc1] sm:$0xff]
  %v4102 = vld [vmem:[#allocation2 + $0xd1] sm:$0xff]
  %v4103 = vld [vmem:[#allocation2 + $0xe1] sm:$0xff]
  %v4104 = vld [vmem:[#allocation2 + $0xf1] sm:$0xff]
  %v4105 = vld [vmem:[#allocation2 + $0x101] sm:$0xff]
  %v4106 = vld [vmem:[#allocation2 + $0x111] sm:$0xff]
  %s4107 = scalar_lea.vmem %s5, 32
  %v4108 = vld [vmem:[%s4107] sm:$0xff]
  %v4109 = vld [vmem:[%s4107 + $0x8] sm:$0xff]
  %v4110 = vld [vmem:[%s4107 + $0x10] sm:$0xff]
  %v4111 = vld [vmem:[%s4107 + $0x18] sm:$0x3f]
  %v4113 = vsel %vm508, %v4091, 0
  %v4116 = vsel %vm508, %v4092, 0
  %v4119 = vsel %vm508, %v4093, 0
  %v4122 = vsel %vm508, %v4094, 0
  %v4125 = vsel %vm508, %v4095, 0
  %v4128 = vsel %vm508, %v4096, 0
  %v4131 = vsel %vm508, %v4097, 0
  %v4134 = vsel %vm508, %v4098, 0
  %v4137 = vsel %vm508, %v4099, 0
  %v4140 = vsel %vm508, %v4100, 0
  %v4143 = vsel %vm508, %v4101, 0
  %v4146 = vsel %vm508, %v4102, 0
  %v4149 = vsel %vm508, %v4103, 0
  %v4152 = vsel %vm508, %v4104, 0
  %v4155 = vsel %vm508, %v4105, 0
  %v4158 = vsel %vm508, %v4106, 0
  %vm4160 = vcmask 1045504
  %v4162 = vsel %vm4160, %v4111, 0
  %4164 = vmatpush.msra.mxu0 0.0
  %4165 = vmatpush.msra.mxu0 0.0
  %4166 = vmatpush.msra.mxu0 0.0
  %4167 = vmatpush.msra.mxu0 0.0
  %4168 = vmatpush.msra.mxu0 0.0
  %4169 = vmatpush.msra.mxu0 0.0
  %4170 = vmatpush.msra.mxu0 0.0
  %4171 = vmatpush.msra.mxu0 0.0
  %4172 = vmatpush.msra.mxu0 0.0
  %4173 = vmatpush.msra.mxu0 0.0
  %4174 = vmatpush.msra.mxu0 0.0
  %4175 = vmatpush.msra.mxu0 0.0
  %4176 = vmatpush.msra.mxu0 %v4162
  %4177 = vmatpush.msra.mxu0 %v4110
  %4178 = vmatpush.msra.mxu0 %v4109
  %4179 = vmatpush.msra.mxu0 %v4108
  %4180 = vmatmul.f32.gmra.mxu0 %v4113
  %v4181 = vpop.f32.mrf.mxu0
  %v4182 = vadd.f32 0.0, %v4181
  %4183 = vmatmul.f32.gmra.mxu0 %v4116
  %v4184 = vpop.f32.mrf.mxu0
  %v4185 = vadd.f32 0.0, %v4184
  %4186 = vmatmul.f32.gmra.mxu0 %v4119
  %v4187 = vpop.f32.mrf.mxu0
  %v4188 = vadd.f32 0.0, %v4187
  %4189 = vmatmul.f32.gmra.mxu0 %v4122
  %v4190 = vpop.f32.mrf.mxu0
  %v4191 = vadd.f32 0.0, %v4190
  %4192 = vmatmul.f32.gmra.mxu0 %v4125
  %v4193 = vpop.f32.mrf.mxu0
  %v4194 = vadd.f32 0.0, %v4193
  %4195 = vmatmul.f32.gmra.mxu0 %v4128
  %v4196 = vpop.f32.mrf.mxu0
  %v4197 = vadd.f32 0.0, %v4196
  %4198 = vmatmul.f32.gmra.mxu0 %v4131
  %v4199 = vpop.f32.mrf.mxu0
  %v4200 = vadd.f32 0.0, %v4199
  %4201 = vmatmul.f32.gmra.mxu0 %v4134
  %v4202 = vpop.f32.mrf.mxu0
  %v4203 = vadd.f32 0.0, %v4202
  %4204 = vmatmul.f32.gmra.mxu0 %v4137
  %v4205 = vpop.f32.mrf.mxu0
  %v4206 = vadd.f32 0.0, %v4205
  %4207 = vmatmul.f32.gmra.mxu0 %v4140
  %v4208 = vpop.f32.mrf.mxu0
  %v4209 = vadd.f32 0.0, %v4208
  %4210 = vmatmul.f32.gmra.mxu0 %v4143
  %v4211 = vpop.f32.mrf.mxu0
  %v4212 = vadd.f32 0.0, %v4211
  %4213 = vmatmul.f32.gmra.mxu0 %v4146
  %v4214 = vpop.f32.mrf.mxu0
  %v4215 = vadd.f32 0.0, %v4214
  %4216 = vmatmul.f32.gmra.mxu0 %v4149
  %v4217 = vpop.f32.mrf.mxu0
  %v4218 = vadd.f32 0.0, %v4217
  %4219 = vmatmul.f32.gmra.mxu0 %v4152
  %v4220 = vpop.f32.mrf.mxu0
  %v4221 = vadd.f32 0.0, %v4220
  %4222 = vmatmul.f32.gmra.mxu0 %v4155
  %v4223 = vpop.f32.mrf.mxu0
  %v4224 = vadd.f32 0.0, %v4223
  %4225 = vmatmul.f32.gmra.mxu0 %v4158
  %v4226 = vpop.f32.mrf.mxu0
  %v4227 = vadd.f32 0.0, %v4226
  %4228 = vdwg.mxu0
  %v4230 = vsel %vm508, %v4071, 0
  %v4233 = vsel %vm508, %v4072, 0
  %v4236 = vsel %vm508, %v4073, 0
  %v4239 = vsel %vm508, %v4074, 0
  %v4242 = vsel %vm508, %v4075, 0
  %v4245 = vsel %vm508, %v4076, 0
  %v4248 = vsel %vm508, %v4077, 0
  %v4251 = vsel %vm508, %v4078, 0
  %v4254 = vsel %vm508, %v4079, 0
  %v4257 = vsel %vm508, %v4080, 0
  %v4260 = vsel %vm508, %v4081, 0
  %v4263 = vsel %vm508, %v4082, 0
  %v4266 = vsel %vm508, %v4083, 0
  %v4269 = vsel %vm508, %v4084, 0
  %v4272 = vsel %vm508, %v4085, 0
  %v4275 = vsel %vm508, %v4086, 0
  %v4278 = vsel %vm4160, %v4090, 0
  %4280 = vmatpush.msra.mxu0 0.0
  %4281 = vmatpush.msra.mxu0 0.0
  %4282 = vmatpush.msra.mxu0 0.0
  %4283 = vmatpush.msra.mxu0 0.0
  %4284 = vmatpush.msra.mxu0 0.0
  %4285 = vmatpush.msra.mxu0 0.0
  %4286 = vmatpush.msra.mxu0 0.0
  %4287 = vmatpush.msra.mxu0 0.0
  %4288 = vmatpush.msra.mxu0 0.0
  %4289 = vmatpush.msra.mxu0 0.0
  %4290 = vmatpush.msra.mxu0 0.0
  %4291 = vmatpush.msra.mxu0 0.0
  %4292 = vmatpush.msra.mxu0 %v4278
  %4293 = vmatpush.msra.mxu0 %v4089
  %4294 = vmatpush.msra.mxu0 %v4088
  %4295 = vmatpush.msra.mxu0 %v4087
  %4296 = vmatmul.f32.gmra.mxu0 %v4230
  %v4297 = vpop.f32.mrf.mxu0
  %v4298 = vadd.f32 %v4182, %v4297
  %4299 = vmatmul.f32.gmra.mxu0 %v4233
  %v4300 = vpop.f32.mrf.mxu0
  %v4301 = vadd.f32 %v4185, %v4300
  %4302 = vmatmul.f32.gmra.mxu0 %v4236
  %v4303 = vpop.f32.mrf.mxu0
  %v4304 = vadd.f32 %v4188, %v4303
  %4305 = vmatmul.f32.gmra.mxu0 %v4239
  %v4306 = vpop.f32.mrf.mxu0
  %v4307 = vadd.f32 %v4191, %v4306
  %4308 = vmatmul.f32.gmra.mxu0 %v4242
  %v4309 = vpop.f32.mrf.mxu0
  %v4310 = vadd.f32 %v4194, %v4309
  %4311 = vmatmul.f32.gmra.mxu0 %v4245
  %v4312 = vpop.f32.mrf.mxu0
  %v4313 = vadd.f32 %v4197, %v4312
  %4314 = vmatmul.f32.gmra.mxu0 %v4248
  %v4315 = vpop.f32.mrf.mxu0
  %v4316 = vadd.f32 %v4200, %v4315
  %4317 = vmatmul.f32.gmra.mxu0 %v4251
  %v4318 = vpop.f32.mrf.mxu0
  %v4319 = vadd.f32 %v4203, %v4318
  %4320 = vmatmul.f32.gmra.mxu0 %v4254
  %v4321 = vpop.f32.mrf.mxu0
  %v4322 = vadd.f32 %v4206, %v4321
  %4323 = vmatmul.f32.gmra.mxu0 %v4257
  %v4324 = vpop.f32.mrf.mxu0
  %v4325 = vadd.f32 %v4209, %v4324
  %4326 = vmatmul.f32.gmra.mxu0 %v4260
  %v4327 = vpop.f32.mrf.mxu0
  %v4328 = vadd.f32 %v4212, %v4327
  %4329 = vmatmul.f32.gmra.mxu0 %v4263
  %v4330 = vpop.f32.mrf.mxu0
  %v4331 = vadd.f32 %v4215, %v4330
  %4332 = vmatmul.f32.gmra.mxu0 %v4266
  %v4333 = vpop.f32.mrf.mxu0
  %v4334 = vadd.f32 %v4218, %v4333
  %4335 = vmatmul.f32.gmra.mxu0 %v4269
  %v4336 = vpop.f32.mrf.mxu0
  %v4337 = vadd.f32 %v4221, %v4336
  %4338 = vmatmul.f32.gmra.mxu0 %v4272
  %v4339 = vpop.f32.mrf.mxu0
  %v4340 = vadd.f32 %v4224, %v4339
  %4341 = vmatmul.f32.gmra.mxu0 %v4275
  %v4342 = vpop.f32.mrf.mxu0
  %v4343 = vadd.f32 %v4227, %v4342
  %4344 = vdwg.mxu0
  %v4345 = vld [vmem:[#allocation2 + $0x2] sm:$0xff]
  %v4346 = vld [vmem:[#allocation2 + $0x12] sm:$0xff]
  %v4347 = vld [vmem:[#allocation2 + $0x22] sm:$0xff]
  %v4348 = vld [vmem:[#allocation2 + $0x32] sm:$0xff]
  %v4349 = vld [vmem:[#allocation2 + $0x42] sm:$0xff]
  %v4350 = vld [vmem:[#allocation2 + $0x52] sm:$0xff]
  %v4351 = vld [vmem:[#allocation2 + $0x62] sm:$0xff]
  %v4352 = vld [vmem:[#allocation2 + $0x72] sm:$0xff]
  %v4353 = vld [vmem:[#allocation2 + $0xa2] sm:$0xff]
  %v4354 = vld [vmem:[#allocation2 + $0xb2] sm:$0xff]
  %v4355 = vld [vmem:[#allocation2 + $0xc2] sm:$0xff]
  %v4356 = vld [vmem:[#allocation2 + $0xd2] sm:$0xff]
  %v4357 = vld [vmem:[#allocation2 + $0xe2] sm:$0xff]
  %v4358 = vld [vmem:[#allocation2 + $0xf2] sm:$0xff]
  %v4359 = vld [vmem:[#allocation2 + $0x102] sm:$0xff]
  %v4360 = vld [vmem:[#allocation2 + $0x112] sm:$0xff]
  %s4361 = scalar_lea.vmem %s5, 64
  %v4362 = vld [vmem:[%s4361] sm:$0xff]
  %v4363 = vld [vmem:[%s4361 + $0x8] sm:$0xff]
  %v4364 = vld [vmem:[%s4361 + $0x10] sm:$0xff]
  %v4365 = vld [vmem:[%s4361 + $0x18] sm:$0x3f]
  %v4367 = vsel %vm508, %v4345, 0
  %v4370 = vsel %vm508, %v4346, 0
  %v4373 = vsel %vm508, %v4347, 0
  %v4376 = vsel %vm508, %v4348, 0
  %v4379 = vsel %vm508, %v4349, 0
  %v4382 = vsel %vm508, %v4350, 0
  %v4385 = vsel %vm508, %v4351, 0
  %v4388 = vsel %vm508, %v4352, 0
  %v4391 = vsel %vm508, %v4353, 0
  %v4394 = vsel %vm508, %v4354, 0
  %v4397 = vsel %vm508, %v4355, 0
  %v4400 = vsel %vm508, %v4356, 0
  %v4403 = vsel %vm508, %v4357, 0
  %v4406 = vsel %vm508, %v4358, 0
  %v4409 = vsel %vm508, %v4359, 0
  %v4412 = vsel %vm508, %v4360, 0
  %v4415 = vsel %vm4160, %v4365, 0
  %4417 = vmatpush.msra.mxu0 0.0
  %4418 = vmatpush.msra.mxu0 0.0
  %4419 = vmatpush.msra.mxu0 0.0
  %4420 = vmatpush.msra.mxu0 0.0
  %4421 = vmatpush.msra.mxu0 0.0
  %4422 = vmatpush.msra.mxu0 0.0
  %4423 = vmatpush.msra.mxu0 0.0
  %4424 = vmatpush.msra.mxu0 0.0
  %4425 = vmatpush.msra.mxu0 0.0
  %4426 = vmatpush.msra.mxu0 0.0
  %4427 = vmatpush.msra.mxu0 0.0
  %4428 = vmatpush.msra.mxu0 0.0
  %4429 = vmatpush.msra.mxu0 %v4415
  %4430 = vmatpush.msra.mxu0 %v4364
  %4431 = vmatpush.msra.mxu0 %v4363
  %4432 = vmatpush.msra.mxu0 %v4362
  %4433 = vmatmul.f32.gmra.mxu0 %v4367
  %v4434 = vpop.f32.mrf.mxu0
  %v4435 = vadd.f32 0.0, %v4434
  %4436 = vmatmul.f32.gmra.mxu0 %v4370
  %v4437 = vpop.f32.mrf.mxu0
  %v4438 = vadd.f32 0.0, %v4437
  %4439 = vmatmul.f32.gmra.mxu0 %v4373
  %v4440 = vpop.f32.mrf.mxu0
  %v4441 = vadd.f32 0.0, %v4440
  %4442 = vmatmul.f32.gmra.mxu0 %v4376
  %v4443 = vpop.f32.mrf.mxu0
  %v4444 = vadd.f32 0.0, %v4443
  %4445 = vmatmul.f32.gmra.mxu0 %v4379
  %v4446 = vpop.f32.mrf.mxu0
  %v4447 = vadd.f32 0.0, %v4446
  %4448 = vmatmul.f32.gmra.mxu0 %v4382
  %v4449 = vpop.f32.mrf.mxu0
  %v4450 = vadd.f32 0.0, %v4449
  %4451 = vmatmul.f32.gmra.mxu0 %v4385
  %v4452 = vpop.f32.mrf.mxu0
  %v4453 = vadd.f32 0.0, %v4452
  %4454 = vmatmul.f32.gmra.mxu0 %v4388
  %v4455 = vpop.f32.mrf.mxu0
  %v4456 = vadd.f32 0.0, %v4455
  %4457 = vmatmul.f32.gmra.mxu0 %v4391
  %v4458 = vpop.f32.mrf.mxu0
  %v4459 = vadd.f32 0.0, %v4458
  %4460 = vmatmul.f32.gmra.mxu0 %v4394
  %v4461 = vpop.f32.mrf.mxu0
  %v4462 = vadd.f32 0.0, %v4461
  %4463 = vmatmul.f32.gmra.mxu0 %v4397
  %v4464 = vpop.f32.mrf.mxu0
  %v4465 = vadd.f32 0.0, %v4464
  %4466 = vmatmul.f32.gmra.mxu0 %v4400
  %v4467 = vpop.f32.mrf.mxu0
  %v4468 = vadd.f32 0.0, %v4467
  %4469 = vmatmul.f32.gmra.mxu0 %v4403
  %v4470 = vpop.f32.mrf.mxu0
  %v4471 = vadd.f32 0.0, %v4470
  %4472 = vmatmul.f32.gmra.mxu0 %v4406
  %v4473 = vpop.f32.mrf.mxu0
  %v4474 = vadd.f32 0.0, %v4473
  %4475 = vmatmul.f32.gmra.mxu0 %v4409
  %v4476 = vpop.f32.mrf.mxu0
  %v4477 = vadd.f32 0.0, %v4476
  %4478 = vmatmul.f32.gmra.mxu0 %v4412
  %v4479 = vpop.f32.mrf.mxu0
  %v4480 = vadd.f32 0.0, %v4479
  %4481 = vdwg.mxu0
  %v4482 = vadd.f32 %v4298, %v4435
  %v4483 = vadd.f32 %v4301, %v4438
  %v4484 = vadd.f32 %v4304, %v4441
  %v4485 = vadd.f32 %v4307, %v4444
  %v4486 = vadd.f32 %v4310, %v4447
  %v4487 = vadd.f32 %v4313, %v4450
  %v4488 = vadd.f32 %v4316, %v4453
  %v4489 = vadd.f32 %v4319, %v4456
  %v4490 = vadd.f32 %v4322, %v4459
  %v4491 = vadd.f32 %v4325, %v4462
  %v4492 = vadd.f32 %v4328, %v4465
  %v4493 = vadd.f32 %v4331, %v4468
  %v4494 = vadd.f32 %v4334, %v4471
  %v4495 = vadd.f32 %v4337, %v4474
  %v4496 = vadd.f32 %v4340, %v4477
  %v4497 = vadd.f32 %v4343, %v4480
  %v4498 = vld [vmem:[%s3758] sm:$0xff]
  %v4499 = vld [vmem:[%s3758 + $0x10] sm:$0xff]
  %v4500 = vld [vmem:[%s3758 + $0x20] sm:$0xff]
  %v4501 = vld [vmem:[%s3758 + $0x30] sm:$0xff]
  %v4502 = vld [vmem:[%s3758 + $0x40] sm:$0xff]
  %v4503 = vld [vmem:[%s3758 + $0x50] sm:$0xff]
  %v4504 = vld [vmem:[%s3758 + $0x60] sm:$0xff]
  %v4505 = vld [vmem:[%s3758 + $0x70] sm:$0xff]
  %v4506 = vld [vmem:[%s3758 + $0xa0] sm:$0xff]
  %v4507 = vld [vmem:[%s3758 + $0xb0] sm:$0xff]
  %v4508 = vld [vmem:[%s3758 + $0xc0] sm:$0xff]
  %v4509 = vld [vmem:[%s3758 + $0xd0] sm:$0xff]
  %v4510 = vld [vmem:[%s3758 + $0xe0] sm:$0xff]
  %v4511 = vld [vmem:[%s3758 + $0xf0] sm:$0xff]
  %v4512 = vld [vmem:[%s3758 + $0x100] sm:$0xff]
  %v4513 = vld [vmem:[%s3758 + $0x110] sm:$0xff]
  %s4514 = scalar_lea.vmem %s5, 96
  %v4515 = vld [vmem:[%s4514] sm:$0xff]
  %v4516 = vld [vmem:[%s4514 + $0x8] sm:$0xff]
  %v4517 = vld [vmem:[%s4514 + $0x10] sm:$0xff]
  %v4518 = vld [vmem:[%s4514 + $0x18] sm:$0x3f]
  %v4520 = vsel %vm508, %v4498, 0
  %v4523 = vsel %vm508, %v4499, 0
  %v4526 = vsel %vm508, %v4500, 0
  %v4529 = vsel %vm508, %v4501, 0
  %v4532 = vsel %vm508, %v4502, 0
  %v4535 = vsel %vm508, %v4503, 0
  %v4538 = vsel %vm508, %v4504, 0
  %v4541 = vsel %vm508, %v4505, 0
  %v4544 = vsel %vm508, %v4506, 0
  %v4547 = vsel %vm508, %v4507, 0
  %v4550 = vsel %vm508, %v4508, 0
  %v4553 = vsel %vm508, %v4509, 0
  %v4556 = vsel %vm508, %v4510, 0
  %v4559 = vsel %vm508, %v4511, 0
  %v4562 = vsel %vm508, %v4512, 0
  %v4565 = vsel %vm508, %v4513, 0
  %v4568 = vsel %vm4160, %v4518, 0
  %4570 = vmatpush.msra.mxu0 0.0
  %4571 = vmatpush.msra.mxu0 0.0
  %4572 = vmatpush.msra.mxu0 0.0
  %4573 = vmatpush.msra.mxu0 0.0
  %4574 = vmatpush.msra.mxu0 0.0
  %4575 = vmatpush.msra.mxu0 0.0
  %4576 = vmatpush.msra.mxu0 0.0
  %4577 = vmatpush.msra.mxu0 0.0
  %4578 = vmatpush.msra.mxu0 0.0
  %4579 = vmatpush.msra.mxu0 0.0
  %4580 = vmatpush.msra.mxu0 0.0
  %4581 = vmatpush.msra.mxu0 0.0
  %4582 = vmatpush.msra.mxu0 %v4568
  %4583 = vmatpush.msra.mxu0 %v4517
  %4584 = vmatpush.msra.mxu0 %v4516
  %4585 = vmatpush.msra.mxu0 %v4515
  %4586 = vmatmul.f32.gmra.mxu0 %v4520
  %v4587 = vpop.f32.mrf.mxu0
  %v4588 = vadd.f32 0.0, %v4587
  %4589 = vmatmul.f32.gmra.mxu0 %v4523
  %v4590 = vpop.f32.mrf.mxu0
  %v4591 = vadd.f32 0.0, %v4590
  %4592 = vmatmul.f32.gmra.mxu0 %v4526
  %v4593 = vpop.f32.mrf.mxu0
  %v4594 = vadd.f32 0.0, %v4593
  %4595 = vmatmul.f32.gmra.mxu0 %v4529
  %v4596 = vpop.f32.mrf.mxu0
  %v4597 = vadd.f32 0.0, %v4596
  %4598 = vmatmul.f32.gmra.mxu0 %v4532
  %v4599 = vpop.f32.mrf.mxu0
  %v4600 = vadd.f32 0.0, %v4599
  %4601 = vmatmul.f32.gmra.mxu0 %v4535
  %v4602 = vpop.f32.mrf.mxu0
  %v4603 = vadd.f32 0.0, %v4602
  %4604 = vmatmul.f32.gmra.mxu0 %v4538
  %v4605 = vpop.f32.mrf.mxu0
  %v4606 = vadd.f32 0.0, %v4605
  %4607 = vmatmul.f32.gmra.mxu0 %v4541
  %v4608 = vpop.f32.mrf.mxu0
  %v4609 = vadd.f32 0.0, %v4608
  %4610 = vmatmul.f32.gmra.mxu0 %v4544
  %v4611 = vpop.f32.mrf.mxu0
  %v4612 = vadd.f32 0.0, %v4611
  %4613 = vmatmul.f32.gmra.mxu0 %v4547
  %v4614 = vpop.f32.mrf.mxu0
  %v4615 = vadd.f32 0.0, %v4614
  %4616 = vmatmul.f32.gmra.mxu0 %v4550
  %v4617 = vpop.f32.mrf.mxu0
  %v4618 = vadd.f32 0.0, %v4617
  %4619 = vmatmul.f32.gmra.mxu0 %v4553
  %v4620 = vpop.f32.mrf.mxu0
  %v4621 = vadd.f32 0.0, %v4620
  %4622 = vmatmul.f32.gmra.mxu0 %v4556
  %v4623 = vpop.f32.mrf.mxu0
  %v4624 = vadd.f32 0.0, %v4623
  %4625 = vmatmul.f32.gmra.mxu0 %v4559
  %v4626 = vpop.f32.mrf.mxu0
  %v4627 = vadd.f32 0.0, %v4626
  %4628 = vmatmul.f32.gmra.mxu0 %v4562
  %v4629 = vpop.f32.mrf.mxu0
  %v4630 = vadd.f32 0.0, %v4629
  %4631 = vmatmul.f32.gmra.mxu0 %v4565
  %v4632 = vpop.f32.mrf.mxu0
  %v4633 = vadd.f32 0.0, %v4632
  %4634 = vdwg.mxu0
  %v4635 = vadd.f32 %v4482, %v4588
  %v4636 = vadd.f32 %v4483, %v4591
  %v4637 = vadd.f32 %v4484, %v4594
  %v4638 = vadd.f32 %v4485, %v4597
  %v4639 = vadd.f32 %v4486, %v4600
  %v4640 = vadd.f32 %v4487, %v4603
  %v4641 = vadd.f32 %v4488, %v4606
  %v4642 = vadd.f32 %v4489, %v4609
  %v4643 = vadd.f32 %v4490, %v4612
  %v4644 = vadd.f32 %v4491, %v4615
  %v4645 = vadd.f32 %v4492, %v4618
  %v4646 = vadd.f32 %v4493, %v4621
  %v4647 = vadd.f32 %v4494, %v4624
  %v4648 = vadd.f32 %v4495, %v4627
  %v4649 = vadd.f32 %v4496, %v4630
  %v4650 = vadd.f32 %v4497, %v4633
  %v4651 = vld [vmem:[%s3758 + $0x1] sm:$0xff]
  %v4652 = vld [vmem:[%s3758 + $0x11] sm:$0xff]
  %v4653 = vld [vmem:[%s3758 + $0x21] sm:$0xff]
  %v4654 = vld [vmem:[%s3758 + $0x31] sm:$0xff]
  %v4655 = vld [vmem:[%s3758 + $0x41] sm:$0xff]
  %v4656 = vld [vmem:[%s3758 + $0x51] sm:$0xff]
  %v4657 = vld [vmem:[%s3758 + $0x61] sm:$0xff]
  %v4658 = vld [vmem:[%s3758 + $0x71] sm:$0xff]
  %v4659 = vld [vmem:[%s3758 + $0xa1] sm:$0xff]
  %v4660 = vld [vmem:[%s3758 + $0xb1] sm:$0xff]
  %v4661 = vld [vmem:[%s3758 + $0xc1] sm:$0xff]
  %v4662 = vld [vmem:[%s3758 + $0xd1] sm:$0xff]
  %v4663 = vld [vmem:[%s3758 + $0xe1] sm:$0xff]
  %v4664 = vld [vmem:[%s3758 + $0xf1] sm:$0xff]
  %v4665 = vld [vmem:[%s3758 + $0x101] sm:$0xff]
  %v4666 = vld [vmem:[%s3758 + $0x111] sm:$0xff]
  %s4667 = scalar_lea.vmem %s5, 128
  %v4668 = vld [vmem:[%s4667] sm:$0xff]
  %v4669 = vld [vmem:[%s4667 + $0x8] sm:$0xff]
  %v4670 = vld [vmem:[%s4667 + $0x10] sm:$0xff]
  %v4671 = vld [vmem:[%s4667 + $0x18] sm:$0x3f]
  %v4673 = vsel %vm508, %v4651, 0
  %v4676 = vsel %vm508, %v4652, 0
  %v4679 = vsel %vm508, %v4653, 0
  %v4682 = vsel %vm508, %v4654, 0
  %v4685 = vsel %vm508, %v4655, 0
  %v4688 = vsel %vm508, %v4656, 0
  %v4691 = vsel %vm508, %v4657, 0
  %v4694 = vsel %vm508, %v4658, 0
  %v4697 = vsel %vm508, %v4659, 0
  %v4700 = vsel %vm508, %v4660, 0
  %v4703 = vsel %vm508, %v4661, 0
  %v4706 = vsel %vm508, %v4662, 0
  %v4709 = vsel %vm508, %v4663, 0
  %v4712 = vsel %vm508, %v4664, 0
  %v4715 = vsel %vm508, %v4665, 0
  %v4718 = vsel %vm508, %v4666, 0
  %v4721 = vsel %vm4160, %v4671, 0
  %4723 = vmatpush.msra.mxu0 0.0
  %4724 = vmatpush.msra.mxu0 0.0
  %4725 = vmatpush.msra.mxu0 0.0
  %4726 = vmatpush.msra.mxu0 0.0
  %4727 = vmatpush.msra.mxu0 0.0
  %4728 = vmatpush.msra.mxu0 0.0
  %4729 = vmatpush.msra.mxu0 0.0
  %4730 = vmatpush.msra.mxu0 0.0
  %4731 = vmatpush.msra.mxu0 0.0
  %4732 = vmatpush.msra.mxu0 0.0
  %4733 = vmatpush.msra.mxu0 0.0
  %4734 = vmatpush.msra.mxu0 0.0
  %4735 = vmatpush.msra.mxu0 %v4721
  %4736 = vmatpush.msra.mxu0 %v4670
  %4737 = vmatpush.msra.mxu0 %v4669
  %4738 = vmatpush.msra.mxu0 %v4668
  %4739 = vmatmul.f32.gmra.mxu0 %v4673
  %v4740 = vpop.f32.mrf.mxu0
  %v4741 = vadd.f32 0.0, %v4740
  %4742 = vmatmul.f32.gmra.mxu0 %v4676
  %v4743 = vpop.f32.mrf.mxu0
  %v4744 = vadd.f32 0.0, %v4743
  %4745 = vmatmul.f32.gmra.mxu0 %v4679
  %v4746 = vpop.f32.mrf.mxu0
  %v4747 = vadd.f32 0.0, %v4746
  %4748 = vmatmul.f32.gmra.mxu0 %v4682
  %v4749 = vpop.f32.mrf.mxu0
  %v4750 = vadd.f32 0.0, %v4749
  %4751 = vmatmul.f32.gmra.mxu0 %v4685
  %v4752 = vpop.f32.mrf.mxu0
  %v4753 = vadd.f32 0.0, %v4752
  %4754 = vmatmul.f32.gmra.mxu0 %v4688
  %v4755 = vpop.f32.mrf.mxu0
  %v4756 = vadd.f32 0.0, %v4755
  %4757 = vmatmul.f32.gmra.mxu0 %v4691
  %v4758 = vpop.f32.mrf.mxu0
  %v4759 = vadd.f32 0.0, %v4758
  %4760 = vmatmul.f32.gmra.mxu0 %v4694
  %v4761 = vpop.f32.mrf.mxu0
  %v4762 = vadd.f32 0.0, %v4761
  %4763 = vmatmul.f32.gmra.mxu0 %v4697
  %v4764 = vpop.f32.mrf.mxu0
  %v4765 = vadd.f32 0.0, %v4764
  %4766 = vmatmul.f32.gmra.mxu0 %v4700
  %v4767 = vpop.f32.mrf.mxu0
  %v4768 = vadd.f32 0.0, %v4767
  %4769 = vmatmul.f32.gmra.mxu0 %v4703
  %v4770 = vpop.f32.mrf.mxu0
  %v4771 = vadd.f32 0.0, %v4770
  %4772 = vmatmul.f32.gmra.mxu0 %v4706
  %v4773 = vpop.f32.mrf.mxu0
  %v4774 = vadd.f32 0.0, %v4773
  %4775 = vmatmul.f32.gmra.mxu0 %v4709
  %v4776 = vpop.f32.mrf.mxu0
  %v4777 = vadd.f32 0.0, %v4776
  %4778 = vmatmul.f32.gmra.mxu0 %v4712
  %v4779 = vpop.f32.mrf.mxu0
  %v4780 = vadd.f32 0.0, %v4779
  %4781 = vmatmul.f32.gmra.mxu0 %v4715
  %v4782 = vpop.f32.mrf.mxu0
  %v4783 = vadd.f32 0.0, %v4782
  %4784 = vmatmul.f32.gmra.mxu0 %v4718
  %v4785 = vpop.f32.mrf.mxu0
  %v4786 = vadd.f32 0.0, %v4785
  %4787 = vdwg.mxu0
  %v4788 = vadd.f32 %v4635, %v4741
  %v4789 = vadd.f32 %v4636, %v4744
  %v4790 = vadd.f32 %v4637, %v4747
  %v4791 = vadd.f32 %v4638, %v4750
  %v4792 = vadd.f32 %v4639, %v4753
  %v4793 = vadd.f32 %v4640, %v4756
  %v4794 = vadd.f32 %v4641, %v4759
  %v4795 = vadd.f32 %v4642, %v4762
  %v4796 = vadd.f32 %v4643, %v4765
  %v4797 = vadd.f32 %v4644, %v4768
  %v4798 = vadd.f32 %v4645, %v4771
  %v4799 = vadd.f32 %v4646, %v4774
  %v4800 = vadd.f32 %v4647, %v4777
  %v4801 = vadd.f32 %v4648, %v4780
  %v4802 = vadd.f32 %v4649, %v4783
  %v4803 = vadd.f32 %v4650, %v4786
  %v4804 = vld [vmem:[%s3758 + $0x2] sm:$0xff]
  %v4805 = vld [vmem:[%s3758 + $0x12] sm:$0xff]
  %v4806 = vld [vmem:[%s3758 + $0x22] sm:$0xff]
  %v4807 = vld [vmem:[%s3758 + $0x32] sm:$0xff]
  %v4808 = vld [vmem:[%s3758 + $0x42] sm:$0xff]
  %v4809 = vld [vmem:[%s3758 + $0x52] sm:$0xff]
  %v4810 = vld [vmem:[%s3758 + $0x62] sm:$0xff]
  %v4811 = vld [vmem:[%s3758 + $0x72] sm:$0xff]
  %v4812 = vld [vmem:[%s3758 + $0xa2] sm:$0xff]
  %v4813 = vld [vmem:[%s3758 + $0xb2] sm:$0xff]
  %v4814 = vld [vmem:[%s3758 + $0xc2] sm:$0xff]
  %v4815 = vld [vmem:[%s3758 + $0xd2] sm:$0xff]
  %v4816 = vld [vmem:[%s3758 + $0xe2] sm:$0xff]
  %v4817 = vld [vmem:[%s3758 + $0xf2] sm:$0xff]
  %v4818 = vld [vmem:[%s3758 + $0x102] sm:$0xff]
  %v4819 = vld [vmem:[%s3758 + $0x112] sm:$0xff]
  %s4820 = scalar_lea.vmem %s5, 160
  %v4821 = vld [vmem:[%s4820] sm:$0xff]
  %v4822 = vld [vmem:[%s4820 + $0x8] sm:$0xff]
  %v4823 = vld [vmem:[%s4820 + $0x10] sm:$0xff]
  %v4824 = vld [vmem:[%s4820 + $0x18] sm:$0x3f]
  %v4826 = vsel %vm508, %v4804, 0
  %v4829 = vsel %vm508, %v4805, 0
  %v4832 = vsel %vm508, %v4806, 0
  %v4835 = vsel %vm508, %v4807, 0
  %v4838 = vsel %vm508, %v4808, 0
  %v4841 = vsel %vm508, %v4809, 0
  %v4844 = vsel %vm508, %v4810, 0
  %v4847 = vsel %vm508, %v4811, 0
  %v4850 = vsel %vm508, %v4812, 0
  %v4853 = vsel %vm508, %v4813, 0
  %v4856 = vsel %vm508, %v4814, 0
  %v4859 = vsel %vm508, %v4815, 0
  %v4862 = vsel %vm508, %v4816, 0
  %v4865 = vsel %vm508, %v4817, 0
  %v4868 = vsel %vm508, %v4818, 0
  %v4871 = vsel %vm508, %v4819, 0
  %v4874 = vsel %vm4160, %v4824, 0
  %4876 = vmatpush.msra.mxu0 0.0
  %4877 = vmatpush.msra.mxu0 0.0
  %4878 = vmatpush.msra.mxu0 0.0
  %4879 = vmatpush.msra.mxu0 0.0
  %4880 = vmatpush.msra.mxu0 0.0
  %4881 = vmatpush.msra.mxu0 0.0
  %4882 = vmatpush.msra.mxu0 0.0
  %4883 = vmatpush.msra.mxu0 0.0
  %4884 = vmatpush.msra.mxu0 0.0
  %4885 = vmatpush.msra.mxu0 0.0
  %4886 = vmatpush.msra.mxu0 0.0
  %4887 = vmatpush.msra.mxu0 0.0
  %4888 = vmatpush.msra.mxu0 %v4874
  %4889 = vmatpush.msra.mxu0 %v4823
  %4890 = vmatpush.msra.mxu0 %v4822
  %4891 = vmatpush.msra.mxu0 %v4821
  %4892 = vmatmul.f32.gmra.mxu0 %v4826
  %v4893 = vpop.f32.mrf.mxu0
  %v4894 = vadd.f32 0.0, %v4893
  %4895 = vmatmul.f32.gmra.mxu0 %v4829
  %v4896 = vpop.f32.mrf.mxu0
  %v4897 = vadd.f32 0.0, %v4896
  %4898 = vmatmul.f32.gmra.mxu0 %v4832
  %v4899 = vpop.f32.mrf.mxu0
  %v4900 = vadd.f32 0.0, %v4899
  %4901 = vmatmul.f32.gmra.mxu0 %v4835
  %v4902 = vpop.f32.mrf.mxu0
  %v4903 = vadd.f32 0.0, %v4902
  %4904 = vmatmul.f32.gmra.mxu0 %v4838
  %v4905 = vpop.f32.mrf.mxu0
  %v4906 = vadd.f32 0.0, %v4905
  %4907 = vmatmul.f32.gmra.mxu0 %v4841
  %v4908 = vpop.f32.mrf.mxu0
  %v4909 = vadd.f32 0.0, %v4908
  %4910 = vmatmul.f32.gmra.mxu0 %v4844
  %v4911 = vpop.f32.mrf.mxu0
  %v4912 = vadd.f32 0.0, %v4911
  %4913 = vmatmul.f32.gmra.mxu0 %v4847
  %v4914 = vpop.f32.mrf.mxu0
  %v4915 = vadd.f32 0.0, %v4914
  %4916 = vmatmul.f32.gmra.mxu0 %v4850
  %v4917 = vpop.f32.mrf.mxu0
  %v4918 = vadd.f32 0.0, %v4917
  %4919 = vmatmul.f32.gmra.mxu0 %v4853
  %v4920 = vpop.f32.mrf.mxu0
  %v4921 = vadd.f32 0.0, %v4920
  %4922 = vmatmul.f32.gmra.mxu0 %v4856
  %v4923 = vpop.f32.mrf.mxu0
  %v4924 = vadd.f32 0.0, %v4923
  %4925 = vmatmul.f32.gmra.mxu0 %v4859
  %v4926 = vpop.f32.mrf.mxu0
  %v4927 = vadd.f32 0.0, %v4926
  %4928 = vmatmul.f32.gmra.mxu0 %v4862
  %v4929 = vpop.f32.mrf.mxu0
  %v4930 = vadd.f32 0.0, %v4929
  %4931 = vmatmul.f32.gmra.mxu0 %v4865
  %v4932 = vpop.f32.mrf.mxu0
  %v4933 = vadd.f32 0.0, %v4932
  %4934 = vmatmul.f32.gmra.mxu0 %v4868
  %v4935 = vpop.f32.mrf.mxu0
  %v4936 = vadd.f32 0.0, %v4935
  %4937 = vmatmul.f32.gmra.mxu0 %v4871
  %v4938 = vpop.f32.mrf.mxu0
  %v4939 = vadd.f32 0.0, %v4938
  %4940 = vdwg.mxu0
  %v4941 = vadd.f32 %v4788, %v4894
  %v4942 = vadd.f32 %v4789, %v4897
  %v4943 = vadd.f32 %v4790, %v4900
  %v4944 = vadd.f32 %v4791, %v4903
  %v4945 = vadd.f32 %v4792, %v4906
  %v4946 = vadd.f32 %v4793, %v4909
  %v4947 = vadd.f32 %v4794, %v4912
  %v4948 = vadd.f32 %v4795, %v4915
  %v4949 = vadd.f32 %v4796, %v4918
  %v4950 = vadd.f32 %v4797, %v4921
  %v4951 = vadd.f32 %v4798, %v4924
  %v4952 = vadd.f32 %v4799, %v4927
  %v4953 = vadd.f32 %v4800, %v4930
  %v4954 = vadd.f32 %v4801, %v4933
  %v4955 = vadd.f32 %v4802, %v4936
  %v4956 = vadd.f32 %v4803, %v4939
  %s4957 = scalar_lea.vmem [#allocation2], 32
  %v4958 = vld [vmem:[%s4957] sm:$0xff]
  %v4959 = vld [vmem:[%s4957 + $0x10] sm:$0xff]
  %v4960 = vld [vmem:[%s4957 + $0x20] sm:$0xff]
  %v4961 = vld [vmem:[%s4957 + $0x30] sm:$0xff]
  %v4962 = vld [vmem:[%s4957 + $0x40] sm:$0xff]
  %v4963 = vld [vmem:[%s4957 + $0x50] sm:$0xff]
  %v4964 = vld [vmem:[%s4957 + $0x60] sm:$0xff]
  %v4965 = vld [vmem:[%s4957 + $0x70] sm:$0xff]
  %v4966 = vld [vmem:[%s4957 + $0xa0] sm:$0xff]
  %v4967 = vld [vmem:[%s4957 + $0xb0] sm:$0xff]
  %v4968 = vld [vmem:[%s4957 + $0xc0] sm:$0xff]
  %v4969 = vld [vmem:[%s4957 + $0xd0] sm:$0xff]
  %v4970 = vld [vmem:[%s4957 + $0xe0] sm:$0xff]
  %v4971 = vld [vmem:[%s4957 + $0xf0] sm:$0xff]
  %v4972 = vld [vmem:[%s4957 + $0x100] sm:$0xff]
  %v4973 = vld [vmem:[%s4957 + $0x110] sm:$0xff]
  %s4974 = scalar_lea.vmem %s5, 192
  %v4975 = vld [vmem:[%s4974] sm:$0xff]
  %v4976 = vld [vmem:[%s4974 + $0x8] sm:$0xff]
  %v4977 = vld [vmem:[%s4974 + $0x10] sm:$0xff]
  %v4978 = vld [vmem:[%s4974 + $0x18] sm:$0x3f]
  %v4980 = vsel %vm508, %v4958, 0
  %v4983 = vsel %vm508, %v4959, 0
  %v4986 = vsel %vm508, %v4960, 0
  %v4989 = vsel %vm508, %v4961, 0
  %v4992 = vsel %vm508, %v4962, 0
  %v4995 = vsel %vm508, %v4963, 0
  %v4998 = vsel %vm508, %v4964, 0
  %v5001 = vsel %vm508, %v4965, 0
  %v5004 = vsel %vm508, %v4966, 0
  %v5007 = vsel %vm508, %v4967, 0
  %v5010 = vsel %vm508, %v4968, 0
  %v5013 = vsel %vm508, %v4969, 0
  %v5016 = vsel %vm508, %v4970, 0
  %v5019 = vsel %vm508, %v4971, 0
  %v5022 = vsel %vm508, %v4972, 0
  %v5025 = vsel %vm508, %v4973, 0
  %v5028 = vsel %vm4160, %v4978, 0
  %5030 = vmatpush.msra.mxu0 0.0
  %5031 = vmatpush.msra.mxu0 0.0
  %5032 = vmatpush.msra.mxu0 0.0
  %5033 = vmatpush.msra.mxu0 0.0
  %5034 = vmatpush.msra.mxu0 0.0
  %5035 = vmatpush.msra.mxu0 0.0
  %5036 = vmatpush.msra.mxu0 0.0
  %5037 = vmatpush.msra.mxu0 0.0
  %5038 = vmatpush.msra.mxu0 0.0
  %5039 = vmatpush.msra.mxu0 0.0
  %5040 = vmatpush.msra.mxu0 0.0
  %5041 = vmatpush.msra.mxu0 0.0
  %5042 = vmatpush.msra.mxu0 %v5028
  %5043 = vmatpush.msra.mxu0 %v4977
  %5044 = vmatpush.msra.mxu0 %v4976
  %5045 = vmatpush.msra.mxu0 %v4975
  %5046 = vmatmul.f32.gmra.mxu0 %v4980
  %v5047 = vpop.f32.mrf.mxu0
  %v5048 = vadd.f32 0.0, %v5047
  %5049 = vmatmul.f32.gmra.mxu0 %v4983
  %v5050 = vpop.f32.mrf.mxu0
  %v5051 = vadd.f32 0.0, %v5050
  %5052 = vmatmul.f32.gmra.mxu0 %v4986
  %v5053 = vpop.f32.mrf.mxu0
  %v5054 = vadd.f32 0.0, %v5053
  %5055 = vmatmul.f32.gmra.mxu0 %v4989
  %v5056 = vpop.f32.mrf.mxu0
  %v5057 = vadd.f32 0.0, %v5056
  %5058 = vmatmul.f32.gmra.mxu0 %v4992
  %v5059 = vpop.f32.mrf.mxu0
  %v5060 = vadd.f32 0.0, %v5059
  %5061 = vmatmul.f32.gmra.mxu0 %v4995
  %v5062 = vpop.f32.mrf.mxu0
  %v5063 = vadd.f32 0.0, %v5062
  %5064 = vmatmul.f32.gmra.mxu0 %v4998
  %v5065 = vpop.f32.mrf.mxu0
  %v5066 = vadd.f32 0.0, %v5065
  %5067 = vmatmul.f32.gmra.mxu0 %v5001
  %v5068 = vpop.f32.mrf.mxu0
  %v5069 = vadd.f32 0.0, %v5068
  %5070 = vmatmul.f32.gmra.mxu0 %v5004
  %v5071 = vpop.f32.mrf.mxu0
  %v5072 = vadd.f32 0.0, %v5071
  %5073 = vmatmul.f32.gmra.mxu0 %v5007
  %v5074 = vpop.f32.mrf.mxu0
  %v5075 = vadd.f32 0.0, %v5074
  %5076 = vmatmul.f32.gmra.mxu0 %v5010
  %v5077 = vpop.f32.mrf.mxu0
  %v5078 = vadd.f32 0.0, %v5077
  %5079 = vmatmul.f32.gmra.mxu0 %v5013
  %v5080 = vpop.f32.mrf.mxu0
  %v5081 = vadd.f32 0.0, %v5080
  %5082 = vmatmul.f32.gmra.mxu0 %v5016
  %v5083 = vpop.f32.mrf.mxu0
  %v5084 = vadd.f32 0.0, %v5083
  %5085 = vmatmul.f32.gmra.mxu0 %v5019
  %v5086 = vpop.f32.mrf.mxu0
  %v5087 = vadd.f32 0.0, %v5086
  %5088 = vmatmul.f32.gmra.mxu0 %v5022
  %v5089 = vpop.f32.mrf.mxu0
  %v5090 = vadd.f32 0.0, %v5089
  %5091 = vmatmul.f32.gmra.mxu0 %v5025
  %v5092 = vpop.f32.mrf.mxu0
  %v5093 = vadd.f32 0.0, %v5092
  %5094 = vdwg.mxu0
  %v5095 = vadd.f32 %v4941, %v5048
  %v5096 = vadd.f32 %v4942, %v5051
  %v5097 = vadd.f32 %v4943, %v5054
  %v5098 = vadd.f32 %v4944, %v5057
  %v5099 = vadd.f32 %v4945, %v5060
  %v5100 = vadd.f32 %v4946, %v5063
  %v5101 = vadd.f32 %v4947, %v5066
  %v5102 = vadd.f32 %v4948, %v5069
  %v5103 = vadd.f32 %v4949, %v5072
  %v5104 = vadd.f32 %v4950, %v5075
  %v5105 = vadd.f32 %v4951, %v5078
  %v5106 = vadd.f32 %v4952, %v5081
  %v5107 = vadd.f32 %v4953, %v5084
  %v5108 = vadd.f32 %v4954, %v5087
  %v5109 = vadd.f32 %v4955, %v5090
  %v5110 = vadd.f32 %v4956, %v5093
  %v5111 = vld [vmem:[%s4957 + $0x1] sm:$0xff]
  %v5112 = vld [vmem:[%s4957 + $0x11] sm:$0xff]
  %v5113 = vld [vmem:[%s4957 + $0x21] sm:$0xff]
  %v5114 = vld [vmem:[%s4957 + $0x31] sm:$0xff]
  %v5115 = vld [vmem:[%s4957 + $0x41] sm:$0xff]
  %v5116 = vld [vmem:[%s4957 + $0x51] sm:$0xff]
  %v5117 = vld [vmem:[%s4957 + $0x61] sm:$0xff]
  %v5118 = vld [vmem:[%s4957 + $0x71] sm:$0xff]
  %v5119 = vld [vmem:[%s4957 + $0xa1] sm:$0xff]
  %v5120 = vld [vmem:[%s4957 + $0xb1] sm:$0xff]
  %v5121 = vld [vmem:[%s4957 + $0xc1] sm:$0xff]
  %v5122 = vld [vmem:[%s4957 + $0xd1] sm:$0xff]
  %v5123 = vld [vmem:[%s4957 + $0xe1] sm:$0xff]
  %v5124 = vld [vmem:[%s4957 + $0xf1] sm:$0xff]
  %v5125 = vld [vmem:[%s4957 + $0x101] sm:$0xff]
  %v5126 = vld [vmem:[%s4957 + $0x111] sm:$0xff]
  %s5127 = scalar_lea.vmem %s5, 224
  %v5128 = vld [vmem:[%s5127] sm:$0xff]
  %v5129 = vld [vmem:[%s5127 + $0x8] sm:$0xff]
  %v5130 = vld [vmem:[%s5127 + $0x10] sm:$0xff]
  %v5131 = vld [vmem:[%s5127 + $0x18] sm:$0x3f]
  %v5133 = vsel %vm508, %v5111, 0
  %v5136 = vsel %vm508, %v5112, 0
  %v5139 = vsel %vm508, %v5113, 0
  %v5142 = vsel %vm508, %v5114, 0
  %v5145 = vsel %vm508, %v5115, 0
  %v5148 = vsel %vm508, %v5116, 0
  %v5151 = vsel %vm508, %v5117, 0
  %v5154 = vsel %vm508, %v5118, 0
  %v5157 = vsel %vm508, %v5119, 0
  %v5160 = vsel %vm508, %v5120, 0
  %v5163 = vsel %vm508, %v5121, 0
  %v5166 = vsel %vm508, %v5122, 0
  %v5169 = vsel %vm508, %v5123, 0
  %v5172 = vsel %vm508, %v5124, 0
  %v5175 = vsel %vm508, %v5125, 0
  %v5178 = vsel %vm508, %v5126, 0
  %v5181 = vsel %vm4160, %v5131, 0
  %5183 = vmatpush.msra.mxu0 0.0
  %5184 = vmatpush.msra.mxu0 0.0
  %5185 = vmatpush.msra.mxu0 0.0
  %5186 = vmatpush.msra.mxu0 0.0
  %5187 = vmatpush.msra.mxu0 0.0
  %5188 = vmatpush.msra.mxu0 0.0
  %5189 = vmatpush.msra.mxu0 0.0
  %5190 = vmatpush.msra.mxu0 0.0
  %5191 = vmatpush.msra.mxu0 0.0
  %5192 = vmatpush.msra.mxu0 0.0
  %5193 = vmatpush.msra.mxu0 0.0
  %5194 = vmatpush.msra.mxu0 0.0
  %5195 = vmatpush.msra.mxu0 %v5181
  %5196 = vmatpush.msra.mxu0 %v5130
  %5197 = vmatpush.msra.mxu0 %v5129
  %5198 = vmatpush.msra.mxu0 %v5128
  %5199 = vmatmul.f32.gmra.mxu0 %v5133
  %v5200 = vpop.f32.mrf.mxu0
  %v5201 = vadd.f32 0.0, %v5200
  %5202 = vmatmul.f32.gmra.mxu0 %v5136
  %v5203 = vpop.f32.mrf.mxu0
  %v5204 = vadd.f32 0.0, %v5203
  %5205 = vmatmul.f32.gmra.mxu0 %v5139
  %v5206 = vpop.f32.mrf.mxu0
  %v5207 = vadd.f32 0.0, %v5206
  %5208 = vmatmul.f32.gmra.mxu0 %v5142
  %v5209 = vpop.f32.mrf.mxu0
  %v5210 = vadd.f32 0.0, %v5209
  %5211 = vmatmul.f32.gmra.mxu0 %v5145
  %v5212 = vpop.f32.mrf.mxu0
  %v5213 = vadd.f32 0.0, %v5212
  %5214 = vmatmul.f32.gmra.mxu0 %v5148
  %v5215 = vpop.f32.mrf.mxu0
  %v5216 = vadd.f32 0.0, %v5215
  %5217 = vmatmul.f32.gmra.mxu0 %v5151
  %v5218 = vpop.f32.mrf.mxu0
  %v5219 = vadd.f32 0.0, %v5218
  %5220 = vmatmul.f32.gmra.mxu0 %v5154
  %v5221 = vpop.f32.mrf.mxu0
  %v5222 = vadd.f32 0.0, %v5221
  %5223 = vmatmul.f32.gmra.mxu0 %v5157
  %v5224 = vpop.f32.mrf.mxu0
  %v5225 = vadd.f32 0.0, %v5224
  %5226 = vmatmul.f32.gmra.mxu0 %v5160
  %v5227 = vpop.f32.mrf.mxu0
  %v5228 = vadd.f32 0.0, %v5227
  %5229 = vmatmul.f32.gmra.mxu0 %v5163
  %v5230 = vpop.f32.mrf.mxu0
  %v5231 = vadd.f32 0.0, %v5230
  %5232 = vmatmul.f32.gmra.mxu0 %v5166
  %v5233 = vpop.f32.mrf.mxu0
  %v5234 = vadd.f32 0.0, %v5233
  %5235 = vmatmul.f32.gmra.mxu0 %v5169
  %v5236 = vpop.f32.mrf.mxu0
  %v5237 = vadd.f32 0.0, %v5236
  %5238 = vmatmul.f32.gmra.mxu0 %v5172
  %v5239 = vpop.f32.mrf.mxu0
  %v5240 = vadd.f32 0.0, %v5239
  %5241 = vmatmul.f32.gmra.mxu0 %v5175
  %v5242 = vpop.f32.mrf.mxu0
  %v5243 = vadd.f32 0.0, %v5242
  %5244 = vmatmul.f32.gmra.mxu0 %v5178
  %v5245 = vpop.f32.mrf.mxu0
  %v5246 = vadd.f32 0.0, %v5245
  %5247 = vdwg.mxu0
  %v5248 = vadd.f32 %v5095, %v5201
  %v5249 = vadd.f32 %v5096, %v5204
  %v5250 = vadd.f32 %v5097, %v5207
  %v5251 = vadd.f32 %v5098, %v5210
  %v5252 = vadd.f32 %v5099, %v5213
  %v5253 = vadd.f32 %v5100, %v5216
  %v5254 = vadd.f32 %v5101, %v5219
  %v5255 = vadd.f32 %v5102, %v5222
  %v5256 = vadd.f32 %v5103, %v5225
  %v5257 = vadd.f32 %v5104, %v5228
  %v5258 = vadd.f32 %v5105, %v5231
  %v5259 = vadd.f32 %v5106, %v5234
  %v5260 = vadd.f32 %v5107, %v5237
  %v5261 = vadd.f32 %v5108, %v5240
  %v5262 = vadd.f32 %v5109, %v5243
  %v5263 = vadd.f32 %v5110, %v5246
  %v5264 = vld [vmem:[%s4957 + $0x2] sm:$0xff]
  %v5265 = vld [vmem:[%s4957 + $0x12] sm:$0xff]
  %v5266 = vld [vmem:[%s4957 + $0x22] sm:$0xff]
  %v5267 = vld [vmem:[%s4957 + $0x32] sm:$0xff]
  %v5268 = vld [vmem:[%s4957 + $0x42] sm:$0xff]
  %v5269 = vld [vmem:[%s4957 + $0x52] sm:$0xff]
  %v5270 = vld [vmem:[%s4957 + $0x62] sm:$0xff]
  %v5271 = vld [vmem:[%s4957 + $0x72] sm:$0xff]
  %v5272 = vld [vmem:[%s4957 + $0xa2] sm:$0xff]
  %v5273 = vld [vmem:[%s4957 + $0xb2] sm:$0xff]
  %v5274 = vld [vmem:[%s4957 + $0xc2] sm:$0xff]
  %v5275 = vld [vmem:[%s4957 + $0xd2] sm:$0xff]
  %v5276 = vld [vmem:[%s4957 + $0xe2] sm:$0xff]
  %v5277 = vld [vmem:[%s4957 + $0xf2] sm:$0xff]
  %v5278 = vld [vmem:[%s4957 + $0x102] sm:$0xff]
  %v5279 = vld [vmem:[%s4957 + $0x112] sm:$0xff]
  %s5280 = scalar_lea.vmem %s5, 256
  %v5281 = vld [vmem:[%s5280] sm:$0xff]
  %v5282 = vld [vmem:[%s5280 + $0x8] sm:$0xff]
  %v5283 = vld [vmem:[%s5280 + $0x10] sm:$0xff]
  %v5284 = vld [vmem:[%s5280 + $0x18] sm:$0x3f]
  %v5286 = vsel %vm508, %v5264, 0
  %v5289 = vsel %vm508, %v5265, 0
  %v5292 = vsel %vm508, %v5266, 0
  %v5295 = vsel %vm508, %v5267, 0
  %v5298 = vsel %vm508, %v5268, 0
  %v5301 = vsel %vm508, %v5269, 0
  %v5304 = vsel %vm508, %v5270, 0
  %v5307 = vsel %vm508, %v5271, 0
  %v5310 = vsel %vm508, %v5272, 0
  %v5313 = vsel %vm508, %v5273, 0
  %v5316 = vsel %vm508, %v5274, 0
  %v5319 = vsel %vm508, %v5275, 0
  %v5322 = vsel %vm508, %v5276, 0
  %v5325 = vsel %vm508, %v5277, 0
  %v5328 = vsel %vm508, %v5278, 0
  %v5331 = vsel %vm508, %v5279, 0
  %v5334 = vsel %vm4160, %v5284, 0
  %5336 = vmatpush.msra.mxu0 0.0
  %5337 = vmatpush.msra.mxu0 0.0
  %5338 = vmatpush.msra.mxu0 0.0
  %5339 = vmatpush.msra.mxu0 0.0
  %5340 = vmatpush.msra.mxu0 0.0
  %5341 = vmatpush.msra.mxu0 0.0
  %5342 = vmatpush.msra.mxu0 0.0
  %5343 = vmatpush.msra.mxu0 0.0
  %5344 = vmatpush.msra.mxu0 0.0
  %5345 = vmatpush.msra.mxu0 0.0
  %5346 = vmatpush.msra.mxu0 0.0
  %5347 = vmatpush.msra.mxu0 0.0
  %5348 = vmatpush.msra.mxu0 %v5334
  %5349 = vmatpush.msra.mxu0 %v5283
  %5350 = vmatpush.msra.mxu0 %v5282
  %5351 = vmatpush.msra.mxu0 %v5281
  %5352 = vmatmul.f32.gmra.mxu0 %v5286
  %v5353 = vpop.f32.mrf.mxu0
  %v5354 = vadd.f32 0.0, %v5353
  %5355 = vmatmul.f32.gmra.mxu0 %v5289
  %v5356 = vpop.f32.mrf.mxu0
  %v5357 = vadd.f32 0.0, %v5356
  %5358 = vmatmul.f32.gmra.mxu0 %v5292
  %v5359 = vpop.f32.mrf.mxu0
  %v5360 = vadd.f32 0.0, %v5359
  %5361 = vmatmul.f32.gmra.mxu0 %v5295
  %v5362 = vpop.f32.mrf.mxu0
  %v5363 = vadd.f32 0.0, %v5362
  %5364 = vmatmul.f32.gmra.mxu0 %v5298
  %v5365 = vpop.f32.mrf.mxu0
  %v5366 = vadd.f32 0.0, %v5365
  %5367 = vmatmul.f32.gmra.mxu0 %v5301
  %v5368 = vpop.f32.mrf.mxu0
  %v5369 = vadd.f32 0.0, %v5368
  %5370 = vmatmul.f32.gmra.mxu0 %v5304
  %v5371 = vpop.f32.mrf.mxu0
  %v5372 = vadd.f32 0.0, %v5371
  %5373 = vmatmul.f32.gmra.mxu0 %v5307
  %v5374 = vpop.f32.mrf.mxu0
  %v5375 = vadd.f32 0.0, %v5374
  %5376 = vmatmul.f32.gmra.mxu0 %v5310
  %v5377 = vpop.f32.mrf.mxu0
  %v5378 = vadd.f32 0.0, %v5377
  %5379 = vmatmul.f32.gmra.mxu0 %v5313
  %v5380 = vpop.f32.mrf.mxu0
  %v5381 = vadd.f32 0.0, %v5380
  %5382 = vmatmul.f32.gmra.mxu0 %v5316
  %v5383 = vpop.f32.mrf.mxu0
  %v5384 = vadd.f32 0.0, %v5383
  %5385 = vmatmul.f32.gmra.mxu0 %v5319
  %v5386 = vpop.f32.mrf.mxu0
  %v5387 = vadd.f32 0.0, %v5386
  %5388 = vmatmul.f32.gmra.mxu0 %v5322
  %v5389 = vpop.f32.mrf.mxu0
  %v5390 = vadd.f32 0.0, %v5389
  %5391 = vmatmul.f32.gmra.mxu0 %v5325
  %v5392 = vpop.f32.mrf.mxu0
  %v5393 = vadd.f32 0.0, %v5392
  %5394 = vmatmul.f32.gmra.mxu0 %v5328
  %v5395 = vpop.f32.mrf.mxu0
  %v5396 = vadd.f32 0.0, %v5395
  %5397 = vmatmul.f32.gmra.mxu0 %v5331
  %v5398 = vpop.f32.mrf.mxu0
  %v5399 = vadd.f32 0.0, %v5398
  %5400 = vdwg.mxu0
  %v5401 = vadd.f32 %v5248, %v5354
  %v5402 = vadd.f32 %v5249, %v5357
  %v5403 = vadd.f32 %v5250, %v5360
  %v5404 = vadd.f32 %v5251, %v5363
  %v5405 = vadd.f32 %v5252, %v5366
  %v5406 = vadd.f32 %v5253, %v5369
  %v5407 = vadd.f32 %v5254, %v5372
  %v5408 = vadd.f32 %v5255, %v5375
  %v5409 = vadd.f32 %v5256, %v5378
  %v5410 = vadd.f32 %v5257, %v5381
  %v5411 = vadd.f32 %v5258, %v5384
  %v5412 = vadd.f32 %v5259, %v5387
  %v5413 = vadd.f32 %v5260, %v5390
  %v5414 = vadd.f32 %v5261, %v5393
  %v5415 = vadd.f32 %v5262, %v5396
  %v5416 = vadd.f32 %v5263, %v5399
  %v5417 = vld [vmem:[%s6] sm:$0x1]
  %v5419 = vperm.slane %v5417, 0
  %v5421 = vadd.f32 %v5401, %v5419
  %v5422 = vadd.f32 %v5402, %v5419
  %v5423 = vadd.f32 %v5403, %v5419
  %v5424 = vadd.f32 %v5404, %v5419
  %v5425 = vadd.f32 %v5405, %v5419
  %v5426 = vadd.f32 %v5406, %v5419
  %v5427 = vadd.f32 %v5407, %v5419
  %v5428 = vadd.f32 %v5408, %v5419
  %v5429 = vadd.f32 %v5409, %v5419
  %v5430 = vadd.f32 %v5410, %v5419
  %v5431 = vadd.f32 %v5411, %v5419
  %v5432 = vadd.f32 %v5412, %v5419
  %v5433 = vadd.f32 %v5413, %v5419
  %v5434 = vadd.f32 %v5414, %v5419
  %v5435 = vadd.f32 %v5415, %v5419
  %v5436 = vadd.f32 %v5416, %v5419
  %v5437 = vsel %vm508, %v5421, 0.0
  %v5438 = vsel %vm508, %v5422, 0.0
  %v5439 = vadd.f32 %v5437, %v5438
  %v5440 = vsel %vm508, %v5423, 0.0
  %v5441 = vadd.f32 %v5439, %v5440
  %v5442 = vsel %vm508, %v5424, 0.0
  %v5443 = vadd.f32 %v5441, %v5442
  %v5444 = vsel %vm508, %v5425, 0.0
  %v5445 = vadd.f32 %v5443, %v5444
  %v5446 = vsel %vm508, %v5426, 0.0
  %v5447 = vadd.f32 %v5445, %v5446
  %v5448 = vsel %vm508, %v5427, 0.0
  %v5449 = vadd.f32 %v5447, %v5448
  %v5450 = vsel %vm508, %v5428, 0.0
  %v5451 = vadd.f32 %v5449, %v5450
  %v5452 = vsel %vm508, %v5429, 0.0
  %v5453 = vadd.f32 %v5451, %v5452
  %v5454 = vsel %vm508, %v5430, 0.0
  %v5455 = vadd.f32 %v5453, %v5454
  %v5456 = vsel %vm508, %v5431, 0.0
  %v5457 = vadd.f32 %v5455, %v5456
  %v5458 = vsel %vm508, %v5432, 0.0
  %v5459 = vadd.f32 %v5457, %v5458
  %v5460 = vsel %vm508, %v5433, 0.0
  %v5461 = vadd.f32 %v5459, %v5460
  %v5462 = vsel %vm508, %v5434, 0.0
  %v5463 = vadd.f32 %v5461, %v5462
  %v5464 = vsel %vm508, %v5435, 0.0
  %v5465 = vadd.f32 %v5463, %v5464
  %v5466 = vsel %vm508, %v5436, 0.0
  %v5467 = vadd.f32 %v5465, %v5466
  %v5468 = vrot.slane %v5467, 4
  %v5469 = vadd.f32 %v5467, %v5468
  %v5470 = vrot.slane %v5469, 2
  %v5471 = vadd.f32 %v5469, %v5470
  %v5472 = vrot.slane %v5471, 1
  %v5473 = vadd.f32 %v5471, %v5472
  %v5474 = vrcp.pop 128.0
  %v5475 = vmul.f32 128.0, %v5474
  %v5476 = vsub.f32 1.0, %v5475
  %v5477 = vmul.f32 %v5474, %v5476
  %v5478 = vadd.f32 %v5474, %v5477
  %vm5479 = vweird.f32 %v5474
  %v5480 = vsel %vm5479, %v5474, %v5478
  %v5481 = vmul.f32 %v5473, %v5480
  %v5482 = vsub.f32 %v5421, %v5481
  %v5483 = vsub.f32 %v5422, %v5481
  %v5484 = vsub.f32 %v5423, %v5481
  %v5485 = vsub.f32 %v5424, %v5481
  %v5486 = vsub.f32 %v5425, %v5481
  %v5487 = vsub.f32 %v5426, %v5481
  %v5488 = vsub.f32 %v5427, %v5481
  %v5489 = vsub.f32 %v5428, %v5481
  %v5490 = vsub.f32 %v5429, %v5481
  %v5491 = vsub.f32 %v5430, %v5481
  %v5492 = vsub.f32 %v5431, %v5481
  %v5493 = vsub.f32 %v5432, %v5481
  %v5494 = vsub.f32 %v5433, %v5481
  %v5495 = vsub.f32 %v5434, %v5481
  %v5496 = vsub.f32 %v5435, %v5481
  %v5497 = vsub.f32 %v5436, %v5481
  %v5498 = vmul.f32 %v5482, %v5482
  %v5499 = vmul.f32 %v5483, %v5483
  %v5500 = vmul.f32 %v5484, %v5484
  %v5501 = vmul.f32 %v5485, %v5485
  %v5502 = vmul.f32 %v5486, %v5486
  %v5503 = vmul.f32 %v5487, %v5487
  %v5504 = vmul.f32 %v5488, %v5488
  %v5505 = vmul.f32 %v5489, %v5489
  %v5506 = vmul.f32 %v5490, %v5490
  %v5507 = vmul.f32 %v5491, %v5491
  %v5508 = vmul.f32 %v5492, %v5492
  %v5509 = vmul.f32 %v5493, %v5493
  %v5510 = vmul.f32 %v5494, %v5494
  %v5511 = vmul.f32 %v5495, %v5495
  %v5512 = vmul.f32 %v5496, %v5496
  %v5513 = vmul.f32 %v5497, %v5497
  %v5514 = vsel %vm508, %v5498, 0.0
  %v5515 = vsel %vm508, %v5499, 0.0
  %v5516 = vadd.f32 %v5514, %v5515
  %v5517 = vsel %vm508, %v5500, 0.0
  %v5518 = vadd.f32 %v5516, %v5517
  %v5519 = vsel %vm508, %v5501, 0.0
  %v5520 = vadd.f32 %v5518, %v5519
  %v5521 = vsel %vm508, %v5502, 0.0
  %v5522 = vadd.f32 %v5520, %v5521
  %v5523 = vsel %vm508, %v5503, 0.0
  %v5524 = vadd.f32 %v5522, %v5523
  %v5525 = vsel %vm508, %v5504, 0.0
  %v5526 = vadd.f32 %v5524, %v5525
  %v5527 = vsel %vm508, %v5505, 0.0
  %v5528 = vadd.f32 %v5526, %v5527
  %v5529 = vsel %vm508, %v5506, 0.0
  %v5530 = vadd.f32 %v5528, %v5529
  %v5531 = vsel %vm508, %v5507, 0.0
  %v5532 = vadd.f32 %v5530, %v5531
  %v5533 = vsel %vm508, %v5508, 0.0
  %v5534 = vadd.f32 %v5532, %v5533
  %v5535 = vsel %vm508, %v5509, 0.0
  %v5536 = vadd.f32 %v5534, %v5535
  %v5537 = vsel %vm508, %v5510, 0.0
  %v5538 = vadd.f32 %v5536, %v5537
  %v5539 = vsel %vm508, %v5511, 0.0
  %v5540 = vadd.f32 %v5538, %v5539
  %v5541 = vsel %vm508, %v5512, 0.0
  %v5542 = vadd.f32 %v5540, %v5541
  %v5543 = vsel %vm508, %v5513, 0.0
  %v5544 = vadd.f32 %v5542, %v5543
  %v5545 = vrot.slane %v5544, 4
  %v5546 = vadd.f32 %v5544, %v5545
  %v5547 = vrot.slane %v5546, 2
  %v5548 = vadd.f32 %v5546, %v5547
  %v5549 = vrot.slane %v5548, 1
  %v5550 = vadd.f32 %v5548, %v5549
  %v5551 = vmul.f32 %v5550, %v5480
  %v5552 = vld [vmem:[%s7] sm:$0x1]
  %v5553 = vadd.f32 %v5551, 1e-05
  %v5554 = vrsqrt.pop %v5553
  %v5555 = vmul.f32 %v5554, %v5553
  %v5556 = vmul.f32 %v5555, %v5554
  %v5557 = vmul.f32 0.5, %v5556
  %v5558 = vsub.f32 1.5, %v5557
  %v5559 = vmul.f32 %v5554, %v5558
  %vm5560 = vweird.f32 %v5553
  %vm5561 = vweird.f32 %v5554
  %vm5562 = vmor %vm5560, %vm5561
  %v5563 = vsel %vm5562, %v5554, %v5559
  %v5564 = vmul.f32 %v5552, %v5563
  %v5566 = vperm.slane %v5564, 0
  %v5568 = vmul.f32 %v5482, %v5566
  %v5569 = vmul.f32 %v5483, %v5566
  %v5570 = vmul.f32 %v5484, %v5566
  %v5571 = vmul.f32 %v5485, %v5566
  %v5572 = vmul.f32 %v5486, %v5566
  %v5573 = vmul.f32 %v5487, %v5566
  %v5574 = vmul.f32 %v5488, %v5566
  %v5575 = vmul.f32 %v5489, %v5566
  %v5576 = vmul.f32 %v5490, %v5566
  %v5577 = vmul.f32 %v5491, %v5566
  %v5578 = vmul.f32 %v5492, %v5566
  %v5579 = vmul.f32 %v5493, %v5566
  %v5580 = vmul.f32 %v5494, %v5566
  %v5581 = vmul.f32 %v5495, %v5566
  %v5582 = vmul.f32 %v5496, %v5566
  %v5583 = vmul.f32 %v5497, %v5566
  %v5584 = vld [vmem:[%s8] sm:$0x1]
  %v5586 = vperm.slane %v5584, 0
  %v5588 = vadd.f32 %v5568, %v5586
  %v5589 = vadd.f32 %v5569, %v5586
  %v5590 = vadd.f32 %v5570, %v5586
  %v5591 = vadd.f32 %v5571, %v5586
  %v5592 = vadd.f32 %v5572, %v5586
  %v5593 = vadd.f32 %v5573, %v5586
  %v5594 = vadd.f32 %v5574, %v5586
  %v5595 = vadd.f32 %v5575, %v5586
  %v5596 = vadd.f32 %v5576, %v5586
  %v5597 = vadd.f32 %v5577, %v5586
  %v5598 = vadd.f32 %v5578, %v5586
  %v5599 = vadd.f32 %v5579, %v5586
  %v5600 = vadd.f32 %v5580, %v5586
  %v5601 = vadd.f32 %v5581, %v5586
  %v5602 = vadd.f32 %v5582, %v5586
  %v5603 = vadd.f32 %v5583, %v5586
  %v5604 = vmax.f32 %v5588, 0.0
  %v5605 = vmax.f32 %v5589, 0.0
  %v5606 = vmax.f32 %v5590, 0.0
  %v5607 = vmax.f32 %v5591, 0.0
  %v5608 = vmax.f32 %v5592, 0.0
  %v5609 = vmax.f32 %v5593, 0.0
  %v5610 = vmax.f32 %v5594, 0.0
  %v5611 = vmax.f32 %v5595, 0.0
  %v5612 = vmax.f32 %v5596, 0.0
  %v5613 = vmax.f32 %v5597, 0.0
  %v5614 = vmax.f32 %v5598, 0.0
  %v5615 = vmax.f32 %v5599, 0.0
  %v5616 = vmax.f32 %v5600, 0.0
  %v5617 = vmax.f32 %v5601, 0.0
  %v5618 = vmax.f32 %v5602, 0.0
  %v5619 = vmax.f32 %v5603, 0.0
  %5620 = vxpose.xlu0.b32.start [1/16] %v5604, 128
  %5621 = vxpose.xlu0.b32.cont [2/16] %v5605, 128
  %5622 = vxpose.xlu0.b32.cont [3/16] %v5606, 128
  %5623 = vxpose.xlu0.b32.cont [4/16] %v5607, 128
  %5624 = vxpose.xlu0.b32.cont [5/16] %v5608, 128
  %5625 = vxpose.xlu0.b32.cont [6/16] %v5609, 128
  %5626 = vxpose.xlu0.b32.cont [7/16] %v5610, 128
  %5627 = vxpose.xlu0.b32.cont [8/16] %v5611, 128
  %5628 = vxpose.xlu0.b32.cont [9/16] %v5612, 128
  %5629 = vxpose.xlu0.b32.cont [10/16] %v5613, 128
  %5630 = vxpose.xlu0.b32.cont [11/16] %v5614, 128
  %5631 = vxpose.xlu0.b32.cont [12/16] %v5615, 128
  %5632 = vxpose.xlu0.b32.cont [13/16] %v5616, 128
  %5633 = vxpose.xlu0.b32.cont [14/16] %v5617, 128
  %5634 = vxpose.xlu0.b32.cont [15/16] %v5618, 128
  %5635 = vxpose.xlu0.b32.end [16/16] %v5619, 128
  %v5636 = vpop.trf.xlu0
  %v5637 = vpop.trf.xlu0
  %v5638 = vpop.trf.xlu0
  %v5639 = vpop.trf.xlu0
  %v5640 = vpop.trf.xlu0
  %v5641 = vpop.trf.xlu0
  %v5642 = vpop.trf.xlu0
  %v5643 = vpop.trf.xlu0
  %v5644 = vpop.trf.xlu0
  %v5645 = vpop.trf.xlu0
  %v5646 = vpop.trf.xlu0
  %v5647 = vpop.trf.xlu0
  %v5648 = vpop.trf.xlu0
  %v5649 = vpop.trf.xlu0
  %v5650 = vpop.trf.xlu0
  %v5651 = vpop.trf.xlu0
  %5652 = vst [vmem:[%s9] sm:$0xff] %v5636
  %5653 = vst [vmem:[%s9 + $0x8] sm:$0xff] %v5637
  %5654 = vst [vmem:[%s9 + $0x10] sm:$0xff] %v5638
  %5655 = vst [vmem:[%s9 + $0x18] sm:$0x3f] %v5639
  // Predicated region
  $region38: #{sa_branch_forward.1} parent=0 // pred_check
    _
  $region39: #{sa_branch_forward.1} parent=0 // pred_check_branch
    %5657 = sbr.rel (0) target = $region41
  $region40: #{sa_branch_forward.1} parent=0 // pred_region
    _
  $region41: #{sa_branch_forward.1} parent=0 // pred_fallthru
    _
  // Predicated region
  $region42: #{sa_branch_forward.1} parent=0 // pred_check
    _
  $region43: #{sa_branch_forward.1} parent=0 // pred_check_branch
    %5659 = sbr.rel (0) target = $region45
  $region44: #{sa_branch_forward.1} parent=0 // pred_region
    _
  $region45: #{sa_branch_forward.1} parent=0 // pred_fallthru
    _

</llo_original>
